<compile_context>
chip_gen: v6e
topology: v6e:2x2x1
jax: 0.10.0
libtpu: 0.0.40
codegen_flags: <defaults>
</compile_context>

<pallas_src>
import jax
import jax.numpy as jnp
from jax.experimental import pallas as pl
from jax.experimental.pallas import tpu as pltpu


TM = 128            # batch tile (MXU rows)
LANE = 128          # lane-dense width for the padded final layer
NUM_CLASSES = 2


def mlp_kernel(x_ref,
               w1, b1, w2, b2, w3, b3, w4, b4, w5, b5, w6, b6,
               out_ref):
    """Fused 6-layer MLP forward for one (TM, D_in) batch tile.

    Weights are bf16 (in, out); biases are f32 (1, out).  Matmuls run on the
    MXU with bf16 operands and f32 accumulation; sigmoid / log_softmax are f32.
    """
    h = x_ref[...]                                   # bf16 (TM, D_in)

    def sig_layer(h_bf16, w_ref, b_ref):
        z = jnp.dot(h_bf16, w_ref[...],
                    preferred_element_type=jnp.float32) + b_ref[...]
        a = jax.nn.sigmoid(z)                        # f32 VPU/EUP math
        return a.astype(jnp.bfloat16)                # next MXU operand

    # dropout(p=0.02) == identity in eval mode -> no-op here.
    h = sig_layer(h, w1, b1)
    h = sig_layer(h, w2, b2)
    h = sig_layer(h, w3, b3)
    h = sig_layer(h, w4, b4)
    h = sig_layer(h, w5, b5)

    # Final layer: lane-dense (TM, LANE) logits; only the first NUM_CLASSES
    # lanes are real (W6/b6 zero-padded), the rest are masked out.
    logits = jnp.dot(h, w6[...],
                     preferred_element_type=jnp.float32) + b6[...]

    lane_idx = jax.lax.broadcasted_iota(jnp.int32, logits.shape, 1)
    valid = lane_idx < NUM_CLASSES
    logits = jnp.where(valid, logits, jnp.float32(-1e30))

    # log_softmax over the valid lanes (numerically stable).
    m = jnp.max(logits, axis=1, keepdims=True)
    shifted = logits - m
    sumexp = jnp.sum(jnp.where(valid, jnp.exp(shifted), 0.0),
                     axis=1, keepdims=True)
    out_ref[...] = shifted - jnp.log(sumexp)


def prepare_params(params):
    """One-time parameter prep: transpose to (in, out), cast weights to bf16,
    reshape biases to (1, out) f32, and zero-pad the last layer to LANE lanes."""
    prepared = []
    n_layers = len(params)
    for i, (w, b) in enumerate(params):
        wt = jnp.asarray(w, jnp.float32).T.astype(jnp.bfloat16)   # (in, out)
        bb = jnp.asarray(b, jnp.float32).reshape(1, -1)
        if i == n_layers - 1:
            pad = LANE - wt.shape[1]
            wt = jnp.pad(wt, ((0, 0), (0, pad)))
            bb = jnp.pad(bb, ((0, 0), (0, pad)))
        prepared.append((wt, bb))
    return prepared


def classifier_forward(x, prepared):
    """x: (N, C, H, W).  prepared: output of prepare_params()."""
    n = x.shape[0]
    x2 = x.reshape(n, -1).astype(jnp.bfloat16)        # y = y.view(y.shape[0], -1)
    d_in = x2.shape[1]

    # Pad batch to a full MXU row tile; zero rows are sliced off afterwards.
    m_pad = ((n + TM - 1) // TM) * TM
    if m_pad != n:
        x2 = jnp.pad(x2, ((0, m_pad - n), (0, 0)))

    flat_inputs = []
    param_specs = []
    for (wt, bb) in prepared:
        flat_inputs.append(wt)
        param_specs.append(pl.BlockSpec(wt.shape, lambda i: (0, 0)))
        flat_inputs.append(bb)
        param_specs.append(pl.BlockSpec(bb.shape, lambda i: (0, 0)))

    x_spec = pl.BlockSpec((TM, d_in), lambda i: (i, 0))
    out_spec = pl.BlockSpec((TM, LANE), lambda i: (i, 0))

    out = pl.pallas_call(
        mlp_kernel,
        out_shape=jax.ShapeDtypeStruct((m_pad, LANE), jnp.float32),
        grid=(m_pad // TM,),
        in_specs=[x_spec] + param_specs,
        out_specs=out_spec,
        compiler_params=pltpu.CompilerParams(
            dimension_semantics=("parallel",),
            vmem_limit_bytes=64 * 1024 * 1024,
        ),
    )(x2, *flat_inputs)

    return out[:n, :NUM_CLASSES]


def reference_forward(x, params):
    """Pure-JAX reference mirroring the PyTorch eval-mode forward with the same
    mixed-precision scheme (bf16 matmul operands, f32 accumulation/activations)."""
    h = x.reshape(x.shape[0], -1).astype(jnp.float32)
    n_layers = len(params)
    for i, (w, b) in enumerate(params):
        z = jnp.dot(h.astype(jnp.bfloat16),
                    jnp.asarray(w, jnp.float32).T.astype(jnp.bfloat16),
                    preferred_element_type=jnp.float32) + b
        if i < n_layers - 1:
            h = jax.nn.sigmoid(z)
        else:
            h = jax.nn.log_softmax(z, axis=1)
    return h


if __name__ == "__main__":
    key = jax.random.PRNGKey(0)

    # Scaled-down layer widths (see header comment).
    dims = [1024, 512, 256, 128, 128, 128, 2]

    # Deterministic PyTorch-Linear-style init: U(-1/sqrt(fan_in), 1/sqrt(fan_in)).
    params = []
    for i in range(6):
        key, kw, kb = jax.random.split(key, 3)
        fan_in = dims[i]
        bound = 1.0 / (fan_in ** 0.5)
        w = jax.random.uniform(kw, (dims[i + 1], dims[i]),
                               dtype=jnp.float32, minval=-bound, maxval=bound)
        b = jax.random.uniform(kb, (dims[i + 1],),
                               dtype=jnp.float32, minval=-bound, maxval=bound)
        params.append((w, b))

    # Input: batch=2, channels=4, spatial=16x16 -> flattens to 1024 features.
    key, kx = jax.random.split(key)
    x = jax.random.normal(kx, (2, 4, 16, 16), dtype=jnp.float32)

    prepared = prepare_params(params)      # one-time: transpose/cast/pad weights
    out = classifier_forward(x, prepared)
    out = jax.block_until_ready(out)

    ref = reference_forward(x, params)
    assert out.shape == (2, 2), f"bad output shape {out.shape}"
    assert jnp.allclose(out, ref, atol=1e-3, rtol=1e-3), "mismatch vs JAX reference"

    print("KERNEL_OK")
</pallas_src>

<mosaic_0001>
module attributes {stable_mosaic.version = 11 : i64} {
  func.func @mlp_kernel(%arg0: i32, %arg1: memref<128x1024xbf16, #tpu.memory_space<vmem>>, %arg2: memref<1024x512xbf16, #tpu.memory_space<vmem>>, %arg3: memref<1x512xf32, #tpu.memory_space<vmem>>, %arg4: memref<512x256xbf16, #tpu.memory_space<vmem>>, %arg5: memref<1x256xf32, #tpu.memory_space<vmem>>, %arg6: memref<256x128xbf16, #tpu.memory_space<vmem>>, %arg7: memref<1x128xf32, #tpu.memory_space<vmem>>, %arg8: memref<128x128xbf16, #tpu.memory_space<vmem>>, %arg9: memref<1x128xf32, #tpu.memory_space<vmem>>, %arg10: memref<128x128xbf16, #tpu.memory_space<vmem>>, %arg11: memref<1x128xf32, #tpu.memory_space<vmem>>, %arg12: memref<128x128xbf16, #tpu.memory_space<vmem>>, %arg13: memref<1x128xf32, #tpu.memory_space<vmem>>, %arg14: memref<128x128xf32, #tpu.memory_space<vmem>>) attributes {dimension_semantics = [#tpu.dimension_semantics<parallel>], iteration_bounds = array<i64: 1>, scalar_prefetch = 0 : i64, scratch_operands = 0 : i64, tpu.core_type = #tpu.core_type<tc>, window_params = [{transform_indices = @transform_0, window_bounds = array<i64: 128, 1024>}, {pipeline_mode = #tpu.pipeline_mode<synchronous>, transform_indices = @transform_1, window_bounds = array<i64: 1024, 512>}, {pipeline_mode = #tpu.pipeline_mode<synchronous>, transform_indices = @transform_2, window_bounds = array<i64: 1, 512>}, {pipeline_mode = #tpu.pipeline_mode<synchronous>, transform_indices = @transform_3, window_bounds = array<i64: 512, 256>}, {pipeline_mode = #tpu.pipeline_mode<synchronous>, transform_indices = @transform_4, window_bounds = array<i64: 1, 256>}, {pipeline_mode = #tpu.pipeline_mode<synchronous>, transform_indices = @transform_5, window_bounds = array<i64: 256, 128>}, {pipeline_mode = #tpu.pipeline_mode<synchronous>, transform_indices = @transform_6, window_bounds = array<i64: 1, 128>}, {pipeline_mode = #tpu.pipeline_mode<synchronous>, transform_indices = @transform_7, window_bounds = array<i64: 128, 128>}, {pipeline_mode = #tpu.pipeline_mode<synchronous>, transform_indices = @transform_8, window_bounds = array<i64: 1, 128>}, {pipeline_mode = #tpu.pipeline_mode<synchronous>, transform_indices = @transform_9, window_bounds = array<i64: 128, 128>}, {pipeline_mode = #tpu.pipeline_mode<synchronous>, transform_indices = @transform_10, window_bounds = array<i64: 1, 128>}, {pipeline_mode = #tpu.pipeline_mode<synchronous>, transform_indices = @transform_11, window_bounds = array<i64: 128, 128>}, {pipeline_mode = #tpu.pipeline_mode<synchronous>, transform_indices = @transform_12, window_bounds = array<i64: 1, 128>}, {transform_indices = @transform_13, window_bounds = array<i64: 128, 128>}]} {
    %c0 = arith.constant 0 : index
    %c0_0 = arith.constant 0 : index
    %0 = vector.load %arg1[%c0, %c0_0] : memref<128x1024xbf16, #tpu.memory_space<vmem>>, vector<128x1024xbf16>
    %c0_1 = arith.constant 0 : index
    %c0_2 = arith.constant 0 : index
    %1 = vector.load %arg2[%c0_1, %c0_2] : memref<1024x512xbf16, #tpu.memory_space<vmem>>, vector<1024x512xbf16>
    %cst = arith.constant dense<0.000000e+00> : vector<128x512xf32>
    %2 = tpu.matmul %0, %1, %cst {dimension_numbers = #tpu.dot_dimension_numbers<[1], [0], [0], [1], [0, 0, 1, 1], [], []>} : vector<128x1024xbf16>, vector<1024x512xbf16>, vector<128x512xf32> -> vector<128x512xf32>
    %c0_3 = arith.constant 0 : index
    %c0_4 = arith.constant 0 : index
    %3 = vector.load %arg3[%c0_3, %c0_4] : memref<1x512xf32, #tpu.memory_space<vmem>>, vector<1x512xf32>
    %4 = vector.broadcast %3 : vector<1x512xf32> to vector<128x512xf32>
    %5 = arith.addf %2, %4 : vector<128x512xf32>
    %6 = arith.negf %5 : vector<128x512xf32>
    %7 = math.exp %6 : vector<128x512xf32>
    %cst_5 = arith.constant 1.000000e+00 : f32
    %8 = vector.broadcast %cst_5 : f32 to vector<128x512xf32>
    %9 = arith.addf %8, %7 : vector<128x512xf32>
    %10 = arith.divf %8, %9 : vector<128x512xf32>
    %11 = arith.truncf %10 : vector<128x512xf32> to vector<128x512xbf16>
    %c0_6 = arith.constant 0 : index
    %c0_7 = arith.constant 0 : index
    %12 = vector.load %arg4[%c0_6, %c0_7] : memref<512x256xbf16, #tpu.memory_space<vmem>>, vector<512x256xbf16>
    %cst_8 = arith.constant dense<0.000000e+00> : vector<128x256xf32>
    %13 = tpu.matmul %11, %12, %cst_8 {dimension_numbers = #tpu.dot_dimension_numbers<[1], [0], [0], [1], [0, 0, 1, 1], [], []>} : vector<128x512xbf16>, vector<512x256xbf16>, vector<128x256xf32> -> vector<128x256xf32>
    %c0_9 = arith.constant 0 : index
    %c0_10 = arith.constant 0 : index
    %14 = vector.load %arg5[%c0_9, %c0_10] : memref<1x256xf32, #tpu.memory_space<vmem>>, vector<1x256xf32>
    %15 = vector.broadcast %14 : vector<1x256xf32> to vector<128x256xf32>
    %16 = arith.addf %13, %15 : vector<128x256xf32>
    %17 = arith.negf %16 : vector<128x256xf32>
    %18 = math.exp %17 : vector<128x256xf32>
    %cst_11 = arith.constant 1.000000e+00 : f32
    %19 = vector.broadcast %cst_11 : f32 to vector<128x256xf32>
    %20 = arith.addf %19, %18 : vector<128x256xf32>
    %21 = arith.divf %19, %20 : vector<128x256xf32>
    %22 = arith.truncf %21 : vector<128x256xf32> to vector<128x256xbf16>
    %c0_12 = arith.constant 0 : index
    %c0_13 = arith.constant 0 : index
    %23 = vector.load %arg6[%c0_12, %c0_13] : memref<256x128xbf16, #tpu.memory_space<vmem>>, vector<256x128xbf16>
    %cst_14 = arith.constant dense<0.000000e+00> : vector<128x128xf32>
    %24 = tpu.matmul %22, %23, %cst_14 {dimension_numbers = #tpu.dot_dimension_numbers<[1], [0], [0], [1], [0, 0, 1, 1], [], []>} : vector<128x256xbf16>, vector<256x128xbf16>, vector<128x128xf32> -> vector<128x128xf32>
    %c0_15 = arith.constant 0 : index
    %c0_16 = arith.constant 0 : index
    %25 = vector.load %arg7[%c0_15, %c0_16] : memref<1x128xf32, #tpu.memory_space<vmem>>, vector<1x128xf32>
    %26 = vector.broadcast %25 : vector<1x128xf32> to vector<128x128xf32>
    %27 = arith.addf %24, %26 : vector<128x128xf32>
    %28 = arith.negf %27 : vector<128x128xf32>
    %29 = math.exp %28 : vector<128x128xf32>
    %cst_17 = arith.constant 1.000000e+00 : f32
    %30 = vector.broadcast %cst_17 : f32 to vector<128x128xf32>
    %31 = arith.addf %30, %29 : vector<128x128xf32>
    %32 = arith.divf %30, %31 : vector<128x128xf32>
    %33 = arith.truncf %32 : vector<128x128xf32> to vector<128x128xbf16>
    %c0_18 = arith.constant 0 : index
    %c0_19 = arith.constant 0 : index
    %34 = vector.load %arg8[%c0_18, %c0_19] : memref<128x128xbf16, #tpu.memory_space<vmem>>, vector<128x128xbf16>
    %cst_20 = arith.constant dense<0.000000e+00> : vector<128x128xf32>
    %35 = tpu.matmul %33, %34, %cst_20 {dimension_numbers = #tpu.dot_dimension_numbers<[1], [0], [0], [1], [0, 0, 1, 1], [], []>} : vector<128x128xbf16>, vector<128x128xbf16>, vector<128x128xf32> -> vector<128x128xf32>
    %c0_21 = arith.constant 0 : index
    %c0_22 = arith.constant 0 : index
    %36 = vector.load %arg9[%c0_21, %c0_22] : memref<1x128xf32, #tpu.memory_space<vmem>>, vector<1x128xf32>
    %37 = vector.broadcast %36 : vector<1x128xf32> to vector<128x128xf32>
    %38 = arith.addf %35, %37 : vector<128x128xf32>
    %39 = arith.negf %38 : vector<128x128xf32>
    %40 = math.exp %39 : vector<128x128xf32>
    %cst_23 = arith.constant 1.000000e+00 : f32
    %41 = vector.broadcast %cst_23 : f32 to vector<128x128xf32>
    %42 = arith.addf %41, %40 : vector<128x128xf32>
    %43 = arith.divf %41, %42 : vector<128x128xf32>
    %44 = arith.truncf %43 : vector<128x128xf32> to vector<128x128xbf16>
    %c0_24 = arith.constant 0 : index
    %c0_25 = arith.constant 0 : index
    %45 = vector.load %arg10[%c0_24, %c0_25] : memref<128x128xbf16, #tpu.memory_space<vmem>>, vector<128x128xbf16>
    %cst_26 = arith.constant dense<0.000000e+00> : vector<128x128xf32>
    %46 = tpu.matmul %44, %45, %cst_26 {dimension_numbers = #tpu.dot_dimension_numbers<[1], [0], [0], [1], [0, 0, 1, 1], [], []>} : vector<128x128xbf16>, vector<128x128xbf16>, vector<128x128xf32> -> vector<128x128xf32>
    %c0_27 = arith.constant 0 : index
    %c0_28 = arith.constant 0 : index
    %47 = vector.load %arg11[%c0_27, %c0_28] : memref<1x128xf32, #tpu.memory_space<vmem>>, vector<1x128xf32>
    %48 = vector.broadcast %47 : vector<1x128xf32> to vector<128x128xf32>
    %49 = arith.addf %46, %48 : vector<128x128xf32>
    %50 = arith.negf %49 : vector<128x128xf32>
    %51 = math.exp %50 : vector<128x128xf32>
    %cst_29 = arith.constant 1.000000e+00 : f32
    %52 = vector.broadcast %cst_29 : f32 to vector<128x128xf32>
    %53 = arith.addf %52, %51 : vector<128x128xf32>
    %54 = arith.divf %52, %53 : vector<128x128xf32>
    %55 = arith.truncf %54 : vector<128x128xf32> to vector<128x128xbf16>
    %c0_30 = arith.constant 0 : index
    %c0_31 = arith.constant 0 : index
    %56 = vector.load %arg12[%c0_30, %c0_31] : memref<128x128xbf16, #tpu.memory_space<vmem>>, vector<128x128xbf16>
    %cst_32 = arith.constant dense<0.000000e+00> : vector<128x128xf32>
    %57 = tpu.matmul %55, %56, %cst_32 {dimension_numbers = #tpu.dot_dimension_numbers<[1], [0], [0], [1], [0, 0, 1, 1], [], []>} : vector<128x128xbf16>, vector<128x128xbf16>, vector<128x128xf32> -> vector<128x128xf32>
    %c0_33 = arith.constant 0 : index
    %c0_34 = arith.constant 0 : index
    %58 = vector.load %arg13[%c0_33, %c0_34] : memref<1x128xf32, #tpu.memory_space<vmem>>, vector<1x128xf32>
    %59 = vector.broadcast %58 : vector<1x128xf32> to vector<128x128xf32>
    %60 = arith.addf %57, %59 : vector<128x128xf32>
    %61 = tpu.iota {dimensions = array<i32: 1>} : vector<128x128xi32>
    %c2_i32 = arith.constant 2 : i32
    %62 = vector.broadcast %c2_i32 : i32 to vector<128x128xi32>
    %63 = arith.cmpi slt, %61, %62 : vector<128x128xi32>
    %cst_35 = arith.constant -1.000000e+30 : f32
    %64 = vector.broadcast %cst_35 : f32 to vector<128x128xf32>
    %65 = arith.select %63, %60, %64 : vector<128x128xi1>, vector<128x128xf32>
    %cst_36 = arith.constant dense<0xFF800000> : vector<128xf32>
    %66 = vector.multi_reduction <maximumf>, %65, %cst_36 [1] : vector<128x128xf32> to vector<128xf32>
    %67 = vector.shape_cast %66 : vector<128xf32> to vector<128x1xf32>
    %68 = vector.broadcast %67 : vector<128x1xf32> to vector<128x128xf32>
    %69 = arith.subf %65, %68 : vector<128x128xf32>
    %70 = math.exp %69 : vector<128x128xf32>
    %cst_37 = arith.constant 0.000000e+00 : f32
    %71 = vector.broadcast %cst_37 : f32 to vector<128x128xf32>
    %72 = arith.select %63, %70, %71 : vector<128x128xi1>, vector<128x128xf32>
    %cst_38 = arith.constant dense<0.000000e+00> : vector<128xf32>
    %73 = vector.multi_reduction <add>, %72, %cst_38 [1] : vector<128x128xf32> to vector<128xf32>
    %74 = vector.shape_cast %73 : vector<128xf32> to vector<128x1xf32>
    %75 = math.log %74 : vector<128x1xf32>
    %76 = vector.broadcast %75 : vector<128x1xf32> to vector<128x128xf32>
    %77 = arith.subf %69, %76 : vector<128x128xf32>
    %c0_39 = arith.constant 0 : index
    %c0_40 = arith.constant 0 : index
    %78 = vector.load %arg14[%c0_39, %c0_40] : memref<128x128xf32, #tpu.memory_space<vmem>>, vector<128x128xf32>
    tpu.vector_store %arg14[%c0_39, %c0_40], %77 {strides = array<i32>} : memref<128x128xf32, #tpu.memory_space<vmem>>, vector<128x128xf32>,
    return
  }
  func.func @transform_0(%arg0: i32) -> (i32, i32) {
    %c0_i32 = arith.constant 0 : i32
    %c0_i32_0 = arith.constant 0 : i32
    return %arg0, %c0_i32 : i32, i32
  }
  func.func @transform_1(%arg0: i32) -> (i32, i32) {
    %c0_i32 = arith.constant 0 : i32
    %c0_i32_0 = arith.constant 0 : i32
    %c0_i32_1 = arith.constant 0 : i32
    return %c0_i32, %c0_i32_0 : i32, i32
  }
  func.func @transform_2(%arg0: i32) -> (i32, i32) {
    %c0_i32 = arith.constant 0 : i32
    %c0_i32_0 = arith.constant 0 : i32
    %c0_i32_1 = arith.constant 0 : i32
    return %c0_i32, %c0_i32_0 : i32, i32
  }
  func.func @transform_3(%arg0: i32) -> (i32, i32) {
    %c0_i32 = arith.constant 0 : i32
    %c0_i32_0 = arith.constant 0 : i32
    %c0_i32_1 = arith.constant 0 : i32
    return %c0_i32, %c0_i32_0 : i32, i32
  }
  func.func @transform_4(%arg0: i32) -> (i32, i32) {
    %c0_i32 = arith.constant 0 : i32
    %c0_i32_0 = arith.constant 0 : i32
    %c0_i32_1 = arith.constant 0 : i32
    return %c0_i32, %c0_i32_0 : i32, i32
  }
  func.func @transform_5(%arg0: i32) -> (i32, i32) {
    %c0_i32 = arith.constant 0 : i32
    %c0_i32_0 = arith.constant 0 : i32
    %c0_i32_1 = arith.constant 0 : i32
    return %c0_i32, %c0_i32_0 : i32, i32
  }
  func.func @transform_6(%arg0: i32) -> (i32, i32) {
    %c0_i32 = arith.constant 0 : i32
    %c0_i32_0 = arith.constant 0 : i32
    %c0_i32_1 = arith.constant 0 : i32
    return %c0_i32, %c0_i32_0 : i32, i32
  }
  func.func @transform_7(%arg0: i32) -> (i32, i32) {
    %c0_i32 = arith.constant 0 : i32
    %c0_i32_0 = arith.constant 0 : i32
    %c0_i32_1 = arith.constant 0 : i32
    return %c0_i32, %c0_i32_0 : i32, i32
  }
  func.func @transform_8(%arg0: i32) -> (i32, i32) {
    %c0_i32 = arith.constant 0 : i32
    %c0_i32_0 = arith.constant 0 : i32
    %c0_i32_1 = arith.constant 0 : i32
    return %c0_i32, %c0_i32_0 : i32, i32
  }
  func.func @transform_9(%arg0: i32) -> (i32, i32) {
    %c0_i32 = arith.constant 0 : i32
    %c0_i32_0 = arith.constant 0 : i32
    %c0_i32_1 = arith.constant 0 : i32
    return %c0_i32, %c0_i32_0 : i32, i32
  }
  func.func @transform_10(%arg0: i32) -> (i32, i32) {
    %c0_i32 = arith.constant 0 : i32
    %c0_i32_0 = arith.constant 0 : i32
    %c0_i32_1 = arith.constant 0 : i32
    return %c0_i32, %c0_i32_0 : i32, i32
  }
  func.func @transform_11(%arg0: i32) -> (i32, i32) {
    %c0_i32 = arith.constant 0 : i32
    %c0_i32_0 = arith.constant 0 : i32
    %c0_i32_1 = arith.constant 0 : i32
    return %c0_i32, %c0_i32_0 : i32, i32
  }
  func.func @transform_12(%arg0: i32) -> (i32, i32) {
    %c0_i32 = arith.constant 0 : i32
    %c0_i32_0 = arith.constant 0 : i32
    %c0_i32_1 = arith.constant 0 : i32
    return %c0_i32, %c0_i32_0 : i32, i32
  }
  func.func @transform_13(%arg0: i32) -> (i32, i32) {
    %c0_i32 = arith.constant 0 : i32
    %c0_i32_0 = arith.constant 0 : i32
    return %arg0, %c0_i32 : i32, i32
  }
}

</mosaic_0001>

<llo_original>
// kernel: tpu_custom_call.1
$region0: #{tpu_custom_call.1}
  #allocation0 [shape = 'u32[]', space=smem, size = 0x4, offset = 0x4, fixed_abs, tag = 'smem constant byte address 0x4 - core index']
  #allocation1 [shape = 'u32[144,128]{1,0:T(1,128)}', space=vmem, size = 0x12000, scoped, tag = 'internal scratch']
  %s0 = inlined_call_operand.hbm [shape: bf16[128,1024], index: 0, kind: input, shape index: {}]
  %s1 = inlined_call_operand.hbm [shape: bf16[1024,512], index: 1, kind: input, shape index: {}]
  %s2 = inlined_call_operand.hbm [shape: f32[1,512], index: 2, kind: input, shape index: {}]
  %s3 = inlined_call_operand.hbm [shape: bf16[512,256], index: 3, kind: input, shape index: {}]
  %s4 = inlined_call_operand.vmem [shape: f32[1,256], index: 4, kind: input, shape index: {}]
  %s5 = inlined_call_operand.hbm [shape: bf16[256,128], index: 5, kind: input, shape index: {}]
  %s6 = inlined_call_operand.vmem [shape: f32[1,128], index: 6, kind: input, shape index: {}]
  %s7 = inlined_call_operand.hbm [shape: bf16[128,128], index: 7, kind: input, shape index: {}]
  %s8 = inlined_call_operand.vmem [shape: f32[1,128], index: 8, kind: input, shape index: {}]
  %s9 = inlined_call_operand.hbm [shape: bf16[128,128], index: 9, kind: input, shape index: {}]
  %s10 = inlined_call_operand.vmem [shape: f32[1,128], index: 10, kind: input, shape index: {}]
  %s11 = inlined_call_operand.hbm [shape: bf16[128,128], index: 11, kind: input, shape index: {}]
  %s12 = inlined_call_operand.vmem [shape: f32[1,128], index: 12, kind: input, shape index: {}]
  %s13 = inlined_call_operand.hbm [shape: f32[128,128], index: 13, kind: output, shape index: {}]
  %s14 = sld [smem:[#allocation0]]
  $region94: #{tpu_custom_call.1} parent=0
    _
  %s16 = ssub.s32 1, %s14
  %s17 = scalar_select 0, %s16, %s14
  $region1: #{tpu_custom_call.1} parent=0
    #allocation2 [shape = 'u8[262144]{0}', space=vmem, size = 0x40000, scoped, tag = 'input window, operand 0, single buffered']
    #allocation3 [shape = 's32[1]{0}', space=sflag, size = 0x4, scoped, tag = 'scoped memory for tpu_custom_call.1']
    #allocation4 [shape = 's32[1]{0}', space=sflag, size = 0x4, scoped, tag = 'scoped memory for tpu_custom_call.1']
    #allocation5 [shape = 'u8[1048576]{0}', space=vmem, size = 0x100000, scoped, tag = 'input window, operand 1, single buffered']
    #allocation6 [shape = 's32[1]{0}', space=sflag, size = 0x4, scoped, tag = 'scoped memory for tpu_custom_call.1']
    #allocation7 [shape = 'u8[2048]{0}', space=vmem, size = 0x800, scoped, tag = 'input window, operand 2, single buffered']
    #allocation8 [shape = 'u8[262144]{0}', space=vmem, size = 0x40000, scoped, tag = 'input window, operand 3, single buffered']
    #allocation9 [shape = 's32[1]{0}', space=sflag, size = 0x4, scoped, tag = 'scoped memory for tpu_custom_call.1']
    #allocation10 [shape = 'u8[65536]{0}', space=vmem, size = 0x10000, scoped, tag = 'input window, operand 5, single buffered']
    #allocation11 [shape = 'u8[32768]{0}', space=vmem, size = 0x8000, scoped, tag = 'input window, operand 7, single buffered']
    #allocation12 [shape = 's32[1]{0}', space=sflag, size = 0x4, scoped, tag = 'scoped memory for tpu_custom_call.1']
    #allocation13 [shape = 'u8[32768]{0}', space=vmem, size = 0x8000, scoped, tag = 'input window, operand 9, single buffered']
    #allocation14 [shape = 'u8[32768]{0}', space=vmem, size = 0x8000, scoped, tag = 'input window, operand 11, single buffered']
    #allocation15 [shape = 's32[1]{0}', space=sflag, size = 0x4, scoped, tag = 'scoped memory for tpu_custom_call.1']
    #allocation16 [shape = 'u8[65536]{0}', space=vmem, size = 0x10000, scoped, tag = 'output window, operand 0, single buffered']
    %18 = vsyncpa [#allocation3], 0
    %19 = vsyncpa [#allocation6], 0
    %20 = vsyncpa [#allocation9], 0
    %21 = vsyncpa [#allocation12], 0
    %22 = vsyncpa [#allocation15], 0
    %23 = vsyncpa [#allocation4], 0
    // Predicated region
    $region2: #{tpu_custom_call.1} parent=1 // pred_check
      _
    $region3: #{tpu_custom_call.1} parent=1 // pred_check_branch
      %25 = sbr.rel (0) target = $region5
    $region4: #{tpu_custom_call.1} parent=1 // pred_region
      %s27 = ssub.s32 8192, 8192
      %28 = vsyncadd [#allocation3], %s27
      %s29 = sshll.u32 [#allocation2], 4
      %s30 = int_to_ptr.vmem [resolvable:$true] %s29
      %35 = dma.hbm_to_vmem [thread:$0]  %s0, 8192, %s30, [#allocation3], 512, 512, 32
    $region5: #{tpu_custom_call.1} parent=1 // pred_fallthru
      _
    // Predicated region
    $region6: #{tpu_custom_call.1} parent=1 // pred_check
      _
    $region7: #{tpu_custom_call.1} parent=1 // pred_check_branch
      %37 = sbr.rel (0) target = $region9
    $region8: #{tpu_custom_call.1} parent=1 // pred_region
      %s39 = ssub.s32 32768, 32768
      %40 = vsyncadd [#allocation6], %s39
      %s41 = sshll.u32 [#allocation5], 4
      %s42 = int_to_ptr.vmem [resolvable:$true] %s41
      %47 = dma.hbm_to_vmem [thread:$0]  %s1, 32768, %s42, [#allocation6], 256, 256, 16
    $region9: #{tpu_custom_call.1} parent=1 // pred_fallthru
      _
    // Predicated region
    $region10: #{tpu_custom_call.1} parent=1 // pred_check
      _
    $region11: #{tpu_custom_call.1} parent=1 // pred_check_branch
      %49 = sbr.rel (0) target = $region13
    $region12: #{tpu_custom_call.1} parent=1 // pred_region
      %s51 = ssub.s32 64, 64
      %52 = vsyncadd [#allocation6], %s51
      %s54 = sshll.u32 [#allocation7], 4
      %s55 = int_to_ptr.vmem [resolvable:$true] %s54
      %57 = dma.hbm_to_vmem [thread:$0]  %s2, 64, %s55, [#allocation6]
    $region13: #{tpu_custom_call.1} parent=1 // pred_fallthru
      _
    // Predicated region
    $region14: #{tpu_custom_call.1} parent=1 // pred_check
      _
    $region15: #{tpu_custom_call.1} parent=1 // pred_check_branch
      %59 = sbr.rel (0) target = $region17
    $region16: #{tpu_custom_call.1} parent=1 // pred_region
      %s61 = ssub.s32 8192, 8192
      %62 = vsyncadd [#allocation9], %s61
      %s63 = sshll.u32 [#allocation8], 4
      %s64 = int_to_ptr.vmem [resolvable:$true] %s63
      %69 = dma.hbm_to_vmem [thread:$0]  %s3, 8192, %s64, [#allocation9], 128, 128, 8
    $region17: #{tpu_custom_call.1} parent=1 // pred_fallthru
      _
    // Predicated region
    $region18: #{tpu_custom_call.1} parent=1 // pred_check
      _
    $region19: #{tpu_custom_call.1} parent=1 // pred_check_branch
      %71 = sbr.rel (0) target = $region21
    $region20: #{tpu_custom_call.1} parent=1 // pred_region
      _
    $region21: #{tpu_custom_call.1} parent=1 // pred_fallthru
      _
    // Predicated region
    $region22: #{tpu_custom_call.1} parent=1 // pred_check
      _
    $region23: #{tpu_custom_call.1} parent=1 // pred_check_branch
      %73 = sbr.rel (0) target = $region25
    $region24: #{tpu_custom_call.1} parent=1 // pred_region
      %s75 = ssub.s32 2048, 2048
      %76 = vsyncadd [#allocation9], %s75
      %s77 = sshll.u32 [#allocation10], 4
      %s78 = int_to_ptr.vmem [resolvable:$true] %s77
      %83 = dma.hbm_to_vmem [thread:$0]  %s5, 2048, %s78, [#allocation9], 64, 64, 4
    $region25: #{tpu_custom_call.1} parent=1 // pred_fallthru
      _
    // Predicated region
    $region26: #{tpu_custom_call.1} parent=1 // pred_check
      _
    $region27: #{tpu_custom_call.1} parent=1 // pred_check_branch
      %85 = sbr.rel (0) target = $region29
    $region28: #{tpu_custom_call.1} parent=1 // pred_region
      _
    $region29: #{tpu_custom_call.1} parent=1 // pred_fallthru
      _
    // Predicated region
    $region30: #{tpu_custom_call.1} parent=1 // pred_check
      _
    $region31: #{tpu_custom_call.1} parent=1 // pred_check_branch
      %87 = sbr.rel (0) target = $region33
    $region32: #{tpu_custom_call.1} parent=1 // pred_region
      %s89 = ssub.s32 1024, 1024
      %90 = vsyncadd [#allocation12], %s89
      %s91 = sshll.u32 [#allocation11], 4
      %s92 = int_to_ptr.vmem [resolvable:$true] %s91
      %97 = dma.hbm_to_vmem [thread:$0]  %s7, 1024, %s92, [#allocation12], 64, 64, 4
    $region33: #{tpu_custom_call.1} parent=1 // pred_fallthru
      _
    // Predicated region
    $region34: #{tpu_custom_call.1} parent=1 // pred_check
      _
    $region35: #{tpu_custom_call.1} parent=1 // pred_check_branch
      %99 = sbr.rel (0) target = $region37
    $region36: #{tpu_custom_call.1} parent=1 // pred_region
      _
    $region37: #{tpu_custom_call.1} parent=1 // pred_fallthru
      _
    // Predicated region
    $region38: #{tpu_custom_call.1} parent=1 // pred_check
      _
    $region39: #{tpu_custom_call.1} parent=1 // pred_check_branch
      %101 = sbr.rel (0) target = $region41
    $region40: #{tpu_custom_call.1} parent=1 // pred_region
      %s103 = ssub.s32 1024, 1024
      %104 = vsyncadd [#allocation12], %s103
      %s105 = sshll.u32 [#allocation13], 4
      %s106 = int_to_ptr.vmem [resolvable:$true] %s105
      %111 = dma.hbm_to_vmem [thread:$0]  %s9, 1024, %s106, [#allocation12], 64, 64, 4
    $region41: #{tpu_custom_call.1} parent=1 // pred_fallthru
      _
    // Predicated region
    $region42: #{tpu_custom_call.1} parent=1 // pred_check
      _
    $region43: #{tpu_custom_call.1} parent=1 // pred_check_branch
      %113 = sbr.rel (0) target = $region45
    $region44: #{tpu_custom_call.1} parent=1 // pred_region
      _
    $region45: #{tpu_custom_call.1} parent=1 // pred_fallthru
      _
    // Predicated region
    $region46: #{tpu_custom_call.1} parent=1 // pred_check
      _
    $region47: #{tpu_custom_call.1} parent=1 // pred_check_branch
      %115 = sbr.rel (0) target = $region49
    $region48: #{tpu_custom_call.1} parent=1 // pred_region
      %s117 = ssub.s32 1024, 1024
      %118 = vsyncadd [#allocation15], %s117
      %s119 = sshll.u32 [#allocation14], 4
      %s120 = int_to_ptr.vmem [resolvable:$true] %s119
      %125 = dma.hbm_to_vmem [thread:$0]  %s11, 1024, %s120, [#allocation15], 64, 64, 4
    $region49: #{tpu_custom_call.1} parent=1 // pred_fallthru
      _
    // Predicated region
    $region50: #{tpu_custom_call.1} parent=1 // pred_check
      _
    $region51: #{tpu_custom_call.1} parent=1 // pred_check_branch
      %127 = sbr.rel (0) target = $region53
    $region52: #{tpu_custom_call.1} parent=1 // pred_region
      _
    $region53: #{tpu_custom_call.1} parent=1 // pred_fallthru
      _
    // Predicated region
    $region54: #{tpu_custom_call.1} parent=1 // pred_check
      _
    $region55: #{tpu_custom_call.1} parent=1 // pred_check_branch
      %129 = sbr.rel (0) target = $region57
    $region56: #{tpu_custom_call.1} parent=1 // pred_region
      %130 = dma.done [#allocation3], 8192
    $region57: #{tpu_custom_call.1} parent=1 // pred_fallthru
      _
    // Predicated region
    $region58: #{tpu_custom_call.1} parent=1 // pred_check
      _
    $region59: #{tpu_custom_call.1} parent=1 // pred_check_branch
      %132 = sbr.rel (0) target = $region61
    $region60: #{tpu_custom_call.1} parent=1 // pred_region
      %133 = dma.done [#allocation6], 32768
    $region61: #{tpu_custom_call.1} parent=1 // pred_fallthru
      _
    // Predicated region
    $region62: #{tpu_custom_call.1} parent=1 // pred_check
      _
    $region63: #{tpu_custom_call.1} parent=1 // pred_check_branch
      %135 = sbr.rel (0) target = $region65
    $region64: #{tpu_custom_call.1} parent=1 // pred_region
      %136 = dma.done [#allocation6], 64
    $region65: #{tpu_custom_call.1} parent=1 // pred_fallthru
      _
    // Predicated region
    $region66: #{tpu_custom_call.1} parent=1 // pred_check
      _
    $region67: #{tpu_custom_call.1} parent=1 // pred_check_branch
      %138 = sbr.rel (0) target = $region69
    $region68: #{tpu_custom_call.1} parent=1 // pred_region
      %139 = dma.done [#allocation9], 8192
    $region69: #{tpu_custom_call.1} parent=1 // pred_fallthru
      _
    // Predicated region
    $region70: #{tpu_custom_call.1} parent=1 // pred_check
      _
    $region71: #{tpu_custom_call.1} parent=1 // pred_check_branch
      %141 = sbr.rel (0) target = $region73
    $region72: #{tpu_custom_call.1} parent=1 // pred_region
      %142 = dma.done [#allocation9], 2048
    $region73: #{tpu_custom_call.1} parent=1 // pred_fallthru
      _
    // Predicated region
    $region74: #{tpu_custom_call.1} parent=1 // pred_check
      _
    $region75: #{tpu_custom_call.1} parent=1 // pred_check_branch
      %144 = sbr.rel (0) target = $region77
    $region76: #{tpu_custom_call.1} parent=1 // pred_region
      %145 = dma.done [#allocation12], 1024
    $region77: #{tpu_custom_call.1} parent=1 // pred_fallthru
      _
    // Predicated region
    $region78: #{tpu_custom_call.1} parent=1 // pred_check
      _
    $region79: #{tpu_custom_call.1} parent=1 // pred_check_branch
      %147 = sbr.rel (0) target = $region81
    $region80: #{tpu_custom_call.1} parent=1 // pred_region
      %148 = dma.done [#allocation12], 1024
    $region81: #{tpu_custom_call.1} parent=1 // pred_fallthru
      _
    // Predicated region
    $region82: #{tpu_custom_call.1} parent=1 // pred_check
      _
    $region83: #{tpu_custom_call.1} parent=1 // pred_check_branch
      %150 = sbr.rel (0) target = $region85
    $region84: #{tpu_custom_call.1} parent=1 // pred_region
      %151 = dma.done [#allocation15], 1024
    $region85: #{tpu_custom_call.1} parent=1 // pred_fallthru
      _
    %v153 = vld [vmem:[#allocation2] sm:$0xff]
    %v154 = vld [vmem:[#allocation2 + $0x8] sm:$0xff]
    %v155 = vld [vmem:[#allocation2 + $0x10] sm:$0xff]
    %v156 = vld [vmem:[#allocation2 + $0x18] sm:$0xff]
    %v157 = vld [vmem:[#allocation2 + $0x20] sm:$0xff]
    %v158 = vld [vmem:[#allocation2 + $0x28] sm:$0xff]
    %v159 = vld [vmem:[#allocation2 + $0x30] sm:$0xff]
    %v160 = vld [vmem:[#allocation2 + $0x38] sm:$0xff]
    %v161 = vld [vmem:[#allocation2 + $0x40] sm:$0xff]
    %v162 = vld [vmem:[#allocation2 + $0x48] sm:$0xff]
    %v163 = vld [vmem:[#allocation2 + $0x50] sm:$0xff]
    %v164 = vld [vmem:[#allocation2 + $0x58] sm:$0xff]
    %v165 = vld [vmem:[#allocation2 + $0x60] sm:$0xff]
    %v166 = vld [vmem:[#allocation2 + $0x68] sm:$0xff]
    %v167 = vld [vmem:[#allocation2 + $0x70] sm:$0xff]
    %v168 = vld [vmem:[#allocation2 + $0x78] sm:$0xff]
    %v169 = vld [vmem:[#allocation2 + $0x80] sm:$0xff]
    %v170 = vld [vmem:[#allocation2 + $0x88] sm:$0xff]
    %v171 = vld [vmem:[#allocation2 + $0x90] sm:$0xff]
    %v172 = vld [vmem:[#allocation2 + $0x98] sm:$0xff]
    %v173 = vld [vmem:[#allocation2 + $0xa0] sm:$0xff]
    %v174 = vld [vmem:[#allocation2 + $0xa8] sm:$0xff]
    %v175 = vld [vmem:[#allocation2 + $0xb0] sm:$0xff]
    %v176 = vld [vmem:[#allocation2 + $0xb8] sm:$0xff]
    %v177 = vld [vmem:[#allocation2 + $0xc0] sm:$0xff]
    %v178 = vld [vmem:[#allocation2 + $0xc8] sm:$0xff]
    %v179 = vld [vmem:[#allocation2 + $0xd0] sm:$0xff]
    %v180 = vld [vmem:[#allocation2 + $0xd8] sm:$0xff]
    %v181 = vld [vmem:[#allocation2 + $0xe0] sm:$0xff]
    %v182 = vld [vmem:[#allocation2 + $0xe8] sm:$0xff]
    %v183 = vld [vmem:[#allocation2 + $0xf0] sm:$0xff]
    %v184 = vld [vmem:[#allocation2 + $0xf8] sm:$0xff]
    %v185 = vld [vmem:[#allocation2 + $0x100] sm:$0xff]
    %v186 = vld [vmem:[#allocation2 + $0x108] sm:$0xff]
    %v187 = vld [vmem:[#allocation2 + $0x110] sm:$0xff]
    %v188 = vld [vmem:[#allocation2 + $0x118] sm:$0xff]
    %v189 = vld [vmem:[#allocation2 + $0x120] sm:$0xff]
    %v190 = vld [vmem:[#allocation2 + $0x128] sm:$0xff]
    %v191 = vld [vmem:[#allocation2 + $0x130] sm:$0xff]
    %v192 = vld [vmem:[#allocation2 + $0x138] sm:$0xff]
    %v193 = vld [vmem:[#allocation2 + $0x140] sm:$0xff]
    %v194 = vld [vmem:[#allocation2 + $0x148] sm:$0xff]
    %v195 = vld [vmem:[#allocation2 + $0x150] sm:$0xff]
    %v196 = vld [vmem:[#allocation2 + $0x158] sm:$0xff]
    %v197 = vld [vmem:[#allocation2 + $0x160] sm:$0xff]
    %v198 = vld [vmem:[#allocation2 + $0x168] sm:$0xff]
    %v199 = vld [vmem:[#allocation2 + $0x170] sm:$0xff]
    %v200 = vld [vmem:[#allocation2 + $0x178] sm:$0xff]
    %v201 = vld [vmem:[#allocation2 + $0x180] sm:$0xff]
    %v202 = vld [vmem:[#allocation2 + $0x188] sm:$0xff]
    %v203 = vld [vmem:[#allocation2 + $0x190] sm:$0xff]
    %v204 = vld [vmem:[#allocation2 + $0x198] sm:$0xff]
    %v205 = vld [vmem:[#allocation2 + $0x1a0] sm:$0xff]
    %v206 = vld [vmem:[#allocation2 + $0x1a8] sm:$0xff]
    %v207 = vld [vmem:[#allocation2 + $0x1b0] sm:$0xff]
    %v208 = vld [vmem:[#allocation2 + $0x1b8] sm:$0xff]
    %v209 = vld [vmem:[#allocation2 + $0x1c0] sm:$0xff]
    %v210 = vld [vmem:[#allocation2 + $0x1c8] sm:$0xff]
    %v211 = vld [vmem:[#allocation2 + $0x1d0] sm:$0xff]
    %v212 = vld [vmem:[#allocation2 + $0x1d8] sm:$0xff]
    %v213 = vld [vmem:[#allocation2 + $0x1e0] sm:$0xff]
    %v214 = vld [vmem:[#allocation2 + $0x1e8] sm:$0xff]
    %v215 = vld [vmem:[#allocation2 + $0x1f0] sm:$0xff]
    %v216 = vld [vmem:[#allocation2 + $0x1f8] sm:$0xff]
    %v217 = vld [vmem:[#allocation5] sm:$0xff]
    %v218 = vld [vmem:[#allocation5 + $0x8] sm:$0xff]
    %v219 = vld [vmem:[#allocation5 + $0x10] sm:$0xff]
    %v220 = vld [vmem:[#allocation5 + $0x18] sm:$0xff]
    %v221 = vld [vmem:[#allocation5 + $0x20] sm:$0xff]
    %v222 = vld [vmem:[#allocation5 + $0x28] sm:$0xff]
    %v223 = vld [vmem:[#allocation5 + $0x30] sm:$0xff]
    %v224 = vld [vmem:[#allocation5 + $0x38] sm:$0xff]
    %v225 = vld [vmem:[#allocation5 + $0x40] sm:$0xff]
    %v226 = vld [vmem:[#allocation5 + $0x48] sm:$0xff]
    %v227 = vld [vmem:[#allocation5 + $0x50] sm:$0xff]
    %v228 = vld [vmem:[#allocation5 + $0x58] sm:$0xff]
    %v229 = vld [vmem:[#allocation5 + $0x60] sm:$0xff]
    %v230 = vld [vmem:[#allocation5 + $0x68] sm:$0xff]
    %v231 = vld [vmem:[#allocation5 + $0x70] sm:$0xff]
    %v232 = vld [vmem:[#allocation5 + $0x78] sm:$0xff]
    %v233 = vld [vmem:[#allocation5 + $0x80] sm:$0xff]
    %v234 = vld [vmem:[#allocation5 + $0x88] sm:$0xff]
    %v235 = vld [vmem:[#allocation5 + $0x90] sm:$0xff]
    %v236 = vld [vmem:[#allocation5 + $0x98] sm:$0xff]
    %v237 = vld [vmem:[#allocation5 + $0xa0] sm:$0xff]
    %v238 = vld [vmem:[#allocation5 + $0xa8] sm:$0xff]
    %v239 = vld [vmem:[#allocation5 + $0xb0] sm:$0xff]
    %v240 = vld [vmem:[#allocation5 + $0xb8] sm:$0xff]
    %v241 = vld [vmem:[#allocation5 + $0xc0] sm:$0xff]
    %v242 = vld [vmem:[#allocation5 + $0xc8] sm:$0xff]
    %v243 = vld [vmem:[#allocation5 + $0xd0] sm:$0xff]
    %v244 = vld [vmem:[#allocation5 + $0xd8] sm:$0xff]
    %v245 = vld [vmem:[#allocation5 + $0xe0] sm:$0xff]
    %v246 = vld [vmem:[#allocation5 + $0xe8] sm:$0xff]
    %v247 = vld [vmem:[#allocation5 + $0xf0] sm:$0xff]
    %v248 = vld [vmem:[#allocation5 + $0xf8] sm:$0xff]
    %v249 = vld [vmem:[#allocation5 + $0x100] sm:$0xff]
    %v250 = vld [vmem:[#allocation5 + $0x108] sm:$0xff]
    %v251 = vld [vmem:[#allocation5 + $0x110] sm:$0xff]
    %v252 = vld [vmem:[#allocation5 + $0x118] sm:$0xff]
    %v253 = vld [vmem:[#allocation5 + $0x120] sm:$0xff]
    %v254 = vld [vmem:[#allocation5 + $0x128] sm:$0xff]
    %v255 = vld [vmem:[#allocation5 + $0x130] sm:$0xff]
    %v256 = vld [vmem:[#allocation5 + $0x138] sm:$0xff]
    %v257 = vld [vmem:[#allocation5 + $0x140] sm:$0xff]
    %v258 = vld [vmem:[#allocation5 + $0x148] sm:$0xff]
    %v259 = vld [vmem:[#allocation5 + $0x150] sm:$0xff]
    %v260 = vld [vmem:[#allocation5 + $0x158] sm:$0xff]
    %v261 = vld [vmem:[#allocation5 + $0x160] sm:$0xff]
    %v262 = vld [vmem:[#allocation5 + $0x168] sm:$0xff]
    %v263 = vld [vmem:[#allocation5 + $0x170] sm:$0xff]
    %v264 = vld [vmem:[#allocation5 + $0x178] sm:$0xff]
    %v265 = vld [vmem:[#allocation5 + $0x180] sm:$0xff]
    %v266 = vld [vmem:[#allocation5 + $0x188] sm:$0xff]
    %v267 = vld [vmem:[#allocation5 + $0x190] sm:$0xff]
    %v268 = vld [vmem:[#allocation5 + $0x198] sm:$0xff]
    %v269 = vld [vmem:[#allocation5 + $0x1a0] sm:$0xff]
    %v270 = vld [vmem:[#allocation5 + $0x1a8] sm:$0xff]
    %v271 = vld [vmem:[#allocation5 + $0x1b0] sm:$0xff]
    %v272 = vld [vmem:[#allocation5 + $0x1b8] sm:$0xff]
    %v273 = vld [vmem:[#allocation5 + $0x1c0] sm:$0xff]
    %v274 = vld [vmem:[#allocation5 + $0x1c8] sm:$0xff]
    %v275 = vld [vmem:[#allocation5 + $0x1d0] sm:$0xff]
    %v276 = vld [vmem:[#allocation5 + $0x1d8] sm:$0xff]
    %v277 = vld [vmem:[#allocation5 + $0x1e0] sm:$0xff]
    %v278 = vld [vmem:[#allocation5 + $0x1e8] sm:$0xff]
    %v279 = vld [vmem:[#allocation5 + $0x1f0] sm:$0xff]
    %v280 = vld [vmem:[#allocation5 + $0x1f8] sm:$0xff]
    %v281 = vld [vmem:[#allocation5 + $0x200] sm:$0xff]
    %v282 = vld [vmem:[#allocation5 + $0x208] sm:$0xff]
    %v283 = vld [vmem:[#allocation5 + $0x210] sm:$0xff]
    %v284 = vld [vmem:[#allocation5 + $0x218] sm:$0xff]
    %v285 = vld [vmem:[#allocation5 + $0x220] sm:$0xff]
    %v286 = vld [vmem:[#allocation5 + $0x228] sm:$0xff]
    %v287 = vld [vmem:[#allocation5 + $0x230] sm:$0xff]
    %v288 = vld [vmem:[#allocation5 + $0x238] sm:$0xff]
    %v289 = vld [vmem:[#allocation5 + $0x240] sm:$0xff]
    %v290 = vld [vmem:[#allocation5 + $0x248] sm:$0xff]
    %v291 = vld [vmem:[#allocation5 + $0x250] sm:$0xff]
    %v292 = vld [vmem:[#allocation5 + $0x258] sm:$0xff]
    %v293 = vld [vmem:[#allocation5 + $0x260] sm:$0xff]
    %v294 = vld [vmem:[#allocation5 + $0x268] sm:$0xff]
    %v295 = vld [vmem:[#allocation5 + $0x270] sm:$0xff]
    %v296 = vld [vmem:[#allocation5 + $0x278] sm:$0xff]
    %v297 = vld [vmem:[#allocation5 + $0x280] sm:$0xff]
    %v298 = vld [vmem:[#allocation5 + $0x288] sm:$0xff]
    %v299 = vld [vmem:[#allocation5 + $0x290] sm:$0xff]
    %v300 = vld [vmem:[#allocation5 + $0x298] sm:$0xff]
    %v301 = vld [vmem:[#allocation5 + $0x2a0] sm:$0xff]
    %v302 = vld [vmem:[#allocation5 + $0x2a8] sm:$0xff]
    %v303 = vld [vmem:[#allocation5 + $0x2b0] sm:$0xff]
    %v304 = vld [vmem:[#allocation5 + $0x2b8] sm:$0xff]
    %v305 = vld [vmem:[#allocation5 + $0x2c0] sm:$0xff]
    %v306 = vld [vmem:[#allocation5 + $0x2c8] sm:$0xff]
    %v307 = vld [vmem:[#allocation5 + $0x2d0] sm:$0xff]
    %v308 = vld [vmem:[#allocation5 + $0x2d8] sm:$0xff]
    %v309 = vld [vmem:[#allocation5 + $0x2e0] sm:$0xff]
    %v310 = vld [vmem:[#allocation5 + $0x2e8] sm:$0xff]
    %v311 = vld [vmem:[#allocation5 + $0x2f0] sm:$0xff]
    %v312 = vld [vmem:[#allocation5 + $0x2f8] sm:$0xff]
    %v313 = vld [vmem:[#allocation5 + $0x300] sm:$0xff]
    %v314 = vld [vmem:[#allocation5 + $0x308] sm:$0xff]
    %v315 = vld [vmem:[#allocation5 + $0x310] sm:$0xff]
    %v316 = vld [vmem:[#allocation5 + $0x318] sm:$0xff]
    %v317 = vld [vmem:[#allocation5 + $0x320] sm:$0xff]
    %v318 = vld [vmem:[#allocation5 + $0x328] sm:$0xff]
    %v319 = vld [vmem:[#allocation5 + $0x330] sm:$0xff]
    %v320 = vld [vmem:[#allocation5 + $0x338] sm:$0xff]
    %v321 = vld [vmem:[#allocation5 + $0x340] sm:$0xff]
    %v322 = vld [vmem:[#allocation5 + $0x348] sm:$0xff]
    %v323 = vld [vmem:[#allocation5 + $0x350] sm:$0xff]
    %v324 = vld [vmem:[#allocation5 + $0x358] sm:$0xff]
    %v325 = vld [vmem:[#allocation5 + $0x360] sm:$0xff]
    %v326 = vld [vmem:[#allocation5 + $0x368] sm:$0xff]
    %v327 = vld [vmem:[#allocation5 + $0x370] sm:$0xff]
    %v328 = vld [vmem:[#allocation5 + $0x378] sm:$0xff]
    %v329 = vld [vmem:[#allocation5 + $0x380] sm:$0xff]
    %v330 = vld [vmem:[#allocation5 + $0x388] sm:$0xff]
    %v331 = vld [vmem:[#allocation5 + $0x390] sm:$0xff]
    %v332 = vld [vmem:[#allocation5 + $0x398] sm:$0xff]
    %v333 = vld [vmem:[#allocation5 + $0x3a0] sm:$0xff]
    %v334 = vld [vmem:[#allocation5 + $0x3a8] sm:$0xff]
    %v335 = vld [vmem:[#allocation5 + $0x3b0] sm:$0xff]
    %v336 = vld [vmem:[#allocation5 + $0x3b8] sm:$0xff]
    %v337 = vld [vmem:[#allocation5 + $0x3c0] sm:$0xff]
    %v338 = vld [vmem:[#allocation5 + $0x3c8] sm:$0xff]
    %v339 = vld [vmem:[#allocation5 + $0x3d0] sm:$0xff]
    %v340 = vld [vmem:[#allocation5 + $0x3d8] sm:$0xff]
    %v341 = vld [vmem:[#allocation5 + $0x3e0] sm:$0xff]
    %v342 = vld [vmem:[#allocation5 + $0x3e8] sm:$0xff]
    %v343 = vld [vmem:[#allocation5 + $0x3f0] sm:$0xff]
    %v344 = vld [vmem:[#allocation5 + $0x3f8] sm:$0xff]
    %v345 = vld [vmem:[#allocation5 + $0x400] sm:$0xff]
    %v346 = vld [vmem:[#allocation5 + $0x408] sm:$0xff]
    %v347 = vld [vmem:[#allocation5 + $0x410] sm:$0xff]
    %v348 = vld [vmem:[#allocation5 + $0x418] sm:$0xff]
    %v349 = vld [vmem:[#allocation5 + $0x420] sm:$0xff]
    %v350 = vld [vmem:[#allocation5 + $0x428] sm:$0xff]
    %v351 = vld [vmem:[#allocation5 + $0x430] sm:$0xff]
    %v352 = vld [vmem:[#allocation5 + $0x438] sm:$0xff]
    %v353 = vld [vmem:[#allocation5 + $0x440] sm:$0xff]
    %v354 = vld [vmem:[#allocation5 + $0x448] sm:$0xff]
    %v355 = vld [vmem:[#allocation5 + $0x450] sm:$0xff]
    %v356 = vld [vmem:[#allocation5 + $0x458] sm:$0xff]
    %v357 = vld [vmem:[#allocation5 + $0x460] sm:$0xff]
    %v358 = vld [vmem:[#allocation5 + $0x468] sm:$0xff]
    %v359 = vld [vmem:[#allocation5 + $0x470] sm:$0xff]
    %v360 = vld [vmem:[#allocation5 + $0x478] sm:$0xff]
    %v361 = vld [vmem:[#allocation5 + $0x480] sm:$0xff]
    %v362 = vld [vmem:[#allocation5 + $0x488] sm:$0xff]
    %v363 = vld [vmem:[#allocation5 + $0x490] sm:$0xff]
    %v364 = vld [vmem:[#allocation5 + $0x498] sm:$0xff]
    %v365 = vld [vmem:[#allocation5 + $0x4a0] sm:$0xff]
    %v366 = vld [vmem:[#allocation5 + $0x4a8] sm:$0xff]
    %v367 = vld [vmem:[#allocation5 + $0x4b0] sm:$0xff]
    %v368 = vld [vmem:[#allocation5 + $0x4b8] sm:$0xff]
    %v369 = vld [vmem:[#allocation5 + $0x4c0] sm:$0xff]
    %v370 = vld [vmem:[#allocation5 + $0x4c8] sm:$0xff]
    %v371 = vld [vmem:[#allocation5 + $0x4d0] sm:$0xff]
    %v372 = vld [vmem:[#allocation5 + $0x4d8] sm:$0xff]
    %v373 = vld [vmem:[#allocation5 + $0x4e0] sm:$0xff]
    %v374 = vld [vmem:[#allocation5 + $0x4e8] sm:$0xff]
    %v375 = vld [vmem:[#allocation5 + $0x4f0] sm:$0xff]
    %v376 = vld [vmem:[#allocation5 + $0x4f8] sm:$0xff]
    %v377 = vld [vmem:[#allocation5 + $0x500] sm:$0xff]
    %v378 = vld [vmem:[#allocation5 + $0x508] sm:$0xff]
    %v379 = vld [vmem:[#allocation5 + $0x510] sm:$0xff]
    %v380 = vld [vmem:[#allocation5 + $0x518] sm:$0xff]
    %v381 = vld [vmem:[#allocation5 + $0x520] sm:$0xff]
    %v382 = vld [vmem:[#allocation5 + $0x528] sm:$0xff]
    %v383 = vld [vmem:[#allocation5 + $0x530] sm:$0xff]
    %v384 = vld [vmem:[#allocation5 + $0x538] sm:$0xff]
    %v385 = vld [vmem:[#allocation5 + $0x540] sm:$0xff]
    %v386 = vld [vmem:[#allocation5 + $0x548] sm:$0xff]
    %v387 = vld [vmem:[#allocation5 + $0x550] sm:$0xff]
    %v388 = vld [vmem:[#allocation5 + $0x558] sm:$0xff]
    %v389 = vld [vmem:[#allocation5 + $0x560] sm:$0xff]
    %v390 = vld [vmem:[#allocation5 + $0x568] sm:$0xff]
    %v391 = vld [vmem:[#allocation5 + $0x570] sm:$0xff]
    %v392 = vld [vmem:[#allocation5 + $0x578] sm:$0xff]
    %v393 = vld [vmem:[#allocation5 + $0x580] sm:$0xff]
    %v394 = vld [vmem:[#allocation5 + $0x588] sm:$0xff]
    %v395 = vld [vmem:[#allocation5 + $0x590] sm:$0xff]
    %v396 = vld [vmem:[#allocation5 + $0x598] sm:$0xff]
    %v397 = vld [vmem:[#allocation5 + $0x5a0] sm:$0xff]
    %v398 = vld [vmem:[#allocation5 + $0x5a8] sm:$0xff]
    %v399 = vld [vmem:[#allocation5 + $0x5b0] sm:$0xff]
    %v400 = vld [vmem:[#allocation5 + $0x5b8] sm:$0xff]
    %v401 = vld [vmem:[#allocation5 + $0x5c0] sm:$0xff]
    %v402 = vld [vmem:[#allocation5 + $0x5c8] sm:$0xff]
    %v403 = vld [vmem:[#allocation5 + $0x5d0] sm:$0xff]
    %v404 = vld [vmem:[#allocation5 + $0x5d8] sm:$0xff]
    %v405 = vld [vmem:[#allocation5 + $0x5e0] sm:$0xff]
    %v406 = vld [vmem:[#allocation5 + $0x5e8] sm:$0xff]
    %v407 = vld [vmem:[#allocation5 + $0x5f0] sm:$0xff]
    %v408 = vld [vmem:[#allocation5 + $0x5f8] sm:$0xff]
    %v409 = vld [vmem:[#allocation5 + $0x600] sm:$0xff]
    %v410 = vld [vmem:[#allocation5 + $0x608] sm:$0xff]
    %v411 = vld [vmem:[#allocation5 + $0x610] sm:$0xff]
    %v412 = vld [vmem:[#allocation5 + $0x618] sm:$0xff]
    %v413 = vld [vmem:[#allocation5 + $0x620] sm:$0xff]
    %v414 = vld [vmem:[#allocation5 + $0x628] sm:$0xff]
    %v415 = vld [vmem:[#allocation5 + $0x630] sm:$0xff]
    %v416 = vld [vmem:[#allocation5 + $0x638] sm:$0xff]
    %v417 = vld [vmem:[#allocation5 + $0x640] sm:$0xff]
    %v418 = vld [vmem:[#allocation5 + $0x648] sm:$0xff]
    %v419 = vld [vmem:[#allocation5 + $0x650] sm:$0xff]
    %v420 = vld [vmem:[#allocation5 + $0x658] sm:$0xff]
    %v421 = vld [vmem:[#allocation5 + $0x660] sm:$0xff]
    %v422 = vld [vmem:[#allocation5 + $0x668] sm:$0xff]
    %v423 = vld [vmem:[#allocation5 + $0x670] sm:$0xff]
    %v424 = vld [vmem:[#allocation5 + $0x678] sm:$0xff]
    %v425 = vld [vmem:[#allocation5 + $0x680] sm:$0xff]
    %v426 = vld [vmem:[#allocation5 + $0x688] sm:$0xff]
    %v427 = vld [vmem:[#allocation5 + $0x690] sm:$0xff]
    %v428 = vld [vmem:[#allocation5 + $0x698] sm:$0xff]
    %v429 = vld [vmem:[#allocation5 + $0x6a0] sm:$0xff]
    %v430 = vld [vmem:[#allocation5 + $0x6a8] sm:$0xff]
    %v431 = vld [vmem:[#allocation5 + $0x6b0] sm:$0xff]
    %v432 = vld [vmem:[#allocation5 + $0x6b8] sm:$0xff]
    %v433 = vld [vmem:[#allocation5 + $0x6c0] sm:$0xff]
    %v434 = vld [vmem:[#allocation5 + $0x6c8] sm:$0xff]
    %v435 = vld [vmem:[#allocation5 + $0x6d0] sm:$0xff]
    %v436 = vld [vmem:[#allocation5 + $0x6d8] sm:$0xff]
    %v437 = vld [vmem:[#allocation5 + $0x6e0] sm:$0xff]
    %v438 = vld [vmem:[#allocation5 + $0x6e8] sm:$0xff]
    %v439 = vld [vmem:[#allocation5 + $0x6f0] sm:$0xff]
    %v440 = vld [vmem:[#allocation5 + $0x6f8] sm:$0xff]
    %v441 = vld [vmem:[#allocation5 + $0x700] sm:$0xff]
    %v442 = vld [vmem:[#allocation5 + $0x708] sm:$0xff]
    %v443 = vld [vmem:[#allocation5 + $0x710] sm:$0xff]
    %v444 = vld [vmem:[#allocation5 + $0x718] sm:$0xff]
    %v445 = vld [vmem:[#allocation5 + $0x720] sm:$0xff]
    %v446 = vld [vmem:[#allocation5 + $0x728] sm:$0xff]
    %v447 = vld [vmem:[#allocation5 + $0x730] sm:$0xff]
    %v448 = vld [vmem:[#allocation5 + $0x738] sm:$0xff]
    %v449 = vld [vmem:[#allocation5 + $0x740] sm:$0xff]
    %v450 = vld [vmem:[#allocation5 + $0x748] sm:$0xff]
    %v451 = vld [vmem:[#allocation5 + $0x750] sm:$0xff]
    %v452 = vld [vmem:[#allocation5 + $0x758] sm:$0xff]
    %v453 = vld [vmem:[#allocation5 + $0x760] sm:$0xff]
    %v454 = vld [vmem:[#allocation5 + $0x768] sm:$0xff]
    %v455 = vld [vmem:[#allocation5 + $0x770] sm:$0xff]
    %v456 = vld [vmem:[#allocation5 + $0x778] sm:$0xff]
    %v457 = vld [vmem:[#allocation5 + $0x780] sm:$0xff]
    %v458 = vld [vmem:[#allocation5 + $0x788] sm:$0xff]
    %v459 = vld [vmem:[#allocation5 + $0x790] sm:$0xff]
    %v460 = vld [vmem:[#allocation5 + $0x798] sm:$0xff]
    %v461 = vld [vmem:[#allocation5 + $0x7a0] sm:$0xff]
    %v462 = vld [vmem:[#allocation5 + $0x7a8] sm:$0xff]
    %v463 = vld [vmem:[#allocation5 + $0x7b0] sm:$0xff]
    %v464 = vld [vmem:[#allocation5 + $0x7b8] sm:$0xff]
    %v465 = vld [vmem:[#allocation5 + $0x7c0] sm:$0xff]
    %v466 = vld [vmem:[#allocation5 + $0x7c8] sm:$0xff]
    %v467 = vld [vmem:[#allocation5 + $0x7d0] sm:$0xff]
    %v468 = vld [vmem:[#allocation5 + $0x7d8] sm:$0xff]
    %v469 = vld [vmem:[#allocation5 + $0x7e0] sm:$0xff]
    %v470 = vld [vmem:[#allocation5 + $0x7e8] sm:$0xff]
    %v471 = vld [vmem:[#allocation5 + $0x7f0] sm:$0xff]
    %v472 = vld [vmem:[#allocation5 + $0x7f8] sm:$0xff]
    %v473 = vld [vmem:[#allocation7] sm:$0xf]
    %v475 = vlaneseq
    %v476 = vshrl.u32 %v475, 7
    %v477 = vsub.s32 0, %v476
    %v478 = vrot.slane %v473, %v477
    %v479 = vlaneseq
    %v480 = vshrl.u32 %v479, 7
    %v481 = vsub.s32 1, %v480
    %v482 = vrot.slane %v473, %v481
    %v483 = vlaneseq
    %v484 = vshrl.u32 %v483, 7
    %v485 = vsub.s32 2, %v484
    %v486 = vrot.slane %v473, %v485
    %v487 = vlaneseq
    %v488 = vshrl.u32 %v487, 7
    %v489 = vsub.s32 3, %v488
    %v490 = vrot.slane %v473, %v489
    %v559 = vunpack.c.l.b16 %v153
    %v560 = vunpack.c.h.b16 %v153
    %v561 = vunpack.c.l.b16 %v154
    %v562 = vunpack.c.h.b16 %v154
    %v563 = vunpack.c.l.b16 %v155
    %v564 = vunpack.c.h.b16 %v155
    %v565 = vunpack.c.l.b16 %v156
    %v566 = vunpack.c.h.b16 %v156
    %v567 = vunpack.c.l.b16 %v157
    %v568 = vunpack.c.h.b16 %v157
    %v569 = vunpack.c.l.b16 %v158
    %v570 = vunpack.c.h.b16 %v158
    %v571 = vunpack.c.l.b16 %v159
    %v572 = vunpack.c.h.b16 %v159
    %v573 = vunpack.c.l.b16 %v160
    %v574 = vunpack.c.h.b16 %v160
    %v575 = vunpack.c.l.b16 %v161
    %v576 = vunpack.c.h.b16 %v161
    %v577 = vunpack.c.l.b16 %v162
    %v578 = vunpack.c.h.b16 %v162
    %v579 = vunpack.c.l.b16 %v163
    %v580 = vunpack.c.h.b16 %v163
    %v581 = vunpack.c.l.b16 %v164
    %v582 = vunpack.c.h.b16 %v164
    %v583 = vunpack.c.l.b16 %v165
    %v584 = vunpack.c.h.b16 %v165
    %v585 = vunpack.c.l.b16 %v166
    %v586 = vunpack.c.h.b16 %v166
    %v587 = vunpack.c.l.b16 %v167
    %v588 = vunpack.c.h.b16 %v167
    %v589 = vunpack.c.l.b16 %v168
    %v590 = vunpack.c.h.b16 %v168
    %v591 = vunpack.c.l.b16 %v169
    %v592 = vunpack.c.h.b16 %v169
    %v593 = vunpack.c.l.b16 %v170
    %v594 = vunpack.c.h.b16 %v170
    %v595 = vunpack.c.l.b16 %v171
    %v596 = vunpack.c.h.b16 %v171
    %v597 = vunpack.c.l.b16 %v172
    %v598 = vunpack.c.h.b16 %v172
    %v599 = vunpack.c.l.b16 %v173
    %v600 = vunpack.c.h.b16 %v173
    %v601 = vunpack.c.l.b16 %v174
    %v602 = vunpack.c.h.b16 %v174
    %v603 = vunpack.c.l.b16 %v175
    %v604 = vunpack.c.h.b16 %v175
    %v605 = vunpack.c.l.b16 %v176
    %v606 = vunpack.c.h.b16 %v176
    %v607 = vunpack.c.l.b16 %v177
    %v608 = vunpack.c.h.b16 %v177
    %v609 = vunpack.c.l.b16 %v178
    %v610 = vunpack.c.h.b16 %v178
    %v611 = vunpack.c.l.b16 %v179
    %v612 = vunpack.c.h.b16 %v179
    %v613 = vunpack.c.l.b16 %v180
    %v614 = vunpack.c.h.b16 %v180
    %v615 = vunpack.c.l.b16 %v181
    %v616 = vunpack.c.h.b16 %v181
    %v617 = vunpack.c.l.b16 %v182
    %v618 = vunpack.c.h.b16 %v182
    %v619 = vunpack.c.l.b16 %v183
    %v620 = vunpack.c.h.b16 %v183
    %v621 = vunpack.c.l.b16 %v184
    %v622 = vunpack.c.h.b16 %v184
    %v623 = vunpack.c.l.b16 %v185
    %v624 = vunpack.c.h.b16 %v185
    %v625 = vunpack.c.l.b16 %v186
    %v626 = vunpack.c.h.b16 %v186
    %v627 = vunpack.c.l.b16 %v187
    %v628 = vunpack.c.h.b16 %v187
    %v629 = vunpack.c.l.b16 %v188
    %v630 = vunpack.c.h.b16 %v188
    %v631 = vunpack.c.l.b16 %v189
    %v632 = vunpack.c.h.b16 %v189
    %v633 = vunpack.c.l.b16 %v190
    %v634 = vunpack.c.h.b16 %v190
    %v635 = vunpack.c.l.b16 %v191
    %v636 = vunpack.c.h.b16 %v191
    %v637 = vunpack.c.l.b16 %v192
    %v638 = vunpack.c.h.b16 %v192
    %v639 = vunpack.c.l.b16 %v193
    %v640 = vunpack.c.h.b16 %v193
    %v641 = vunpack.c.l.b16 %v194
    %v642 = vunpack.c.h.b16 %v194
    %v643 = vunpack.c.l.b16 %v195
    %v644 = vunpack.c.h.b16 %v195
    %v645 = vunpack.c.l.b16 %v196
    %v646 = vunpack.c.h.b16 %v196
    %v647 = vunpack.c.l.b16 %v197
    %v648 = vunpack.c.h.b16 %v197
    %v649 = vunpack.c.l.b16 %v198
    %v650 = vunpack.c.h.b16 %v198
    %v651 = vunpack.c.l.b16 %v199
    %v652 = vunpack.c.h.b16 %v199
    %v653 = vunpack.c.l.b16 %v200
    %v654 = vunpack.c.h.b16 %v200
    %v655 = vunpack.c.l.b16 %v201
    %v656 = vunpack.c.h.b16 %v201
    %v657 = vunpack.c.l.b16 %v202
    %v658 = vunpack.c.h.b16 %v202
    %v659 = vunpack.c.l.b16 %v203
    %v660 = vunpack.c.h.b16 %v203
    %v661 = vunpack.c.l.b16 %v204
    %v662 = vunpack.c.h.b16 %v204
    %v663 = vunpack.c.l.b16 %v205
    %v664 = vunpack.c.h.b16 %v205
    %v665 = vunpack.c.l.b16 %v206
    %v666 = vunpack.c.h.b16 %v206
    %v667 = vunpack.c.l.b16 %v207
    %v668 = vunpack.c.h.b16 %v207
    %v669 = vunpack.c.l.b16 %v208
    %v670 = vunpack.c.h.b16 %v208
    %v671 = vunpack.c.l.b16 %v209
    %v672 = vunpack.c.h.b16 %v209
    %v673 = vunpack.c.l.b16 %v210
    %v674 = vunpack.c.h.b16 %v210
    %v675 = vunpack.c.l.b16 %v211
    %v676 = vunpack.c.h.b16 %v211
    %v677 = vunpack.c.l.b16 %v212
    %v678 = vunpack.c.h.b16 %v212
    %v679 = vunpack.c.l.b16 %v213
    %v680 = vunpack.c.h.b16 %v213
    %v681 = vunpack.c.l.b16 %v214
    %v682 = vunpack.c.h.b16 %v214
    %v683 = vunpack.c.l.b16 %v215
    %v684 = vunpack.c.h.b16 %v215
    %v685 = vunpack.c.l.b16 %v216
    %v686 = vunpack.c.h.b16 %v216
    %v687 = vpack.c.b16 %v567, %v559
    %v688 = vpack.c.b16 %v568, %v560
    %v689 = vpack.c.b16 %v569, %v561
    %v690 = vpack.c.b16 %v570, %v562
    %v691 = vpack.c.b16 %v571, %v563
    %v692 = vpack.c.b16 %v572, %v564
    %v693 = vpack.c.b16 %v573, %v565
    %v694 = vpack.c.b16 %v574, %v566
    %v695 = vpack.c.b16 %v583, %v575
    %v696 = vpack.c.b16 %v584, %v576
    %v697 = vpack.c.b16 %v585, %v577
    %v698 = vpack.c.b16 %v586, %v578
    %v699 = vpack.c.b16 %v587, %v579
    %v700 = vpack.c.b16 %v588, %v580
    %v701 = vpack.c.b16 %v589, %v581
    %v702 = vpack.c.b16 %v590, %v582
    %v703 = vpack.c.b16 %v599, %v591
    %v704 = vpack.c.b16 %v600, %v592
    %v705 = vpack.c.b16 %v601, %v593
    %v706 = vpack.c.b16 %v602, %v594
    %v707 = vpack.c.b16 %v603, %v595
    %v708 = vpack.c.b16 %v604, %v596
    %v709 = vpack.c.b16 %v605, %v597
    %v710 = vpack.c.b16 %v606, %v598
    %v711 = vpack.c.b16 %v615, %v607
    %v712 = vpack.c.b16 %v616, %v608
    %v713 = vpack.c.b16 %v617, %v609
    %v714 = vpack.c.b16 %v618, %v610
    %v715 = vpack.c.b16 %v619, %v611
    %v716 = vpack.c.b16 %v620, %v612
    %v717 = vpack.c.b16 %v621, %v613
    %v718 = vpack.c.b16 %v622, %v614
    %v719 = vpack.c.b16 %v631, %v623
    %v720 = vpack.c.b16 %v632, %v624
    %v721 = vpack.c.b16 %v633, %v625
    %v722 = vpack.c.b16 %v634, %v626
    %v723 = vpack.c.b16 %v635, %v627
    %v724 = vpack.c.b16 %v636, %v628
    %v725 = vpack.c.b16 %v637, %v629
    %v726 = vpack.c.b16 %v638, %v630
    %v727 = vpack.c.b16 %v647, %v639
    %v728 = vpack.c.b16 %v648, %v640
    %v729 = vpack.c.b16 %v649, %v641
    %v730 = vpack.c.b16 %v650, %v642
    %v731 = vpack.c.b16 %v651, %v643
    %v732 = vpack.c.b16 %v652, %v644
    %v733 = vpack.c.b16 %v653, %v645
    %v734 = vpack.c.b16 %v654, %v646
    %v735 = vpack.c.b16 %v663, %v655
    %v736 = vpack.c.b16 %v664, %v656
    %v737 = vpack.c.b16 %v665, %v657
    %v738 = vpack.c.b16 %v666, %v658
    %v739 = vpack.c.b16 %v667, %v659
    %v740 = vpack.c.b16 %v668, %v660
    %v741 = vpack.c.b16 %v669, %v661
    %v742 = vpack.c.b16 %v670, %v662
    %v743 = vpack.c.b16 %v679, %v671
    %v744 = vpack.c.b16 %v680, %v672
    %v745 = vpack.c.b16 %v681, %v673
    %v746 = vpack.c.b16 %v682, %v674
    %v747 = vpack.c.b16 %v683, %v675
    %v748 = vpack.c.b16 %v684, %v676
    %v749 = vpack.c.b16 %v685, %v677
    %v750 = vpack.c.b16 %v686, %v678
    %v1071 = vunpack.c.l.b16 %v217
    %v1072 = vunpack.c.h.b16 %v217
    %v1073 = vunpack.c.l.b16 %v218
    %v1074 = vunpack.c.h.b16 %v218
    %v1075 = vunpack.c.l.b16 %v219
    %v1076 = vunpack.c.h.b16 %v219
    %v1077 = vunpack.c.l.b16 %v220
    %v1078 = vunpack.c.h.b16 %v220
    %v1079 = vunpack.c.l.b16 %v221
    %v1080 = vunpack.c.h.b16 %v221
    %v1081 = vunpack.c.l.b16 %v222
    %v1082 = vunpack.c.h.b16 %v222
    %v1083 = vunpack.c.l.b16 %v223
    %v1084 = vunpack.c.h.b16 %v223
    %v1085 = vunpack.c.l.b16 %v224
    %v1086 = vunpack.c.h.b16 %v224
    %v1087 = vunpack.c.l.b16 %v225
    %v1088 = vunpack.c.h.b16 %v225
    %v1089 = vunpack.c.l.b16 %v226
    %v1090 = vunpack.c.h.b16 %v226
    %v1091 = vunpack.c.l.b16 %v227
    %v1092 = vunpack.c.h.b16 %v227
    %v1093 = vunpack.c.l.b16 %v228
    %v1094 = vunpack.c.h.b16 %v228
    %v1095 = vunpack.c.l.b16 %v229
    %v1096 = vunpack.c.h.b16 %v229
    %v1097 = vunpack.c.l.b16 %v230
    %v1098 = vunpack.c.h.b16 %v230
    %v1099 = vunpack.c.l.b16 %v231
    %v1100 = vunpack.c.h.b16 %v231
    %v1101 = vunpack.c.l.b16 %v232
    %v1102 = vunpack.c.h.b16 %v232
    %v1103 = vunpack.c.l.b16 %v233
    %v1104 = vunpack.c.h.b16 %v233
    %v1105 = vunpack.c.l.b16 %v234
    %v1106 = vunpack.c.h.b16 %v234
    %v1107 = vunpack.c.l.b16 %v235
    %v1108 = vunpack.c.h.b16 %v235
    %v1109 = vunpack.c.l.b16 %v236
    %v1110 = vunpack.c.h.b16 %v236
    %v1111 = vunpack.c.l.b16 %v237
    %v1112 = vunpack.c.h.b16 %v237
    %v1113 = vunpack.c.l.b16 %v238
    %v1114 = vunpack.c.h.b16 %v238
    %v1115 = vunpack.c.l.b16 %v239
    %v1116 = vunpack.c.h.b16 %v239
    %v1117 = vunpack.c.l.b16 %v240
    %v1118 = vunpack.c.h.b16 %v240
    %v1119 = vunpack.c.l.b16 %v241
    %v1120 = vunpack.c.h.b16 %v241
    %v1121 = vunpack.c.l.b16 %v242
    %v1122 = vunpack.c.h.b16 %v242
    %v1123 = vunpack.c.l.b16 %v243
    %v1124 = vunpack.c.h.b16 %v243
    %v1125 = vunpack.c.l.b16 %v244
    %v1126 = vunpack.c.h.b16 %v244
    %v1127 = vunpack.c.l.b16 %v245
    %v1128 = vunpack.c.h.b16 %v245
    %v1129 = vunpack.c.l.b16 %v246
    %v1130 = vunpack.c.h.b16 %v246
    %v1131 = vunpack.c.l.b16 %v247
    %v1132 = vunpack.c.h.b16 %v247
    %v1133 = vunpack.c.l.b16 %v248
    %v1134 = vunpack.c.h.b16 %v248
    %v1135 = vunpack.c.l.b16 %v249
    %v1136 = vunpack.c.h.b16 %v249
    %v1137 = vunpack.c.l.b16 %v250
    %v1138 = vunpack.c.h.b16 %v250
    %v1139 = vunpack.c.l.b16 %v251
    %v1140 = vunpack.c.h.b16 %v251
    %v1141 = vunpack.c.l.b16 %v252
    %v1142 = vunpack.c.h.b16 %v252
    %v1143 = vunpack.c.l.b16 %v253
    %v1144 = vunpack.c.h.b16 %v253
    %v1145 = vunpack.c.l.b16 %v254
    %v1146 = vunpack.c.h.b16 %v254
    %v1147 = vunpack.c.l.b16 %v255
    %v1148 = vunpack.c.h.b16 %v255
    %v1149 = vunpack.c.l.b16 %v256
    %v1150 = vunpack.c.h.b16 %v256
    %v1151 = vunpack.c.l.b16 %v257
    %v1152 = vunpack.c.h.b16 %v257
    %v1153 = vunpack.c.l.b16 %v258
    %v1154 = vunpack.c.h.b16 %v258
    %v1155 = vunpack.c.l.b16 %v259
    %v1156 = vunpack.c.h.b16 %v259
    %v1157 = vunpack.c.l.b16 %v260
    %v1158 = vunpack.c.h.b16 %v260
    %v1159 = vunpack.c.l.b16 %v261
    %v1160 = vunpack.c.h.b16 %v261
    %v1161 = vunpack.c.l.b16 %v262
    %v1162 = vunpack.c.h.b16 %v262
    %v1163 = vunpack.c.l.b16 %v263
    %v1164 = vunpack.c.h.b16 %v263
    %v1165 = vunpack.c.l.b16 %v264
    %v1166 = vunpack.c.h.b16 %v264
    %v1167 = vunpack.c.l.b16 %v265
    %v1168 = vunpack.c.h.b16 %v265
    %v1169 = vunpack.c.l.b16 %v266
    %v1170 = vunpack.c.h.b16 %v266
    %v1171 = vunpack.c.l.b16 %v267
    %v1172 = vunpack.c.h.b16 %v267
    %v1173 = vunpack.c.l.b16 %v268
    %v1174 = vunpack.c.h.b16 %v268
    %v1175 = vunpack.c.l.b16 %v269
    %v1176 = vunpack.c.h.b16 %v269
    %v1177 = vunpack.c.l.b16 %v270
    %v1178 = vunpack.c.h.b16 %v270
    %v1179 = vunpack.c.l.b16 %v271
    %v1180 = vunpack.c.h.b16 %v271
    %v1181 = vunpack.c.l.b16 %v272
    %v1182 = vunpack.c.h.b16 %v272
    %v1183 = vunpack.c.l.b16 %v273
    %v1184 = vunpack.c.h.b16 %v273
    %v1185 = vunpack.c.l.b16 %v274
    %v1186 = vunpack.c.h.b16 %v274
    %v1187 = vunpack.c.l.b16 %v275
    %v1188 = vunpack.c.h.b16 %v275
    %v1189 = vunpack.c.l.b16 %v276
    %v1190 = vunpack.c.h.b16 %v276
    %v1191 = vunpack.c.l.b16 %v277
    %v1192 = vunpack.c.h.b16 %v277
    %v1193 = vunpack.c.l.b16 %v278
    %v1194 = vunpack.c.h.b16 %v278
    %v1195 = vunpack.c.l.b16 %v279
    %v1196 = vunpack.c.h.b16 %v279
    %v1197 = vunpack.c.l.b16 %v280
    %v1198 = vunpack.c.h.b16 %v280
    %v1199 = vunpack.c.l.b16 %v281
    %v1200 = vunpack.c.h.b16 %v281
    %v1201 = vunpack.c.l.b16 %v282
    %v1202 = vunpack.c.h.b16 %v282
    %v1203 = vunpack.c.l.b16 %v283
    %v1204 = vunpack.c.h.b16 %v283
    %v1205 = vunpack.c.l.b16 %v284
    %v1206 = vunpack.c.h.b16 %v284
    %v1207 = vunpack.c.l.b16 %v285
    %v1208 = vunpack.c.h.b16 %v285
    %v1209 = vunpack.c.l.b16 %v286
    %v1210 = vunpack.c.h.b16 %v286
    %v1211 = vunpack.c.l.b16 %v287
    %v1212 = vunpack.c.h.b16 %v287
    %v1213 = vunpack.c.l.b16 %v288
    %v1214 = vunpack.c.h.b16 %v288
    %v1215 = vunpack.c.l.b16 %v289
    %v1216 = vunpack.c.h.b16 %v289
    %v1217 = vunpack.c.l.b16 %v290
    %v1218 = vunpack.c.h.b16 %v290
    %v1219 = vunpack.c.l.b16 %v291
    %v1220 = vunpack.c.h.b16 %v291
    %v1221 = vunpack.c.l.b16 %v292
    %v1222 = vunpack.c.h.b16 %v292
    %v1223 = vunpack.c.l.b16 %v293
    %v1224 = vunpack.c.h.b16 %v293
    %v1225 = vunpack.c.l.b16 %v294
    %v1226 = vunpack.c.h.b16 %v294
    %v1227 = vunpack.c.l.b16 %v295
    %v1228 = vunpack.c.h.b16 %v295
    %v1229 = vunpack.c.l.b16 %v296
    %v1230 = vunpack.c.h.b16 %v296
    %v1231 = vunpack.c.l.b16 %v297
    %v1232 = vunpack.c.h.b16 %v297
    %v1233 = vunpack.c.l.b16 %v298
    %v1234 = vunpack.c.h.b16 %v298
    %v1235 = vunpack.c.l.b16 %v299
    %v1236 = vunpack.c.h.b16 %v299
    %v1237 = vunpack.c.l.b16 %v300
    %v1238 = vunpack.c.h.b16 %v300
    %v1239 = vunpack.c.l.b16 %v301
    %v1240 = vunpack.c.h.b16 %v301
    %v1241 = vunpack.c.l.b16 %v302
    %v1242 = vunpack.c.h.b16 %v302
    %v1243 = vunpack.c.l.b16 %v303
    %v1244 = vunpack.c.h.b16 %v303
    %v1245 = vunpack.c.l.b16 %v304
    %v1246 = vunpack.c.h.b16 %v304
    %v1247 = vunpack.c.l.b16 %v305
    %v1248 = vunpack.c.h.b16 %v305
    %v1249 = vunpack.c.l.b16 %v306
    %v1250 = vunpack.c.h.b16 %v306
    %v1251 = vunpack.c.l.b16 %v307
    %v1252 = vunpack.c.h.b16 %v307
    %v1253 = vunpack.c.l.b16 %v308
    %v1254 = vunpack.c.h.b16 %v308
    %v1255 = vunpack.c.l.b16 %v309
    %v1256 = vunpack.c.h.b16 %v309
    %v1257 = vunpack.c.l.b16 %v310
    %v1258 = vunpack.c.h.b16 %v310
    %v1259 = vunpack.c.l.b16 %v311
    %v1260 = vunpack.c.h.b16 %v311
    %v1261 = vunpack.c.l.b16 %v312
    %v1262 = vunpack.c.h.b16 %v312
    %v1263 = vunpack.c.l.b16 %v313
    %v1264 = vunpack.c.h.b16 %v313
    %v1265 = vunpack.c.l.b16 %v314
    %v1266 = vunpack.c.h.b16 %v314
    %v1267 = vunpack.c.l.b16 %v315
    %v1268 = vunpack.c.h.b16 %v315
    %v1269 = vunpack.c.l.b16 %v316
    %v1270 = vunpack.c.h.b16 %v316
    %v1271 = vunpack.c.l.b16 %v317
    %v1272 = vunpack.c.h.b16 %v317
    %v1273 = vunpack.c.l.b16 %v318
    %v1274 = vunpack.c.h.b16 %v318
    %v1275 = vunpack.c.l.b16 %v319
    %v1276 = vunpack.c.h.b16 %v319
    %v1277 = vunpack.c.l.b16 %v320
    %v1278 = vunpack.c.h.b16 %v320
    %v1279 = vunpack.c.l.b16 %v321
    %v1280 = vunpack.c.h.b16 %v321
    %v1281 = vunpack.c.l.b16 %v322
    %v1282 = vunpack.c.h.b16 %v322
    %v1283 = vunpack.c.l.b16 %v323
    %v1284 = vunpack.c.h.b16 %v323
    %v1285 = vunpack.c.l.b16 %v324
    %v1286 = vunpack.c.h.b16 %v324
    %v1287 = vunpack.c.l.b16 %v325
    %v1288 = vunpack.c.h.b16 %v325
    %v1289 = vunpack.c.l.b16 %v326
    %v1290 = vunpack.c.h.b16 %v326
    %v1291 = vunpack.c.l.b16 %v327
    %v1292 = vunpack.c.h.b16 %v327
    %v1293 = vunpack.c.l.b16 %v328
    %v1294 = vunpack.c.h.b16 %v328
    %v1295 = vunpack.c.l.b16 %v329
    %v1296 = vunpack.c.h.b16 %v329
    %v1297 = vunpack.c.l.b16 %v330
    %v1298 = vunpack.c.h.b16 %v330
    %v1299 = vunpack.c.l.b16 %v331
    %v1300 = vunpack.c.h.b16 %v331
    %v1301 = vunpack.c.l.b16 %v332
    %v1302 = vunpack.c.h.b16 %v332
    %v1303 = vunpack.c.l.b16 %v333
    %v1304 = vunpack.c.h.b16 %v333
    %v1305 = vunpack.c.l.b16 %v334
    %v1306 = vunpack.c.h.b16 %v334
    %v1307 = vunpack.c.l.b16 %v335
    %v1308 = vunpack.c.h.b16 %v335
    %v1309 = vunpack.c.l.b16 %v336
    %v1310 = vunpack.c.h.b16 %v336
    %v1311 = vunpack.c.l.b16 %v337
    %v1312 = vunpack.c.h.b16 %v337
    %v1313 = vunpack.c.l.b16 %v338
    %v1314 = vunpack.c.h.b16 %v338
    %v1315 = vunpack.c.l.b16 %v339
    %v1316 = vunpack.c.h.b16 %v339
    %v1317 = vunpack.c.l.b16 %v340
    %v1318 = vunpack.c.h.b16 %v340
    %v1319 = vunpack.c.l.b16 %v341
    %v1320 = vunpack.c.h.b16 %v341
    %v1321 = vunpack.c.l.b16 %v342
    %v1322 = vunpack.c.h.b16 %v342
    %v1323 = vunpack.c.l.b16 %v343
    %v1324 = vunpack.c.h.b16 %v343
    %v1325 = vunpack.c.l.b16 %v344
    %v1326 = vunpack.c.h.b16 %v344
    %v1327 = vunpack.c.l.b16 %v345
    %v1328 = vunpack.c.h.b16 %v345
    %v1329 = vunpack.c.l.b16 %v346
    %v1330 = vunpack.c.h.b16 %v346
    %v1331 = vunpack.c.l.b16 %v347
    %v1332 = vunpack.c.h.b16 %v347
    %v1333 = vunpack.c.l.b16 %v348
    %v1334 = vunpack.c.h.b16 %v348
    %v1335 = vunpack.c.l.b16 %v349
    %v1336 = vunpack.c.h.b16 %v349
    %v1337 = vunpack.c.l.b16 %v350
    %v1338 = vunpack.c.h.b16 %v350
    %v1339 = vunpack.c.l.b16 %v351
    %v1340 = vunpack.c.h.b16 %v351
    %v1341 = vunpack.c.l.b16 %v352
    %v1342 = vunpack.c.h.b16 %v352
    %v1343 = vunpack.c.l.b16 %v353
    %v1344 = vunpack.c.h.b16 %v353
    %v1345 = vunpack.c.l.b16 %v354
    %v1346 = vunpack.c.h.b16 %v354
    %v1347 = vunpack.c.l.b16 %v355
    %v1348 = vunpack.c.h.b16 %v355
    %v1349 = vunpack.c.l.b16 %v356
    %v1350 = vunpack.c.h.b16 %v356
    %v1351 = vunpack.c.l.b16 %v357
    %v1352 = vunpack.c.h.b16 %v357
    %v1353 = vunpack.c.l.b16 %v358
    %v1354 = vunpack.c.h.b16 %v358
    %v1355 = vunpack.c.l.b16 %v359
    %v1356 = vunpack.c.h.b16 %v359
    %v1357 = vunpack.c.l.b16 %v360
    %v1358 = vunpack.c.h.b16 %v360
    %v1359 = vunpack.c.l.b16 %v361
    %v1360 = vunpack.c.h.b16 %v361
    %v1361 = vunpack.c.l.b16 %v362
    %v1362 = vunpack.c.h.b16 %v362
    %v1363 = vunpack.c.l.b16 %v363
    %v1364 = vunpack.c.h.b16 %v363
    %v1365 = vunpack.c.l.b16 %v364
    %v1366 = vunpack.c.h.b16 %v364
    %v1367 = vunpack.c.l.b16 %v365
    %v1368 = vunpack.c.h.b16 %v365
    %v1369 = vunpack.c.l.b16 %v366
    %v1370 = vunpack.c.h.b16 %v366
    %v1371 = vunpack.c.l.b16 %v367
    %v1372 = vunpack.c.h.b16 %v367
    %v1373 = vunpack.c.l.b16 %v368
    %v1374 = vunpack.c.h.b16 %v368
    %v1375 = vunpack.c.l.b16 %v369
    %v1376 = vunpack.c.h.b16 %v369
    %v1377 = vunpack.c.l.b16 %v370
    %v1378 = vunpack.c.h.b16 %v370
    %v1379 = vunpack.c.l.b16 %v371
    %v1380 = vunpack.c.h.b16 %v371
    %v1381 = vunpack.c.l.b16 %v372
    %v1382 = vunpack.c.h.b16 %v372
    %v1383 = vunpack.c.l.b16 %v373
    %v1384 = vunpack.c.h.b16 %v373
    %v1385 = vunpack.c.l.b16 %v374
    %v1386 = vunpack.c.h.b16 %v374
    %v1387 = vunpack.c.l.b16 %v375
    %v1388 = vunpack.c.h.b16 %v375
    %v1389 = vunpack.c.l.b16 %v376
    %v1390 = vunpack.c.h.b16 %v376
    %v1391 = vunpack.c.l.b16 %v377
    %v1392 = vunpack.c.h.b16 %v377
    %v1393 = vunpack.c.l.b16 %v378
    %v1394 = vunpack.c.h.b16 %v378
    %v1395 = vunpack.c.l.b16 %v379
    %v1396 = vunpack.c.h.b16 %v379
    %v1397 = vunpack.c.l.b16 %v380
    %v1398 = vunpack.c.h.b16 %v380
    %v1399 = vunpack.c.l.b16 %v381
    %v1400 = vunpack.c.h.b16 %v381
    %v1401 = vunpack.c.l.b16 %v382
    %v1402 = vunpack.c.h.b16 %v382
    %v1403 = vunpack.c.l.b16 %v383
    %v1404 = vunpack.c.h.b16 %v383
    %v1405 = vunpack.c.l.b16 %v384
    %v1406 = vunpack.c.h.b16 %v384
    %v1407 = vunpack.c.l.b16 %v385
    %v1408 = vunpack.c.h.b16 %v385
    %v1409 = vunpack.c.l.b16 %v386
    %v1410 = vunpack.c.h.b16 %v386
    %v1411 = vunpack.c.l.b16 %v387
    %v1412 = vunpack.c.h.b16 %v387
    %v1413 = vunpack.c.l.b16 %v388
    %v1414 = vunpack.c.h.b16 %v388
    %v1415 = vunpack.c.l.b16 %v389
    %v1416 = vunpack.c.h.b16 %v389
    %v1417 = vunpack.c.l.b16 %v390
    %v1418 = vunpack.c.h.b16 %v390
    %v1419 = vunpack.c.l.b16 %v391
    %v1420 = vunpack.c.h.b16 %v391
    %v1421 = vunpack.c.l.b16 %v392
    %v1422 = vunpack.c.h.b16 %v392
    %v1423 = vunpack.c.l.b16 %v393
    %v1424 = vunpack.c.h.b16 %v393
    %v1425 = vunpack.c.l.b16 %v394
    %v1426 = vunpack.c.h.b16 %v394
    %v1427 = vunpack.c.l.b16 %v395
    %v1428 = vunpack.c.h.b16 %v395
    %v1429 = vunpack.c.l.b16 %v396
    %v1430 = vunpack.c.h.b16 %v396
    %v1431 = vunpack.c.l.b16 %v397
    %v1432 = vunpack.c.h.b16 %v397
    %v1433 = vunpack.c.l.b16 %v398
    %v1434 = vunpack.c.h.b16 %v398
    %v1435 = vunpack.c.l.b16 %v399
    %v1436 = vunpack.c.h.b16 %v399
    %v1437 = vunpack.c.l.b16 %v400
    %v1438 = vunpack.c.h.b16 %v400
    %v1439 = vunpack.c.l.b16 %v401
    %v1440 = vunpack.c.h.b16 %v401
    %v1441 = vunpack.c.l.b16 %v402
    %v1442 = vunpack.c.h.b16 %v402
    %v1443 = vunpack.c.l.b16 %v403
    %v1444 = vunpack.c.h.b16 %v403
    %v1445 = vunpack.c.l.b16 %v404
    %v1446 = vunpack.c.h.b16 %v404
    %v1447 = vunpack.c.l.b16 %v405
    %v1448 = vunpack.c.h.b16 %v405
    %v1449 = vunpack.c.l.b16 %v406
    %v1450 = vunpack.c.h.b16 %v406
    %v1451 = vunpack.c.l.b16 %v407
    %v1452 = vunpack.c.h.b16 %v407
    %v1453 = vunpack.c.l.b16 %v408
    %v1454 = vunpack.c.h.b16 %v408
    %v1455 = vunpack.c.l.b16 %v409
    %v1456 = vunpack.c.h.b16 %v409
    %v1457 = vunpack.c.l.b16 %v410
    %v1458 = vunpack.c.h.b16 %v410
    %v1459 = vunpack.c.l.b16 %v411
    %v1460 = vunpack.c.h.b16 %v411
    %v1461 = vunpack.c.l.b16 %v412
    %v1462 = vunpack.c.h.b16 %v412
    %v1463 = vunpack.c.l.b16 %v413
    %v1464 = vunpack.c.h.b16 %v413
    %v1465 = vunpack.c.l.b16 %v414
    %v1466 = vunpack.c.h.b16 %v414
    %v1467 = vunpack.c.l.b16 %v415
    %v1468 = vunpack.c.h.b16 %v415
    %v1469 = vunpack.c.l.b16 %v416
    %v1470 = vunpack.c.h.b16 %v416
    %v1471 = vunpack.c.l.b16 %v417
    %v1472 = vunpack.c.h.b16 %v417
    %v1473 = vunpack.c.l.b16 %v418
    %v1474 = vunpack.c.h.b16 %v418
    %v1475 = vunpack.c.l.b16 %v419
    %v1476 = vunpack.c.h.b16 %v419
    %v1477 = vunpack.c.l.b16 %v420
    %v1478 = vunpack.c.h.b16 %v420
    %v1479 = vunpack.c.l.b16 %v421
    %v1480 = vunpack.c.h.b16 %v421
    %v1481 = vunpack.c.l.b16 %v422
    %v1482 = vunpack.c.h.b16 %v422
    %v1483 = vunpack.c.l.b16 %v423
    %v1484 = vunpack.c.h.b16 %v423
    %v1485 = vunpack.c.l.b16 %v424
    %v1486 = vunpack.c.h.b16 %v424
    %v1487 = vunpack.c.l.b16 %v425
    %v1488 = vunpack.c.h.b16 %v425
    %v1489 = vunpack.c.l.b16 %v426
    %v1490 = vunpack.c.h.b16 %v426
    %v1491 = vunpack.c.l.b16 %v427
    %v1492 = vunpack.c.h.b16 %v427
    %v1493 = vunpack.c.l.b16 %v428
    %v1494 = vunpack.c.h.b16 %v428
    %v1495 = vunpack.c.l.b16 %v429
    %v1496 = vunpack.c.h.b16 %v429
    %v1497 = vunpack.c.l.b16 %v430
    %v1498 = vunpack.c.h.b16 %v430
    %v1499 = vunpack.c.l.b16 %v431
    %v1500 = vunpack.c.h.b16 %v431
    %v1501 = vunpack.c.l.b16 %v432
    %v1502 = vunpack.c.h.b16 %v432
    %v1503 = vunpack.c.l.b16 %v433
    %v1504 = vunpack.c.h.b16 %v433
    %v1505 = vunpack.c.l.b16 %v434
    %v1506 = vunpack.c.h.b16 %v434
    %v1507 = vunpack.c.l.b16 %v435
    %v1508 = vunpack.c.h.b16 %v435
    %v1509 = vunpack.c.l.b16 %v436
    %v1510 = vunpack.c.h.b16 %v436
    %v1511 = vunpack.c.l.b16 %v437
    %v1512 = vunpack.c.h.b16 %v437
    %v1513 = vunpack.c.l.b16 %v438
    %v1514 = vunpack.c.h.b16 %v438
    %v1515 = vunpack.c.l.b16 %v439
    %v1516 = vunpack.c.h.b16 %v439
    %v1517 = vunpack.c.l.b16 %v440
    %v1518 = vunpack.c.h.b16 %v440
    %v1519 = vunpack.c.l.b16 %v441
    %v1520 = vunpack.c.h.b16 %v441
    %v1521 = vunpack.c.l.b16 %v442
    %v1522 = vunpack.c.h.b16 %v442
    %v1523 = vunpack.c.l.b16 %v443
    %v1524 = vunpack.c.h.b16 %v443
    %v1525 = vunpack.c.l.b16 %v444
    %v1526 = vunpack.c.h.b16 %v444
    %v1527 = vunpack.c.l.b16 %v445
    %v1528 = vunpack.c.h.b16 %v445
    %v1529 = vunpack.c.l.b16 %v446
    %v1530 = vunpack.c.h.b16 %v446
    %v1531 = vunpack.c.l.b16 %v447
    %v1532 = vunpack.c.h.b16 %v447
    %v1533 = vunpack.c.l.b16 %v448
    %v1534 = vunpack.c.h.b16 %v448
    %v1535 = vunpack.c.l.b16 %v449
    %v1536 = vunpack.c.h.b16 %v449
    %v1537 = vunpack.c.l.b16 %v450
    %v1538 = vunpack.c.h.b16 %v450
    %v1539 = vunpack.c.l.b16 %v451
    %v1540 = vunpack.c.h.b16 %v451
    %v1541 = vunpack.c.l.b16 %v452
    %v1542 = vunpack.c.h.b16 %v452
    %v1543 = vunpack.c.l.b16 %v453
    %v1544 = vunpack.c.h.b16 %v453
    %v1545 = vunpack.c.l.b16 %v454
    %v1546 = vunpack.c.h.b16 %v454
    %v1547 = vunpack.c.l.b16 %v455
    %v1548 = vunpack.c.h.b16 %v455
    %v1549 = vunpack.c.l.b16 %v456
    %v1550 = vunpack.c.h.b16 %v456
    %v1551 = vunpack.c.l.b16 %v457
    %v1552 = vunpack.c.h.b16 %v457
    %v1553 = vunpack.c.l.b16 %v458
    %v1554 = vunpack.c.h.b16 %v458
    %v1555 = vunpack.c.l.b16 %v459
    %v1556 = vunpack.c.h.b16 %v459
    %v1557 = vunpack.c.l.b16 %v460
    %v1558 = vunpack.c.h.b16 %v460
    %v1559 = vunpack.c.l.b16 %v461
    %v1560 = vunpack.c.h.b16 %v461
    %v1561 = vunpack.c.l.b16 %v462
    %v1562 = vunpack.c.h.b16 %v462
    %v1563 = vunpack.c.l.b16 %v463
    %v1564 = vunpack.c.h.b16 %v463
    %v1565 = vunpack.c.l.b16 %v464
    %v1566 = vunpack.c.h.b16 %v464
    %v1567 = vunpack.c.l.b16 %v465
    %v1568 = vunpack.c.h.b16 %v465
    %v1569 = vunpack.c.l.b16 %v466
    %v1570 = vunpack.c.h.b16 %v466
    %v1571 = vunpack.c.l.b16 %v467
    %v1572 = vunpack.c.h.b16 %v467
    %v1573 = vunpack.c.l.b16 %v468
    %v1574 = vunpack.c.h.b16 %v468
    %v1575 = vunpack.c.l.b16 %v469
    %v1576 = vunpack.c.h.b16 %v469
    %v1577 = vunpack.c.l.b16 %v470
    %v1578 = vunpack.c.h.b16 %v470
    %v1579 = vunpack.c.l.b16 %v471
    %v1580 = vunpack.c.h.b16 %v471
    %v1581 = vunpack.c.l.b16 %v472
    %v1582 = vunpack.c.h.b16 %v472
    %v1583 = vpack.c.b16 %v1075, %v1071
    %v1584 = vpack.c.b16 %v1076, %v1072
    %v1585 = vpack.c.b16 %v1077, %v1073
    %v1586 = vpack.c.b16 %v1078, %v1074
    %v1587 = vpack.c.b16 %v1083, %v1079
    %v1588 = vpack.c.b16 %v1084, %v1080
    %v1589 = vpack.c.b16 %v1085, %v1081
    %v1590 = vpack.c.b16 %v1086, %v1082
    %v1591 = vpack.c.b16 %v1091, %v1087
    %v1592 = vpack.c.b16 %v1092, %v1088
    %v1593 = vpack.c.b16 %v1093, %v1089
    %v1594 = vpack.c.b16 %v1094, %v1090
    %v1595 = vpack.c.b16 %v1099, %v1095
    %v1596 = vpack.c.b16 %v1100, %v1096
    %v1597 = vpack.c.b16 %v1101, %v1097
    %v1598 = vpack.c.b16 %v1102, %v1098
    %v1599 = vpack.c.b16 %v1107, %v1103
    %v1600 = vpack.c.b16 %v1108, %v1104
    %v1601 = vpack.c.b16 %v1109, %v1105
    %v1602 = vpack.c.b16 %v1110, %v1106
    %v1603 = vpack.c.b16 %v1115, %v1111
    %v1604 = vpack.c.b16 %v1116, %v1112
    %v1605 = vpack.c.b16 %v1117, %v1113
    %v1606 = vpack.c.b16 %v1118, %v1114
    %v1607 = vpack.c.b16 %v1123, %v1119
    %v1608 = vpack.c.b16 %v1124, %v1120
    %v1609 = vpack.c.b16 %v1125, %v1121
    %v1610 = vpack.c.b16 %v1126, %v1122
    %v1611 = vpack.c.b16 %v1131, %v1127
    %v1612 = vpack.c.b16 %v1132, %v1128
    %v1613 = vpack.c.b16 %v1133, %v1129
    %v1614 = vpack.c.b16 %v1134, %v1130
    %v1615 = vpack.c.b16 %v1139, %v1135
    %v1616 = vpack.c.b16 %v1140, %v1136
    %v1617 = vpack.c.b16 %v1141, %v1137
    %v1618 = vpack.c.b16 %v1142, %v1138
    %v1619 = vpack.c.b16 %v1147, %v1143
    %v1620 = vpack.c.b16 %v1148, %v1144
    %v1621 = vpack.c.b16 %v1149, %v1145
    %v1622 = vpack.c.b16 %v1150, %v1146
    %v1623 = vpack.c.b16 %v1155, %v1151
    %v1624 = vpack.c.b16 %v1156, %v1152
    %v1625 = vpack.c.b16 %v1157, %v1153
    %v1626 = vpack.c.b16 %v1158, %v1154
    %v1627 = vpack.c.b16 %v1163, %v1159
    %v1628 = vpack.c.b16 %v1164, %v1160
    %v1629 = vpack.c.b16 %v1165, %v1161
    %v1630 = vpack.c.b16 %v1166, %v1162
    %v1631 = vpack.c.b16 %v1171, %v1167
    %v1632 = vpack.c.b16 %v1172, %v1168
    %v1633 = vpack.c.b16 %v1173, %v1169
    %v1634 = vpack.c.b16 %v1174, %v1170
    %v1635 = vpack.c.b16 %v1179, %v1175
    %v1636 = vpack.c.b16 %v1180, %v1176
    %v1637 = vpack.c.b16 %v1181, %v1177
    %v1638 = vpack.c.b16 %v1182, %v1178
    %v1639 = vpack.c.b16 %v1187, %v1183
    %v1640 = vpack.c.b16 %v1188, %v1184
    %v1641 = vpack.c.b16 %v1189, %v1185
    %v1642 = vpack.c.b16 %v1190, %v1186
    %v1643 = vpack.c.b16 %v1195, %v1191
    %v1644 = vpack.c.b16 %v1196, %v1192
    %v1645 = vpack.c.b16 %v1197, %v1193
    %v1646 = vpack.c.b16 %v1198, %v1194
    %v1647 = vpack.c.b16 %v1203, %v1199
    %v1648 = vpack.c.b16 %v1204, %v1200
    %v1649 = vpack.c.b16 %v1205, %v1201
    %v1650 = vpack.c.b16 %v1206, %v1202
    %v1651 = vpack.c.b16 %v1211, %v1207
    %v1652 = vpack.c.b16 %v1212, %v1208
    %v1653 = vpack.c.b16 %v1213, %v1209
    %v1654 = vpack.c.b16 %v1214, %v1210
    %v1655 = vpack.c.b16 %v1219, %v1215
    %v1656 = vpack.c.b16 %v1220, %v1216
    %v1657 = vpack.c.b16 %v1221, %v1217
    %v1658 = vpack.c.b16 %v1222, %v1218
    %v1659 = vpack.c.b16 %v1227, %v1223
    %v1660 = vpack.c.b16 %v1228, %v1224
    %v1661 = vpack.c.b16 %v1229, %v1225
    %v1662 = vpack.c.b16 %v1230, %v1226
    %v1663 = vpack.c.b16 %v1235, %v1231
    %v1664 = vpack.c.b16 %v1236, %v1232
    %v1665 = vpack.c.b16 %v1237, %v1233
    %v1666 = vpack.c.b16 %v1238, %v1234
    %v1667 = vpack.c.b16 %v1243, %v1239
    %v1668 = vpack.c.b16 %v1244, %v1240
    %v1669 = vpack.c.b16 %v1245, %v1241
    %v1670 = vpack.c.b16 %v1246, %v1242
    %v1671 = vpack.c.b16 %v1251, %v1247
    %v1672 = vpack.c.b16 %v1252, %v1248
    %v1673 = vpack.c.b16 %v1253, %v1249
    %v1674 = vpack.c.b16 %v1254, %v1250
    %v1675 = vpack.c.b16 %v1259, %v1255
    %v1676 = vpack.c.b16 %v1260, %v1256
    %v1677 = vpack.c.b16 %v1261, %v1257
    %v1678 = vpack.c.b16 %v1262, %v1258
    %v1679 = vpack.c.b16 %v1267, %v1263
    %v1680 = vpack.c.b16 %v1268, %v1264
    %v1681 = vpack.c.b16 %v1269, %v1265
    %v1682 = vpack.c.b16 %v1270, %v1266
    %v1683 = vpack.c.b16 %v1275, %v1271
    %v1684 = vpack.c.b16 %v1276, %v1272
    %v1685 = vpack.c.b16 %v1277, %v1273
    %v1686 = vpack.c.b16 %v1278, %v1274
    %v1687 = vpack.c.b16 %v1283, %v1279
    %v1688 = vpack.c.b16 %v1284, %v1280
    %v1689 = vpack.c.b16 %v1285, %v1281
    %v1690 = vpack.c.b16 %v1286, %v1282
    %v1691 = vpack.c.b16 %v1291, %v1287
    %v1692 = vpack.c.b16 %v1292, %v1288
    %v1693 = vpack.c.b16 %v1293, %v1289
    %v1694 = vpack.c.b16 %v1294, %v1290
    %v1695 = vpack.c.b16 %v1299, %v1295
    %v1696 = vpack.c.b16 %v1300, %v1296
    %v1697 = vpack.c.b16 %v1301, %v1297
    %v1698 = vpack.c.b16 %v1302, %v1298
    %v1699 = vpack.c.b16 %v1307, %v1303
    %v1700 = vpack.c.b16 %v1308, %v1304
    %v1701 = vpack.c.b16 %v1309, %v1305
    %v1702 = vpack.c.b16 %v1310, %v1306
    %v1703 = vpack.c.b16 %v1315, %v1311
    %v1704 = vpack.c.b16 %v1316, %v1312
    %v1705 = vpack.c.b16 %v1317, %v1313
    %v1706 = vpack.c.b16 %v1318, %v1314
    %v1707 = vpack.c.b16 %v1323, %v1319
    %v1708 = vpack.c.b16 %v1324, %v1320
    %v1709 = vpack.c.b16 %v1325, %v1321
    %v1710 = vpack.c.b16 %v1326, %v1322
    %v1711 = vpack.c.b16 %v1331, %v1327
    %v1712 = vpack.c.b16 %v1332, %v1328
    %v1713 = vpack.c.b16 %v1333, %v1329
    %v1714 = vpack.c.b16 %v1334, %v1330
    %v1715 = vpack.c.b16 %v1339, %v1335
    %v1716 = vpack.c.b16 %v1340, %v1336
    %v1717 = vpack.c.b16 %v1341, %v1337
    %v1718 = vpack.c.b16 %v1342, %v1338
    %v1719 = vpack.c.b16 %v1347, %v1343
    %v1720 = vpack.c.b16 %v1348, %v1344
    %v1721 = vpack.c.b16 %v1349, %v1345
    %v1722 = vpack.c.b16 %v1350, %v1346
    %v1723 = vpack.c.b16 %v1355, %v1351
    %v1724 = vpack.c.b16 %v1356, %v1352
    %v1725 = vpack.c.b16 %v1357, %v1353
    %v1726 = vpack.c.b16 %v1358, %v1354
    %v1727 = vpack.c.b16 %v1363, %v1359
    %v1728 = vpack.c.b16 %v1364, %v1360
    %v1729 = vpack.c.b16 %v1365, %v1361
    %v1730 = vpack.c.b16 %v1366, %v1362
    %v1731 = vpack.c.b16 %v1371, %v1367
    %v1732 = vpack.c.b16 %v1372, %v1368
    %v1733 = vpack.c.b16 %v1373, %v1369
    %v1734 = vpack.c.b16 %v1374, %v1370
    %v1735 = vpack.c.b16 %v1379, %v1375
    %v1736 = vpack.c.b16 %v1380, %v1376
    %v1737 = vpack.c.b16 %v1381, %v1377
    %v1738 = vpack.c.b16 %v1382, %v1378
    %v1739 = vpack.c.b16 %v1387, %v1383
    %v1740 = vpack.c.b16 %v1388, %v1384
    %v1741 = vpack.c.b16 %v1389, %v1385
    %v1742 = vpack.c.b16 %v1390, %v1386
    %v1743 = vpack.c.b16 %v1395, %v1391
    %v1744 = vpack.c.b16 %v1396, %v1392
    %v1745 = vpack.c.b16 %v1397, %v1393
    %v1746 = vpack.c.b16 %v1398, %v1394
    %v1747 = vpack.c.b16 %v1403, %v1399
    %v1748 = vpack.c.b16 %v1404, %v1400
    %v1749 = vpack.c.b16 %v1405, %v1401
    %v1750 = vpack.c.b16 %v1406, %v1402
    %v1751 = vpack.c.b16 %v1411, %v1407
    %v1752 = vpack.c.b16 %v1412, %v1408
    %v1753 = vpack.c.b16 %v1413, %v1409
    %v1754 = vpack.c.b16 %v1414, %v1410
    %v1755 = vpack.c.b16 %v1419, %v1415
    %v1756 = vpack.c.b16 %v1420, %v1416
    %v1757 = vpack.c.b16 %v1421, %v1417
    %v1758 = vpack.c.b16 %v1422, %v1418
    %v1759 = vpack.c.b16 %v1427, %v1423
    %v1760 = vpack.c.b16 %v1428, %v1424
    %v1761 = vpack.c.b16 %v1429, %v1425
    %v1762 = vpack.c.b16 %v1430, %v1426
    %v1763 = vpack.c.b16 %v1435, %v1431
    %v1764 = vpack.c.b16 %v1436, %v1432
    %v1765 = vpack.c.b16 %v1437, %v1433
    %v1766 = vpack.c.b16 %v1438, %v1434
    %v1767 = vpack.c.b16 %v1443, %v1439
    %v1768 = vpack.c.b16 %v1444, %v1440
    %v1769 = vpack.c.b16 %v1445, %v1441
    %v1770 = vpack.c.b16 %v1446, %v1442
    %v1771 = vpack.c.b16 %v1451, %v1447
    %v1772 = vpack.c.b16 %v1452, %v1448
    %v1773 = vpack.c.b16 %v1453, %v1449
    %v1774 = vpack.c.b16 %v1454, %v1450
    %v1775 = vpack.c.b16 %v1459, %v1455
    %v1776 = vpack.c.b16 %v1460, %v1456
    %v1777 = vpack.c.b16 %v1461, %v1457
    %v1778 = vpack.c.b16 %v1462, %v1458
    %v1779 = vpack.c.b16 %v1467, %v1463
    %v1780 = vpack.c.b16 %v1468, %v1464
    %v1781 = vpack.c.b16 %v1469, %v1465
    %v1782 = vpack.c.b16 %v1470, %v1466
    %v1783 = vpack.c.b16 %v1475, %v1471
    %v1784 = vpack.c.b16 %v1476, %v1472
    %v1785 = vpack.c.b16 %v1477, %v1473
    %v1786 = vpack.c.b16 %v1478, %v1474
    %v1787 = vpack.c.b16 %v1483, %v1479
    %v1788 = vpack.c.b16 %v1484, %v1480
    %v1789 = vpack.c.b16 %v1485, %v1481
    %v1790 = vpack.c.b16 %v1486, %v1482
    %v1791 = vpack.c.b16 %v1491, %v1487
    %v1792 = vpack.c.b16 %v1492, %v1488
    %v1793 = vpack.c.b16 %v1493, %v1489
    %v1794 = vpack.c.b16 %v1494, %v1490
    %v1795 = vpack.c.b16 %v1499, %v1495
    %v1796 = vpack.c.b16 %v1500, %v1496
    %v1797 = vpack.c.b16 %v1501, %v1497
    %v1798 = vpack.c.b16 %v1502, %v1498
    %v1799 = vpack.c.b16 %v1507, %v1503
    %v1800 = vpack.c.b16 %v1508, %v1504
    %v1801 = vpack.c.b16 %v1509, %v1505
    %v1802 = vpack.c.b16 %v1510, %v1506
    %v1803 = vpack.c.b16 %v1515, %v1511
    %v1804 = vpack.c.b16 %v1516, %v1512
    %v1805 = vpack.c.b16 %v1517, %v1513
    %v1806 = vpack.c.b16 %v1518, %v1514
    %v1807 = vpack.c.b16 %v1523, %v1519
    %v1808 = vpack.c.b16 %v1524, %v1520
    %v1809 = vpack.c.b16 %v1525, %v1521
    %v1810 = vpack.c.b16 %v1526, %v1522
    %v1811 = vpack.c.b16 %v1531, %v1527
    %v1812 = vpack.c.b16 %v1532, %v1528
    %v1813 = vpack.c.b16 %v1533, %v1529
    %v1814 = vpack.c.b16 %v1534, %v1530
    %v1815 = vpack.c.b16 %v1539, %v1535
    %v1816 = vpack.c.b16 %v1540, %v1536
    %v1817 = vpack.c.b16 %v1541, %v1537
    %v1818 = vpack.c.b16 %v1542, %v1538
    %v1819 = vpack.c.b16 %v1547, %v1543
    %v1820 = vpack.c.b16 %v1548, %v1544
    %v1821 = vpack.c.b16 %v1549, %v1545
    %v1822 = vpack.c.b16 %v1550, %v1546
    %v1823 = vpack.c.b16 %v1555, %v1551
    %v1824 = vpack.c.b16 %v1556, %v1552
    %v1825 = vpack.c.b16 %v1557, %v1553
    %v1826 = vpack.c.b16 %v1558, %v1554
    %v1827 = vpack.c.b16 %v1563, %v1559
    %v1828 = vpack.c.b16 %v1564, %v1560
    %v1829 = vpack.c.b16 %v1565, %v1561
    %v1830 = vpack.c.b16 %v1566, %v1562
    %v1831 = vpack.c.b16 %v1571, %v1567
    %v1832 = vpack.c.b16 %v1572, %v1568
    %v1833 = vpack.c.b16 %v1573, %v1569
    %v1834 = vpack.c.b16 %v1574, %v1570
    %v1835 = vpack.c.b16 %v1579, %v1575
    %v1836 = vpack.c.b16 %v1580, %v1576
    %v1837 = vpack.c.b16 %v1581, %v1577
    %v1838 = vpack.c.b16 %v1582, %v1578
    %2095 = vmatprep.subr.bf16.mxu0 %v1612
    %2096 = vmatpush1.bf16.msra.mxu0 %v1611
    %2097 = vmatprep.subr.bf16.mxu0 %v1608
    %2098 = vmatpush1.bf16.msra.mxu0 %v1607
    %2099 = vmatprep.subr.bf16.mxu0 %v1604
    %2100 = vmatpush1.bf16.msra.mxu0 %v1603
    %2101 = vmatprep.subr.bf16.mxu0 %v1600
    %2102 = vmatpush1.bf16.msra.mxu0 %v1599
    %2103 = vmatprep.subr.bf16.mxu0 %v1596
    %2104 = vmatpush1.bf16.msra.mxu0 %v1595
    %2105 = vmatprep.subr.bf16.mxu0 %v1592
    %2106 = vmatpush1.bf16.msra.mxu0 %v1591
    %2107 = vmatprep.subr.bf16.mxu0 %v1588
    %2108 = vmatpush1.bf16.msra.mxu0 %v1587
    %2109 = vmatprep.subr.bf16.mxu0 %v1584
    %2110 = vmatpush1.bf16.msra.mxu0 %v1583
    %2111 = vmatprep.subr.bf16.mxu0 %v1644
    %2112 = vmatpush2.bf16.msra.mxu0 %v1643
    %2113 = vmatprep.subr.bf16.mxu0 %v1640
    %2114 = vmatpush2.bf16.msra.mxu0 %v1639
    %2115 = vmatprep.subr.bf16.mxu0 %v1636
    %2116 = vmatpush2.bf16.msra.mxu0 %v1635
    %2117 = vmatprep.subr.bf16.mxu0 %v1632
    %2118 = vmatpush2.bf16.msra.mxu0 %v1631
    %2119 = vmatprep.subr.bf16.mxu0 %v1628
    %2120 = vmatpush2.bf16.msra.mxu0 %v1627
    %2121 = vmatprep.subr.bf16.mxu0 %v1624
    %2122 = vmatpush2.bf16.msra.mxu0 %v1623
    %2123 = vmatprep.subr.bf16.mxu0 %v1620
    %2124 = vmatpush2.bf16.msra.mxu0 %v1619
    %2125 = vmatprep.subr.bf16.mxu0 %v1616
    %2126 = vmatpush2.bf16.msra.mxu0 %v1615
    %2127 = vmatprep.mubr.bf16.mxu0 %v688
    %2128 = vmatmul.mubr.bf16.gmra.mxu0 %v687
    %v2129 = vpop.f32.mrf.mxu0
    %v2130 = vadd.f32 %v478, %v2129
    %v2131 = vpop.f32.mrf.mxu0
    %v2132 = vadd.f32 %v482, %v2131
    %v2133 = vpop.f32.mrf.mxu0
    %v2134 = vadd.f32 %v478, %v2133
    %v2135 = vpop.f32.mrf.mxu0
    %v2136 = vadd.f32 %v482, %v2135
    %2137 = vmatprep.mubr.bf16.mxu0 %v696
    %2138 = vmatmul.mubr.bf16.gmra.mxu0 %v695
    %v2139 = vpop.f32.mrf.mxu0
    %v2140 = vadd.f32 %v478, %v2139
    %v2141 = vpop.f32.mrf.mxu0
    %v2142 = vadd.f32 %v482, %v2141
    %v2143 = vpop.f32.mrf.mxu0
    %v2144 = vadd.f32 %v478, %v2143
    %v2145 = vpop.f32.mrf.mxu0
    %v2146 = vadd.f32 %v482, %v2145
    %2147 = vmatprep.mubr.bf16.mxu0 %v704
    %2148 = vmatmul.mubr.bf16.gmra.mxu0 %v703
    %v2149 = vpop.f32.mrf.mxu0
    %v2150 = vadd.f32 %v478, %v2149
    %v2151 = vpop.f32.mrf.mxu0
    %v2152 = vadd.f32 %v482, %v2151
    %v2153 = vpop.f32.mrf.mxu0
    %v2154 = vadd.f32 %v478, %v2153
    %v2155 = vpop.f32.mrf.mxu0
    %v2156 = vadd.f32 %v482, %v2155
    %2157 = vmatprep.mubr.bf16.mxu0 %v712
    %2158 = vmatmul.mubr.bf16.gmra.mxu0 %v711
    %v2159 = vpop.f32.mrf.mxu0
    %v2160 = vadd.f32 %v478, %v2159
    %v2161 = vpop.f32.mrf.mxu0
    %v2162 = vadd.f32 %v482, %v2161
    %v2163 = vpop.f32.mrf.mxu0
    %v2164 = vadd.f32 %v478, %v2163
    %v2165 = vpop.f32.mrf.mxu0
    %v2166 = vadd.f32 %v482, %v2165
    %2167 = vmatprep.mubr.bf16.mxu0 %v720
    %2168 = vmatmul.mubr.bf16.gmra.mxu0 %v719
    %v2169 = vpop.f32.mrf.mxu0
    %v2170 = vadd.f32 %v478, %v2169
    %v2171 = vpop.f32.mrf.mxu0
    %v2172 = vadd.f32 %v482, %v2171
    %v2173 = vpop.f32.mrf.mxu0
    %v2174 = vadd.f32 %v478, %v2173
    %v2175 = vpop.f32.mrf.mxu0
    %v2176 = vadd.f32 %v482, %v2175
    %2177 = vmatprep.mubr.bf16.mxu0 %v728
    %2178 = vmatmul.mubr.bf16.gmra.mxu0 %v727
    %v2179 = vpop.f32.mrf.mxu0
    %v2180 = vadd.f32 %v478, %v2179
    %v2181 = vpop.f32.mrf.mxu0
    %v2182 = vadd.f32 %v482, %v2181
    %v2183 = vpop.f32.mrf.mxu0
    %v2184 = vadd.f32 %v478, %v2183
    %v2185 = vpop.f32.mrf.mxu0
    %v2186 = vadd.f32 %v482, %v2185
    %2187 = vmatprep.mubr.bf16.mxu0 %v736
    %2188 = vmatmul.mubr.bf16.gmra.mxu0 %v735
    %v2189 = vpop.f32.mrf.mxu0
    %v2190 = vadd.f32 %v478, %v2189
    %v2191 = vpop.f32.mrf.mxu0
    %v2192 = vadd.f32 %v482, %v2191
    %v2193 = vpop.f32.mrf.mxu0
    %v2194 = vadd.f32 %v478, %v2193
    %v2195 = vpop.f32.mrf.mxu0
    %v2196 = vadd.f32 %v482, %v2195
    %2197 = vmatprep.mubr.bf16.mxu0 %v744
    %2198 = vmatmul.mubr.bf16.gmra.mxu0 %v743
    %v2199 = vpop.f32.mrf.mxu0
    %v2200 = vadd.f32 %v478, %v2199
    %v2201 = vpop.f32.mrf.mxu0
    %v2202 = vadd.f32 %v482, %v2201
    %v2203 = vpop.f32.mrf.mxu0
    %v2204 = vadd.f32 %v478, %v2203
    %v2205 = vpop.f32.mrf.mxu0
    %v2206 = vadd.f32 %v482, %v2205
    %2207 = vdwg.mxu0
    %2208 = vmatprep.subr.bf16.mxu0 %v1676
    %2209 = vmatpush1.bf16.msra.mxu0 %v1675
    %2210 = vmatprep.subr.bf16.mxu0 %v1672
    %2211 = vmatpush1.bf16.msra.mxu0 %v1671
    %2212 = vmatprep.subr.bf16.mxu0 %v1668
    %2213 = vmatpush1.bf16.msra.mxu0 %v1667
    %2214 = vmatprep.subr.bf16.mxu0 %v1664
    %2215 = vmatpush1.bf16.msra.mxu0 %v1663
    %2216 = vmatprep.subr.bf16.mxu0 %v1660
    %2217 = vmatpush1.bf16.msra.mxu0 %v1659
    %2218 = vmatprep.subr.bf16.mxu0 %v1656
    %2219 = vmatpush1.bf16.msra.mxu0 %v1655
    %2220 = vmatprep.subr.bf16.mxu0 %v1652
    %2221 = vmatpush1.bf16.msra.mxu0 %v1651
    %2222 = vmatprep.subr.bf16.mxu0 %v1648
    %2223 = vmatpush1.bf16.msra.mxu0 %v1647
    %2224 = vmatprep.subr.bf16.mxu0 %v1708
    %2225 = vmatpush2.bf16.msra.mxu0 %v1707
    %2226 = vmatprep.subr.bf16.mxu0 %v1704
    %2227 = vmatpush2.bf16.msra.mxu0 %v1703
    %2228 = vmatprep.subr.bf16.mxu0 %v1700
    %2229 = vmatpush2.bf16.msra.mxu0 %v1699
    %2230 = vmatprep.subr.bf16.mxu0 %v1696
    %2231 = vmatpush2.bf16.msra.mxu0 %v1695
    %2232 = vmatprep.subr.bf16.mxu0 %v1692
    %2233 = vmatpush2.bf16.msra.mxu0 %v1691
    %2234 = vmatprep.subr.bf16.mxu0 %v1688
    %2235 = vmatpush2.bf16.msra.mxu0 %v1687
    %2236 = vmatprep.subr.bf16.mxu0 %v1684
    %2237 = vmatpush2.bf16.msra.mxu0 %v1683
    %2238 = vmatprep.subr.bf16.mxu0 %v1680
    %2239 = vmatpush2.bf16.msra.mxu0 %v1679
    %2240 = vmatprep.mubr.bf16.mxu0 %v690
    %2241 = vmatmul.mubr.bf16.gmra.mxu0 %v689
    %v2242 = vpop.f32.mrf.mxu0
    %v2243 = vadd.f32 %v2130, %v2242
    %v2244 = vpop.f32.mrf.mxu0
    %v2245 = vadd.f32 %v2132, %v2244
    %v2246 = vpop.f32.mrf.mxu0
    %v2247 = vadd.f32 %v2134, %v2246
    %v2248 = vpop.f32.mrf.mxu0
    %v2249 = vadd.f32 %v2136, %v2248
    %2250 = vmatprep.mubr.bf16.mxu0 %v698
    %2251 = vmatmul.mubr.bf16.gmra.mxu0 %v697
    %v2252 = vpop.f32.mrf.mxu0
    %v2253 = vadd.f32 %v2140, %v2252
    %v2254 = vpop.f32.mrf.mxu0
    %v2255 = vadd.f32 %v2142, %v2254
    %v2256 = vpop.f32.mrf.mxu0
    %v2257 = vadd.f32 %v2144, %v2256
    %v2258 = vpop.f32.mrf.mxu0
    %v2259 = vadd.f32 %v2146, %v2258
    %2260 = vmatprep.mubr.bf16.mxu0 %v706
    %2261 = vmatmul.mubr.bf16.gmra.mxu0 %v705
    %v2262 = vpop.f32.mrf.mxu0
    %v2263 = vadd.f32 %v2150, %v2262
    %v2264 = vpop.f32.mrf.mxu0
    %v2265 = vadd.f32 %v2152, %v2264
    %v2266 = vpop.f32.mrf.mxu0
    %v2267 = vadd.f32 %v2154, %v2266
    %v2268 = vpop.f32.mrf.mxu0
    %v2269 = vadd.f32 %v2156, %v2268
    %2270 = vmatprep.mubr.bf16.mxu0 %v714
    %2271 = vmatmul.mubr.bf16.gmra.mxu0 %v713
    %v2272 = vpop.f32.mrf.mxu0
    %v2273 = vadd.f32 %v2160, %v2272
    %v2274 = vpop.f32.mrf.mxu0
    %v2275 = vadd.f32 %v2162, %v2274
    %v2276 = vpop.f32.mrf.mxu0
    %v2277 = vadd.f32 %v2164, %v2276
    %v2278 = vpop.f32.mrf.mxu0
    %v2279 = vadd.f32 %v2166, %v2278
    %2280 = vmatprep.mubr.bf16.mxu0 %v722
    %2281 = vmatmul.mubr.bf16.gmra.mxu0 %v721
    %v2282 = vpop.f32.mrf.mxu0
    %v2283 = vadd.f32 %v2170, %v2282
    %v2284 = vpop.f32.mrf.mxu0
    %v2285 = vadd.f32 %v2172, %v2284
    %v2286 = vpop.f32.mrf.mxu0
    %v2287 = vadd.f32 %v2174, %v2286
    %v2288 = vpop.f32.mrf.mxu0
    %v2289 = vadd.f32 %v2176, %v2288
    %2290 = vmatprep.mubr.bf16.mxu0 %v730
    %2291 = vmatmul.mubr.bf16.gmra.mxu0 %v729
    %v2292 = vpop.f32.mrf.mxu0
    %v2293 = vadd.f32 %v2180, %v2292
    %v2294 = vpop.f32.mrf.mxu0
    %v2295 = vadd.f32 %v2182, %v2294
    %v2296 = vpop.f32.mrf.mxu0
    %v2297 = vadd.f32 %v2184, %v2296
    %v2298 = vpop.f32.mrf.mxu0
    %v2299 = vadd.f32 %v2186, %v2298
    %2300 = vmatprep.mubr.bf16.mxu0 %v738
    %2301 = vmatmul.mubr.bf16.gmra.mxu0 %v737
    %v2302 = vpop.f32.mrf.mxu0
    %v2303 = vadd.f32 %v2190, %v2302
    %v2304 = vpop.f32.mrf.mxu0
    %v2305 = vadd.f32 %v2192, %v2304
    %v2306 = vpop.f32.mrf.mxu0
    %v2307 = vadd.f32 %v2194, %v2306
    %v2308 = vpop.f32.mrf.mxu0
    %v2309 = vadd.f32 %v2196, %v2308
    %2310 = vmatprep.mubr.bf16.mxu0 %v746
    %2311 = vmatmul.mubr.bf16.gmra.mxu0 %v745
    %v2312 = vpop.f32.mrf.mxu0
    %v2313 = vadd.f32 %v2200, %v2312
    %v2314 = vpop.f32.mrf.mxu0
    %v2315 = vadd.f32 %v2202, %v2314
    %v2316 = vpop.f32.mrf.mxu0
    %v2317 = vadd.f32 %v2204, %v2316
    %v2318 = vpop.f32.mrf.mxu0
    %v2319 = vadd.f32 %v2206, %v2318
    %2320 = vdwg.mxu0
    %2321 = vmatprep.subr.bf16.mxu0 %v1740
    %2322 = vmatpush1.bf16.msra.mxu0 %v1739
    %2323 = vmatprep.subr.bf16.mxu0 %v1736
    %2324 = vmatpush1.bf16.msra.mxu0 %v1735
    %2325 = vmatprep.subr.bf16.mxu0 %v1732
    %2326 = vmatpush1.bf16.msra.mxu0 %v1731
    %2327 = vmatprep.subr.bf16.mxu0 %v1728
    %2328 = vmatpush1.bf16.msra.mxu0 %v1727
    %2329 = vmatprep.subr.bf16.mxu0 %v1724
    %2330 = vmatpush1.bf16.msra.mxu0 %v1723
    %2331 = vmatprep.subr.bf16.mxu0 %v1720
    %2332 = vmatpush1.bf16.msra.mxu0 %v1719
    %2333 = vmatprep.subr.bf16.mxu0 %v1716
    %2334 = vmatpush1.bf16.msra.mxu0 %v1715
    %2335 = vmatprep.subr.bf16.mxu0 %v1712
    %2336 = vmatpush1.bf16.msra.mxu0 %v1711
    %2337 = vmatprep.subr.bf16.mxu0 %v1772
    %2338 = vmatpush2.bf16.msra.mxu0 %v1771
    %2339 = vmatprep.subr.bf16.mxu0 %v1768
    %2340 = vmatpush2.bf16.msra.mxu0 %v1767
    %2341 = vmatprep.subr.bf16.mxu0 %v1764
    %2342 = vmatpush2.bf16.msra.mxu0 %v1763
    %2343 = vmatprep.subr.bf16.mxu0 %v1760
    %2344 = vmatpush2.bf16.msra.mxu0 %v1759
    %2345 = vmatprep.subr.bf16.mxu0 %v1756
    %2346 = vmatpush2.bf16.msra.mxu0 %v1755
    %2347 = vmatprep.subr.bf16.mxu0 %v1752
    %2348 = vmatpush2.bf16.msra.mxu0 %v1751
    %2349 = vmatprep.subr.bf16.mxu0 %v1748
    %2350 = vmatpush2.bf16.msra.mxu0 %v1747
    %2351 = vmatprep.subr.bf16.mxu0 %v1744
    %2352 = vmatpush2.bf16.msra.mxu0 %v1743
    %2353 = vmatprep.mubr.bf16.mxu0 %v692
    %2354 = vmatmul.mubr.bf16.gmra.mxu0 %v691
    %v2355 = vpop.f32.mrf.mxu0
    %v2356 = vadd.f32 %v2243, %v2355
    %v2357 = vpop.f32.mrf.mxu0
    %v2358 = vadd.f32 %v2245, %v2357
    %v2359 = vpop.f32.mrf.mxu0
    %v2360 = vadd.f32 %v2247, %v2359
    %v2361 = vpop.f32.mrf.mxu0
    %v2362 = vadd.f32 %v2249, %v2361
    %2363 = vmatprep.mubr.bf16.mxu0 %v700
    %2364 = vmatmul.mubr.bf16.gmra.mxu0 %v699
    %v2365 = vpop.f32.mrf.mxu0
    %v2366 = vadd.f32 %v2253, %v2365
    %v2367 = vpop.f32.mrf.mxu0
    %v2368 = vadd.f32 %v2255, %v2367
    %v2369 = vpop.f32.mrf.mxu0
    %v2370 = vadd.f32 %v2257, %v2369
    %v2371 = vpop.f32.mrf.mxu0
    %v2372 = vadd.f32 %v2259, %v2371
    %2373 = vmatprep.mubr.bf16.mxu0 %v708
    %2374 = vmatmul.mubr.bf16.gmra.mxu0 %v707
    %v2375 = vpop.f32.mrf.mxu0
    %v2376 = vadd.f32 %v2263, %v2375
    %v2377 = vpop.f32.mrf.mxu0
    %v2378 = vadd.f32 %v2265, %v2377
    %v2379 = vpop.f32.mrf.mxu0
    %v2380 = vadd.f32 %v2267, %v2379
    %v2381 = vpop.f32.mrf.mxu0
    %v2382 = vadd.f32 %v2269, %v2381
    %2383 = vmatprep.mubr.bf16.mxu0 %v716
    %2384 = vmatmul.mubr.bf16.gmra.mxu0 %v715
    %v2385 = vpop.f32.mrf.mxu0
    %v2386 = vadd.f32 %v2273, %v2385
    %v2387 = vpop.f32.mrf.mxu0
    %v2388 = vadd.f32 %v2275, %v2387
    %v2389 = vpop.f32.mrf.mxu0
    %v2390 = vadd.f32 %v2277, %v2389
    %v2391 = vpop.f32.mrf.mxu0
    %v2392 = vadd.f32 %v2279, %v2391
    %2393 = vmatprep.mubr.bf16.mxu0 %v724
    %2394 = vmatmul.mubr.bf16.gmra.mxu0 %v723
    %v2395 = vpop.f32.mrf.mxu0
    %v2396 = vadd.f32 %v2283, %v2395
    %v2397 = vpop.f32.mrf.mxu0
    %v2398 = vadd.f32 %v2285, %v2397
    %v2399 = vpop.f32.mrf.mxu0
    %v2400 = vadd.f32 %v2287, %v2399
    %v2401 = vpop.f32.mrf.mxu0
    %v2402 = vadd.f32 %v2289, %v2401
    %2403 = vmatprep.mubr.bf16.mxu0 %v732
    %2404 = vmatmul.mubr.bf16.gmra.mxu0 %v731
    %v2405 = vpop.f32.mrf.mxu0
    %v2406 = vadd.f32 %v2293, %v2405
    %v2407 = vpop.f32.mrf.mxu0
    %v2408 = vadd.f32 %v2295, %v2407
    %v2409 = vpop.f32.mrf.mxu0
    %v2410 = vadd.f32 %v2297, %v2409
    %v2411 = vpop.f32.mrf.mxu0
    %v2412 = vadd.f32 %v2299, %v2411
    %2413 = vmatprep.mubr.bf16.mxu0 %v740
    %2414 = vmatmul.mubr.bf16.gmra.mxu0 %v739
    %v2415 = vpop.f32.mrf.mxu0
    %v2416 = vadd.f32 %v2303, %v2415
    %v2417 = vpop.f32.mrf.mxu0
    %v2418 = vadd.f32 %v2305, %v2417
    %v2419 = vpop.f32.mrf.mxu0
    %v2420 = vadd.f32 %v2307, %v2419
    %v2421 = vpop.f32.mrf.mxu0
    %v2422 = vadd.f32 %v2309, %v2421
    %2423 = vmatprep.mubr.bf16.mxu0 %v748
    %2424 = vmatmul.mubr.bf16.gmra.mxu0 %v747
    %v2425 = vpop.f32.mrf.mxu0
    %v2426 = vadd.f32 %v2313, %v2425
    %v2427 = vpop.f32.mrf.mxu0
    %v2428 = vadd.f32 %v2315, %v2427
    %v2429 = vpop.f32.mrf.mxu0
    %v2430 = vadd.f32 %v2317, %v2429
    %v2431 = vpop.f32.mrf.mxu0
    %v2432 = vadd.f32 %v2319, %v2431
    %2433 = vdwg.mxu0
    %2434 = vmatprep.subr.bf16.mxu0 %v1804
    %2435 = vmatpush1.bf16.msra.mxu0 %v1803
    %2436 = vmatprep.subr.bf16.mxu0 %v1800
    %2437 = vmatpush1.bf16.msra.mxu0 %v1799
    %2438 = vmatprep.subr.bf16.mxu0 %v1796
    %2439 = vmatpush1.bf16.msra.mxu0 %v1795
    %2440 = vmatprep.subr.bf16.mxu0 %v1792
    %2441 = vmatpush1.bf16.msra.mxu0 %v1791
    %2442 = vmatprep.subr.bf16.mxu0 %v1788
    %2443 = vmatpush1.bf16.msra.mxu0 %v1787
    %2444 = vmatprep.subr.bf16.mxu0 %v1784
    %2445 = vmatpush1.bf16.msra.mxu0 %v1783
    %2446 = vmatprep.subr.bf16.mxu0 %v1780
    %2447 = vmatpush1.bf16.msra.mxu0 %v1779
    %2448 = vmatprep.subr.bf16.mxu0 %v1776
    %2449 = vmatpush1.bf16.msra.mxu0 %v1775
    %2450 = vmatprep.subr.bf16.mxu0 %v1836
    %2451 = vmatpush2.bf16.msra.mxu0 %v1835
    %2452 = vmatprep.subr.bf16.mxu0 %v1832
    %2453 = vmatpush2.bf16.msra.mxu0 %v1831
    %2454 = vmatprep.subr.bf16.mxu0 %v1828
    %2455 = vmatpush2.bf16.msra.mxu0 %v1827
    %2456 = vmatprep.subr.bf16.mxu0 %v1824
    %2457 = vmatpush2.bf16.msra.mxu0 %v1823
    %2458 = vmatprep.subr.bf16.mxu0 %v1820
    %2459 = vmatpush2.bf16.msra.mxu0 %v1819
    %2460 = vmatprep.subr.bf16.mxu0 %v1816
    %2461 = vmatpush2.bf16.msra.mxu0 %v1815
    %2462 = vmatprep.subr.bf16.mxu0 %v1812
    %2463 = vmatpush2.bf16.msra.mxu0 %v1811
    %2464 = vmatprep.subr.bf16.mxu0 %v1808
    %2465 = vmatpush2.bf16.msra.mxu0 %v1807
    %2466 = vmatprep.mubr.bf16.mxu0 %v694
    %2467 = vmatmul.mubr.bf16.gmra.mxu0 %v693
    %v2468 = vpop.f32.mrf.mxu0
    %v2469 = vadd.f32 %v2356, %v2468
    %v2470 = vpop.f32.mrf.mxu0
    %v2471 = vadd.f32 %v2358, %v2470
    %v2472 = vpop.f32.mrf.mxu0
    %v2473 = vadd.f32 %v2360, %v2472
    %v2474 = vpop.f32.mrf.mxu0
    %v2475 = vadd.f32 %v2362, %v2474
    %2476 = vmatprep.mubr.bf16.mxu0 %v702
    %2477 = vmatmul.mubr.bf16.gmra.mxu0 %v701
    %v2478 = vpop.f32.mrf.mxu0
    %v2479 = vadd.f32 %v2366, %v2478
    %v2480 = vpop.f32.mrf.mxu0
    %v2481 = vadd.f32 %v2368, %v2480
    %v2482 = vpop.f32.mrf.mxu0
    %v2483 = vadd.f32 %v2370, %v2482
    %v2484 = vpop.f32.mrf.mxu0
    %v2485 = vadd.f32 %v2372, %v2484
    %2486 = vmatprep.mubr.bf16.mxu0 %v710
    %2487 = vmatmul.mubr.bf16.gmra.mxu0 %v709
    %v2488 = vpop.f32.mrf.mxu0
    %v2489 = vadd.f32 %v2376, %v2488
    %v2490 = vpop.f32.mrf.mxu0
    %v2491 = vadd.f32 %v2378, %v2490
    %v2492 = vpop.f32.mrf.mxu0
    %v2493 = vadd.f32 %v2380, %v2492
    %v2494 = vpop.f32.mrf.mxu0
    %v2495 = vadd.f32 %v2382, %v2494
    %2496 = vmatprep.mubr.bf16.mxu0 %v718
    %2497 = vmatmul.mubr.bf16.gmra.mxu0 %v717
    %v2498 = vpop.f32.mrf.mxu0
    %v2499 = vadd.f32 %v2386, %v2498
    %v2500 = vpop.f32.mrf.mxu0
    %v2501 = vadd.f32 %v2388, %v2500
    %v2502 = vpop.f32.mrf.mxu0
    %v2503 = vadd.f32 %v2390, %v2502
    %v2504 = vpop.f32.mrf.mxu0
    %v2505 = vadd.f32 %v2392, %v2504
    %2506 = vmatprep.mubr.bf16.mxu0 %v726
    %2507 = vmatmul.mubr.bf16.gmra.mxu0 %v725
    %v2508 = vpop.f32.mrf.mxu0
    %v2509 = vadd.f32 %v2396, %v2508
    %v2510 = vpop.f32.mrf.mxu0
    %v2511 = vadd.f32 %v2398, %v2510
    %v2512 = vpop.f32.mrf.mxu0
    %v2513 = vadd.f32 %v2400, %v2512
    %v2514 = vpop.f32.mrf.mxu0
    %v2515 = vadd.f32 %v2402, %v2514
    %2516 = vmatprep.mubr.bf16.mxu0 %v734
    %2517 = vmatmul.mubr.bf16.gmra.mxu0 %v733
    %v2518 = vpop.f32.mrf.mxu0
    %v2519 = vadd.f32 %v2406, %v2518
    %v2520 = vpop.f32.mrf.mxu0
    %v2521 = vadd.f32 %v2408, %v2520
    %v2522 = vpop.f32.mrf.mxu0
    %v2523 = vadd.f32 %v2410, %v2522
    %v2524 = vpop.f32.mrf.mxu0
    %v2525 = vadd.f32 %v2412, %v2524
    %2526 = vmatprep.mubr.bf16.mxu0 %v742
    %2527 = vmatmul.mubr.bf16.gmra.mxu0 %v741
    %v2528 = vpop.f32.mrf.mxu0
    %v2529 = vadd.f32 %v2416, %v2528
    %v2530 = vpop.f32.mrf.mxu0
    %v2531 = vadd.f32 %v2418, %v2530
    %v2532 = vpop.f32.mrf.mxu0
    %v2533 = vadd.f32 %v2420, %v2532
    %v2534 = vpop.f32.mrf.mxu0
    %v2535 = vadd.f32 %v2422, %v2534
    %2536 = vmatprep.mubr.bf16.mxu0 %v750
    %2537 = vmatmul.mubr.bf16.gmra.mxu0 %v749
    %v2538 = vpop.f32.mrf.mxu0
    %v2539 = vadd.f32 %v2426, %v2538
    %v2540 = vpop.f32.mrf.mxu0
    %v2541 = vadd.f32 %v2428, %v2540
    %v2542 = vpop.f32.mrf.mxu0
    %v2543 = vadd.f32 %v2430, %v2542
    %v2544 = vpop.f32.mrf.mxu0
    %v2545 = vadd.f32 %v2432, %v2544
    %2546 = vdwg.mxu0
    %2547 = vmatprep.subr.bf16.mxu0 %v1614
    %2548 = vmatpush1.bf16.msra.mxu0 %v1613
    %2549 = vmatprep.subr.bf16.mxu0 %v1610
    %2550 = vmatpush1.bf16.msra.mxu0 %v1609
    %2551 = vmatprep.subr.bf16.mxu0 %v1606
    %2552 = vmatpush1.bf16.msra.mxu0 %v1605
    %2553 = vmatprep.subr.bf16.mxu0 %v1602
    %2554 = vmatpush1.bf16.msra.mxu0 %v1601
    %2555 = vmatprep.subr.bf16.mxu0 %v1598
    %2556 = vmatpush1.bf16.msra.mxu0 %v1597
    %2557 = vmatprep.subr.bf16.mxu0 %v1594
    %2558 = vmatpush1.bf16.msra.mxu0 %v1593
    %2559 = vmatprep.subr.bf16.mxu0 %v1590
    %2560 = vmatpush1.bf16.msra.mxu0 %v1589
    %2561 = vmatprep.subr.bf16.mxu0 %v1586
    %2562 = vmatpush1.bf16.msra.mxu0 %v1585
    %2563 = vmatprep.subr.bf16.mxu0 %v1646
    %2564 = vmatpush2.bf16.msra.mxu0 %v1645
    %2565 = vmatprep.subr.bf16.mxu0 %v1642
    %2566 = vmatpush2.bf16.msra.mxu0 %v1641
    %2567 = vmatprep.subr.bf16.mxu0 %v1638
    %2568 = vmatpush2.bf16.msra.mxu0 %v1637
    %2569 = vmatprep.subr.bf16.mxu0 %v1634
    %2570 = vmatpush2.bf16.msra.mxu0 %v1633
    %2571 = vmatprep.subr.bf16.mxu0 %v1630
    %2572 = vmatpush2.bf16.msra.mxu0 %v1629
    %2573 = vmatprep.subr.bf16.mxu0 %v1626
    %2574 = vmatpush2.bf16.msra.mxu0 %v1625
    %2575 = vmatprep.subr.bf16.mxu0 %v1622
    %2576 = vmatpush2.bf16.msra.mxu0 %v1621
    %2577 = vmatprep.subr.bf16.mxu0 %v1618
    %2578 = vmatpush2.bf16.msra.mxu0 %v1617
    %2579 = vmatprep.mubr.bf16.mxu0 %v688
    %2580 = vmatmul.mubr.bf16.gmra.mxu0 %v687
    %v2581 = vpop.f32.mrf.mxu0
    %v2582 = vadd.f32 %v486, %v2581
    %v2583 = vpop.f32.mrf.mxu0
    %v2584 = vadd.f32 %v490, %v2583
    %v2585 = vpop.f32.mrf.mxu0
    %v2586 = vadd.f32 %v486, %v2585
    %v2587 = vpop.f32.mrf.mxu0
    %v2588 = vadd.f32 %v490, %v2587
    %2589 = vmatprep.mubr.bf16.mxu0 %v696
    %2590 = vmatmul.mubr.bf16.gmra.mxu0 %v695
    %v2591 = vpop.f32.mrf.mxu0
    %v2592 = vadd.f32 %v486, %v2591
    %v2593 = vpop.f32.mrf.mxu0
    %v2594 = vadd.f32 %v490, %v2593
    %v2595 = vpop.f32.mrf.mxu0
    %v2596 = vadd.f32 %v486, %v2595
    %v2597 = vpop.f32.mrf.mxu0
    %v2598 = vadd.f32 %v490, %v2597
    %2599 = vmatprep.mubr.bf16.mxu0 %v704
    %2600 = vmatmul.mubr.bf16.gmra.mxu0 %v703
    %v2601 = vpop.f32.mrf.mxu0
    %v2602 = vadd.f32 %v486, %v2601
    %v2603 = vpop.f32.mrf.mxu0
    %v2604 = vadd.f32 %v490, %v2603
    %v2605 = vpop.f32.mrf.mxu0
    %v2606 = vadd.f32 %v486, %v2605
    %v2607 = vpop.f32.mrf.mxu0
    %v2608 = vadd.f32 %v490, %v2607
    %2609 = vmatprep.mubr.bf16.mxu0 %v712
    %2610 = vmatmul.mubr.bf16.gmra.mxu0 %v711
    %v2611 = vpop.f32.mrf.mxu0
    %v2612 = vadd.f32 %v486, %v2611
    %v2613 = vpop.f32.mrf.mxu0
    %v2614 = vadd.f32 %v490, %v2613
    %v2615 = vpop.f32.mrf.mxu0
    %v2616 = vadd.f32 %v486, %v2615
    %v2617 = vpop.f32.mrf.mxu0
    %v2618 = vadd.f32 %v490, %v2617
    %2619 = vmatprep.mubr.bf16.mxu0 %v720
    %2620 = vmatmul.mubr.bf16.gmra.mxu0 %v719
    %v2621 = vpop.f32.mrf.mxu0
    %v2622 = vadd.f32 %v486, %v2621
    %v2623 = vpop.f32.mrf.mxu0
    %v2624 = vadd.f32 %v490, %v2623
    %v2625 = vpop.f32.mrf.mxu0
    %v2626 = vadd.f32 %v486, %v2625
    %v2627 = vpop.f32.mrf.mxu0
    %v2628 = vadd.f32 %v490, %v2627
    %2629 = vmatprep.mubr.bf16.mxu0 %v728
    %2630 = vmatmul.mubr.bf16.gmra.mxu0 %v727
    %v2631 = vpop.f32.mrf.mxu0
    %v2632 = vadd.f32 %v486, %v2631
    %v2633 = vpop.f32.mrf.mxu0
    %v2634 = vadd.f32 %v490, %v2633
    %v2635 = vpop.f32.mrf.mxu0
    %v2636 = vadd.f32 %v486, %v2635
    %v2637 = vpop.f32.mrf.mxu0
    %v2638 = vadd.f32 %v490, %v2637
    %2639 = vmatprep.mubr.bf16.mxu0 %v736
    %2640 = vmatmul.mubr.bf16.gmra.mxu0 %v735
    %v2641 = vpop.f32.mrf.mxu0
    %v2642 = vadd.f32 %v486, %v2641
    %v2643 = vpop.f32.mrf.mxu0
    %v2644 = vadd.f32 %v490, %v2643
    %v2645 = vpop.f32.mrf.mxu0
    %v2646 = vadd.f32 %v486, %v2645
    %v2647 = vpop.f32.mrf.mxu0
    %v2648 = vadd.f32 %v490, %v2647
    %2649 = vmatprep.mubr.bf16.mxu0 %v744
    %2650 = vmatmul.mubr.bf16.gmra.mxu0 %v743
    %v2651 = vpop.f32.mrf.mxu0
    %v2652 = vadd.f32 %v486, %v2651
    %v2653 = vpop.f32.mrf.mxu0
    %v2654 = vadd.f32 %v490, %v2653
    %v2655 = vpop.f32.mrf.mxu0
    %v2656 = vadd.f32 %v486, %v2655
    %v2657 = vpop.f32.mrf.mxu0
    %v2658 = vadd.f32 %v490, %v2657
    %2659 = vdwg.mxu0
    %2660 = vmatprep.subr.bf16.mxu0 %v1678
    %2661 = vmatpush1.bf16.msra.mxu0 %v1677
    %2662 = vmatprep.subr.bf16.mxu0 %v1674
    %2663 = vmatpush1.bf16.msra.mxu0 %v1673
    %2664 = vmatprep.subr.bf16.mxu0 %v1670
    %2665 = vmatpush1.bf16.msra.mxu0 %v1669
    %2666 = vmatprep.subr.bf16.mxu0 %v1666
    %2667 = vmatpush1.bf16.msra.mxu0 %v1665
    %2668 = vmatprep.subr.bf16.mxu0 %v1662
    %2669 = vmatpush1.bf16.msra.mxu0 %v1661
    %2670 = vmatprep.subr.bf16.mxu0 %v1658
    %2671 = vmatpush1.bf16.msra.mxu0 %v1657
    %2672 = vmatprep.subr.bf16.mxu0 %v1654
    %2673 = vmatpush1.bf16.msra.mxu0 %v1653
    %2674 = vmatprep.subr.bf16.mxu0 %v1650
    %2675 = vmatpush1.bf16.msra.mxu0 %v1649
    %2676 = vmatprep.subr.bf16.mxu0 %v1710
    %2677 = vmatpush2.bf16.msra.mxu0 %v1709
    %2678 = vmatprep.subr.bf16.mxu0 %v1706
    %2679 = vmatpush2.bf16.msra.mxu0 %v1705
    %2680 = vmatprep.subr.bf16.mxu0 %v1702
    %2681 = vmatpush2.bf16.msra.mxu0 %v1701
    %2682 = vmatprep.subr.bf16.mxu0 %v1698
    %2683 = vmatpush2.bf16.msra.mxu0 %v1697
    %2684 = vmatprep.subr.bf16.mxu0 %v1694
    %2685 = vmatpush2.bf16.msra.mxu0 %v1693
    %2686 = vmatprep.subr.bf16.mxu0 %v1690
    %2687 = vmatpush2.bf16.msra.mxu0 %v1689
    %2688 = vmatprep.subr.bf16.mxu0 %v1686
    %2689 = vmatpush2.bf16.msra.mxu0 %v1685
    %2690 = vmatprep.subr.bf16.mxu0 %v1682
    %2691 = vmatpush2.bf16.msra.mxu0 %v1681
    %2692 = vmatprep.mubr.bf16.mxu0 %v690
    %2693 = vmatmul.mubr.bf16.gmra.mxu0 %v689
    %v2694 = vpop.f32.mrf.mxu0
    %v2695 = vadd.f32 %v2582, %v2694
    %v2696 = vpop.f32.mrf.mxu0
    %v2697 = vadd.f32 %v2584, %v2696
    %v2698 = vpop.f32.mrf.mxu0
    %v2699 = vadd.f32 %v2586, %v2698
    %v2700 = vpop.f32.mrf.mxu0
    %v2701 = vadd.f32 %v2588, %v2700
    %2702 = vmatprep.mubr.bf16.mxu0 %v698
    %2703 = vmatmul.mubr.bf16.gmra.mxu0 %v697
    %v2704 = vpop.f32.mrf.mxu0
    %v2705 = vadd.f32 %v2592, %v2704
    %v2706 = vpop.f32.mrf.mxu0
    %v2707 = vadd.f32 %v2594, %v2706
    %v2708 = vpop.f32.mrf.mxu0
    %v2709 = vadd.f32 %v2596, %v2708
    %v2710 = vpop.f32.mrf.mxu0
    %v2711 = vadd.f32 %v2598, %v2710
    %2712 = vmatprep.mubr.bf16.mxu0 %v706
    %2713 = vmatmul.mubr.bf16.gmra.mxu0 %v705
    %v2714 = vpop.f32.mrf.mxu0
    %v2715 = vadd.f32 %v2602, %v2714
    %v2716 = vpop.f32.mrf.mxu0
    %v2717 = vadd.f32 %v2604, %v2716
    %v2718 = vpop.f32.mrf.mxu0
    %v2719 = vadd.f32 %v2606, %v2718
    %v2720 = vpop.f32.mrf.mxu0
    %v2721 = vadd.f32 %v2608, %v2720
    %2722 = vmatprep.mubr.bf16.mxu0 %v714
    %2723 = vmatmul.mubr.bf16.gmra.mxu0 %v713
    %v2724 = vpop.f32.mrf.mxu0
    %v2725 = vadd.f32 %v2612, %v2724
    %v2726 = vpop.f32.mrf.mxu0
    %v2727 = vadd.f32 %v2614, %v2726
    %v2728 = vpop.f32.mrf.mxu0
    %v2729 = vadd.f32 %v2616, %v2728
    %v2730 = vpop.f32.mrf.mxu0
    %v2731 = vadd.f32 %v2618, %v2730
    %2732 = vmatprep.mubr.bf16.mxu0 %v722
    %2733 = vmatmul.mubr.bf16.gmra.mxu0 %v721
    %v2734 = vpop.f32.mrf.mxu0
    %v2735 = vadd.f32 %v2622, %v2734
    %v2736 = vpop.f32.mrf.mxu0
    %v2737 = vadd.f32 %v2624, %v2736
    %v2738 = vpop.f32.mrf.mxu0
    %v2739 = vadd.f32 %v2626, %v2738
    %v2740 = vpop.f32.mrf.mxu0
    %v2741 = vadd.f32 %v2628, %v2740
    %2742 = vmatprep.mubr.bf16.mxu0 %v730
    %2743 = vmatmul.mubr.bf16.gmra.mxu0 %v729
    %v2744 = vpop.f32.mrf.mxu0
    %v2745 = vadd.f32 %v2632, %v2744
    %v2746 = vpop.f32.mrf.mxu0
    %v2747 = vadd.f32 %v2634, %v2746
    %v2748 = vpop.f32.mrf.mxu0
    %v2749 = vadd.f32 %v2636, %v2748
    %v2750 = vpop.f32.mrf.mxu0
    %v2751 = vadd.f32 %v2638, %v2750
    %2752 = vmatprep.mubr.bf16.mxu0 %v738
    %2753 = vmatmul.mubr.bf16.gmra.mxu0 %v737
    %v2754 = vpop.f32.mrf.mxu0
    %v2755 = vadd.f32 %v2642, %v2754
    %v2756 = vpop.f32.mrf.mxu0
    %v2757 = vadd.f32 %v2644, %v2756
    %v2758 = vpop.f32.mrf.mxu0
    %v2759 = vadd.f32 %v2646, %v2758
    %v2760 = vpop.f32.mrf.mxu0
    %v2761 = vadd.f32 %v2648, %v2760
    %2762 = vmatprep.mubr.bf16.mxu0 %v746
    %2763 = vmatmul.mubr.bf16.gmra.mxu0 %v745
    %v2764 = vpop.f32.mrf.mxu0
    %v2765 = vadd.f32 %v2652, %v2764
    %v2766 = vpop.f32.mrf.mxu0
    %v2767 = vadd.f32 %v2654, %v2766
    %v2768 = vpop.f32.mrf.mxu0
    %v2769 = vadd.f32 %v2656, %v2768
    %v2770 = vpop.f32.mrf.mxu0
    %v2771 = vadd.f32 %v2658, %v2770
    %2772 = vdwg.mxu0
    %2773 = vmatprep.subr.bf16.mxu0 %v1742
    %2774 = vmatpush1.bf16.msra.mxu0 %v1741
    %2775 = vmatprep.subr.bf16.mxu0 %v1738
    %2776 = vmatpush1.bf16.msra.mxu0 %v1737
    %2777 = vmatprep.subr.bf16.mxu0 %v1734
    %2778 = vmatpush1.bf16.msra.mxu0 %v1733
    %2779 = vmatprep.subr.bf16.mxu0 %v1730
    %2780 = vmatpush1.bf16.msra.mxu0 %v1729
    %2781 = vmatprep.subr.bf16.mxu0 %v1726
    %2782 = vmatpush1.bf16.msra.mxu0 %v1725
    %2783 = vmatprep.subr.bf16.mxu0 %v1722
    %2784 = vmatpush1.bf16.msra.mxu0 %v1721
    %2785 = vmatprep.subr.bf16.mxu0 %v1718
    %2786 = vmatpush1.bf16.msra.mxu0 %v1717
    %2787 = vmatprep.subr.bf16.mxu0 %v1714
    %2788 = vmatpush1.bf16.msra.mxu0 %v1713
    %2789 = vmatprep.subr.bf16.mxu0 %v1774
    %2790 = vmatpush2.bf16.msra.mxu0 %v1773
    %2791 = vmatprep.subr.bf16.mxu0 %v1770
    %2792 = vmatpush2.bf16.msra.mxu0 %v1769
    %2793 = vmatprep.subr.bf16.mxu0 %v1766
    %2794 = vmatpush2.bf16.msra.mxu0 %v1765
    %2795 = vmatprep.subr.bf16.mxu0 %v1762
    %2796 = vmatpush2.bf16.msra.mxu0 %v1761
    %2797 = vmatprep.subr.bf16.mxu0 %v1758
    %2798 = vmatpush2.bf16.msra.mxu0 %v1757
    %2799 = vmatprep.subr.bf16.mxu0 %v1754
    %2800 = vmatpush2.bf16.msra.mxu0 %v1753
    %2801 = vmatprep.subr.bf16.mxu0 %v1750
    %2802 = vmatpush2.bf16.msra.mxu0 %v1749
    %2803 = vmatprep.subr.bf16.mxu0 %v1746
    %2804 = vmatpush2.bf16.msra.mxu0 %v1745
    %2805 = vmatprep.mubr.bf16.mxu0 %v692
    %2806 = vmatmul.mubr.bf16.gmra.mxu0 %v691
    %v2807 = vpop.f32.mrf.mxu0
    %v2808 = vadd.f32 %v2695, %v2807
    %v2809 = vpop.f32.mrf.mxu0
    %v2810 = vadd.f32 %v2697, %v2809
    %v2811 = vpop.f32.mrf.mxu0
    %v2812 = vadd.f32 %v2699, %v2811
    %v2813 = vpop.f32.mrf.mxu0
    %v2814 = vadd.f32 %v2701, %v2813
    %2815 = vmatprep.mubr.bf16.mxu0 %v700
    %2816 = vmatmul.mubr.bf16.gmra.mxu0 %v699
    %v2817 = vpop.f32.mrf.mxu0
    %v2818 = vadd.f32 %v2705, %v2817
    %v2819 = vpop.f32.mrf.mxu0
    %v2820 = vadd.f32 %v2707, %v2819
    %v2821 = vpop.f32.mrf.mxu0
    %v2822 = vadd.f32 %v2709, %v2821
    %v2823 = vpop.f32.mrf.mxu0
    %v2824 = vadd.f32 %v2711, %v2823
    %2825 = vmatprep.mubr.bf16.mxu0 %v708
    %2826 = vmatmul.mubr.bf16.gmra.mxu0 %v707
    %v2827 = vpop.f32.mrf.mxu0
    %v2828 = vadd.f32 %v2715, %v2827
    %v2829 = vpop.f32.mrf.mxu0
    %v2830 = vadd.f32 %v2717, %v2829
    %v2831 = vpop.f32.mrf.mxu0
    %v2832 = vadd.f32 %v2719, %v2831
    %v2833 = vpop.f32.mrf.mxu0
    %v2834 = vadd.f32 %v2721, %v2833
    %2835 = vmatprep.mubr.bf16.mxu0 %v716
    %2836 = vmatmul.mubr.bf16.gmra.mxu0 %v715
    %v2837 = vpop.f32.mrf.mxu0
    %v2838 = vadd.f32 %v2725, %v2837
    %v2839 = vpop.f32.mrf.mxu0
    %v2840 = vadd.f32 %v2727, %v2839
    %v2841 = vpop.f32.mrf.mxu0
    %v2842 = vadd.f32 %v2729, %v2841
    %v2843 = vpop.f32.mrf.mxu0
    %v2844 = vadd.f32 %v2731, %v2843
    %2845 = vmatprep.mubr.bf16.mxu0 %v724
    %2846 = vmatmul.mubr.bf16.gmra.mxu0 %v723
    %v2847 = vpop.f32.mrf.mxu0
    %v2848 = vadd.f32 %v2735, %v2847
    %v2849 = vpop.f32.mrf.mxu0
    %v2850 = vadd.f32 %v2737, %v2849
    %v2851 = vpop.f32.mrf.mxu0
    %v2852 = vadd.f32 %v2739, %v2851
    %v2853 = vpop.f32.mrf.mxu0
    %v2854 = vadd.f32 %v2741, %v2853
    %2855 = vmatprep.mubr.bf16.mxu0 %v732
    %2856 = vmatmul.mubr.bf16.gmra.mxu0 %v731
    %v2857 = vpop.f32.mrf.mxu0
    %v2858 = vadd.f32 %v2745, %v2857
    %v2859 = vpop.f32.mrf.mxu0
    %v2860 = vadd.f32 %v2747, %v2859
    %v2861 = vpop.f32.mrf.mxu0
    %v2862 = vadd.f32 %v2749, %v2861
    %v2863 = vpop.f32.mrf.mxu0
    %v2864 = vadd.f32 %v2751, %v2863
    %2865 = vmatprep.mubr.bf16.mxu0 %v740
    %2866 = vmatmul.mubr.bf16.gmra.mxu0 %v739
    %v2867 = vpop.f32.mrf.mxu0
    %v2868 = vadd.f32 %v2755, %v2867
    %v2869 = vpop.f32.mrf.mxu0
    %v2870 = vadd.f32 %v2757, %v2869
    %v2871 = vpop.f32.mrf.mxu0
    %v2872 = vadd.f32 %v2759, %v2871
    %v2873 = vpop.f32.mrf.mxu0
    %v2874 = vadd.f32 %v2761, %v2873
    %2875 = vmatprep.mubr.bf16.mxu0 %v748
    %2876 = vmatmul.mubr.bf16.gmra.mxu0 %v747
    %v2877 = vpop.f32.mrf.mxu0
    %v2878 = vadd.f32 %v2765, %v2877
    %v2879 = vpop.f32.mrf.mxu0
    %v2880 = vadd.f32 %v2767, %v2879
    %v2881 = vpop.f32.mrf.mxu0
    %v2882 = vadd.f32 %v2769, %v2881
    %v2883 = vpop.f32.mrf.mxu0
    %v2884 = vadd.f32 %v2771, %v2883
    %2885 = vdwg.mxu0
    %2886 = vmatprep.subr.bf16.mxu0 %v1806
    %2887 = vmatpush1.bf16.msra.mxu0 %v1805
    %2888 = vmatprep.subr.bf16.mxu0 %v1802
    %2889 = vmatpush1.bf16.msra.mxu0 %v1801
    %2890 = vmatprep.subr.bf16.mxu0 %v1798
    %2891 = vmatpush1.bf16.msra.mxu0 %v1797
    %2892 = vmatprep.subr.bf16.mxu0 %v1794
    %2893 = vmatpush1.bf16.msra.mxu0 %v1793
    %2894 = vmatprep.subr.bf16.mxu0 %v1790
    %2895 = vmatpush1.bf16.msra.mxu0 %v1789
    %2896 = vmatprep.subr.bf16.mxu0 %v1786
    %2897 = vmatpush1.bf16.msra.mxu0 %v1785
    %2898 = vmatprep.subr.bf16.mxu0 %v1782
    %2899 = vmatpush1.bf16.msra.mxu0 %v1781
    %2900 = vmatprep.subr.bf16.mxu0 %v1778
    %2901 = vmatpush1.bf16.msra.mxu0 %v1777
    %2902 = vmatprep.subr.bf16.mxu0 %v1838
    %2903 = vmatpush2.bf16.msra.mxu0 %v1837
    %2904 = vmatprep.subr.bf16.mxu0 %v1834
    %2905 = vmatpush2.bf16.msra.mxu0 %v1833
    %2906 = vmatprep.subr.bf16.mxu0 %v1830
    %2907 = vmatpush2.bf16.msra.mxu0 %v1829
    %2908 = vmatprep.subr.bf16.mxu0 %v1826
    %2909 = vmatpush2.bf16.msra.mxu0 %v1825
    %2910 = vmatprep.subr.bf16.mxu0 %v1822
    %2911 = vmatpush2.bf16.msra.mxu0 %v1821
    %2912 = vmatprep.subr.bf16.mxu0 %v1818
    %2913 = vmatpush2.bf16.msra.mxu0 %v1817
    %2914 = vmatprep.subr.bf16.mxu0 %v1814
    %2915 = vmatpush2.bf16.msra.mxu0 %v1813
    %2916 = vmatprep.subr.bf16.mxu0 %v1810
    %2917 = vmatpush2.bf16.msra.mxu0 %v1809
    %2918 = vmatprep.mubr.bf16.mxu0 %v694
    %2919 = vmatmul.mubr.bf16.gmra.mxu0 %v693
    %v2920 = vpop.f32.mrf.mxu0
    %v2921 = vadd.f32 %v2808, %v2920
    %v2922 = vpop.f32.mrf.mxu0
    %v2923 = vadd.f32 %v2810, %v2922
    %v2924 = vpop.f32.mrf.mxu0
    %v2925 = vadd.f32 %v2812, %v2924
    %v2926 = vpop.f32.mrf.mxu0
    %v2927 = vadd.f32 %v2814, %v2926
    %2928 = vmatprep.mubr.bf16.mxu0 %v702
    %2929 = vmatmul.mubr.bf16.gmra.mxu0 %v701
    %v2930 = vpop.f32.mrf.mxu0
    %v2931 = vadd.f32 %v2818, %v2930
    %v2932 = vpop.f32.mrf.mxu0
    %v2933 = vadd.f32 %v2820, %v2932
    %v2934 = vpop.f32.mrf.mxu0
    %v2935 = vadd.f32 %v2822, %v2934
    %v2936 = vpop.f32.mrf.mxu0
    %v2937 = vadd.f32 %v2824, %v2936
    %2938 = vmatprep.mubr.bf16.mxu0 %v710
    %2939 = vmatmul.mubr.bf16.gmra.mxu0 %v709
    %v2940 = vpop.f32.mrf.mxu0
    %v2941 = vadd.f32 %v2828, %v2940
    %v2942 = vpop.f32.mrf.mxu0
    %v2943 = vadd.f32 %v2830, %v2942
    %v2944 = vpop.f32.mrf.mxu0
    %v2945 = vadd.f32 %v2832, %v2944
    %v2946 = vpop.f32.mrf.mxu0
    %v2947 = vadd.f32 %v2834, %v2946
    %2948 = vmatprep.mubr.bf16.mxu0 %v718
    %2949 = vmatmul.mubr.bf16.gmra.mxu0 %v717
    %v2950 = vpop.f32.mrf.mxu0
    %v2951 = vadd.f32 %v2838, %v2950
    %v2952 = vpop.f32.mrf.mxu0
    %v2953 = vadd.f32 %v2840, %v2952
    %v2954 = vpop.f32.mrf.mxu0
    %v2955 = vadd.f32 %v2842, %v2954
    %v2956 = vpop.f32.mrf.mxu0
    %v2957 = vadd.f32 %v2844, %v2956
    %2958 = vmatprep.mubr.bf16.mxu0 %v726
    %2959 = vmatmul.mubr.bf16.gmra.mxu0 %v725
    %v2960 = vpop.f32.mrf.mxu0
    %v2961 = vadd.f32 %v2848, %v2960
    %v2962 = vpop.f32.mrf.mxu0
    %v2963 = vadd.f32 %v2850, %v2962
    %v2964 = vpop.f32.mrf.mxu0
    %v2965 = vadd.f32 %v2852, %v2964
    %v2966 = vpop.f32.mrf.mxu0
    %v2967 = vadd.f32 %v2854, %v2966
    %2968 = vmatprep.mubr.bf16.mxu0 %v734
    %2969 = vmatmul.mubr.bf16.gmra.mxu0 %v733
    %v2970 = vpop.f32.mrf.mxu0
    %v2971 = vadd.f32 %v2858, %v2970
    %v2972 = vpop.f32.mrf.mxu0
    %v2973 = vadd.f32 %v2860, %v2972
    %v2974 = vpop.f32.mrf.mxu0
    %v2975 = vadd.f32 %v2862, %v2974
    %v2976 = vpop.f32.mrf.mxu0
    %v2977 = vadd.f32 %v2864, %v2976
    %2978 = vmatprep.mubr.bf16.mxu0 %v742
    %2979 = vmatmul.mubr.bf16.gmra.mxu0 %v741
    %v2980 = vpop.f32.mrf.mxu0
    %v2981 = vadd.f32 %v2868, %v2980
    %v2982 = vpop.f32.mrf.mxu0
    %v2983 = vadd.f32 %v2870, %v2982
    %v2984 = vpop.f32.mrf.mxu0
    %v2985 = vadd.f32 %v2872, %v2984
    %v2986 = vpop.f32.mrf.mxu0
    %v2987 = vadd.f32 %v2874, %v2986
    %2988 = vmatprep.mubr.bf16.mxu0 %v750
    %2989 = vmatmul.mubr.bf16.gmra.mxu0 %v749
    %v2990 = vpop.f32.mrf.mxu0
    %v2991 = vadd.f32 %v2878, %v2990
    %v2992 = vpop.f32.mrf.mxu0
    %v2993 = vadd.f32 %v2880, %v2992
    %v2994 = vpop.f32.mrf.mxu0
    %v2995 = vadd.f32 %v2882, %v2994
    %v2996 = vpop.f32.mrf.mxu0
    %v2997 = vadd.f32 %v2884, %v2996
    %2998 = vdwg.mxu0
    %v2999 = vxor.u32 %v2469, 2147483648
    %v3000 = vxor.u32 %v2471, 2147483648
    %v3001 = vxor.u32 %v2921, 2147483648
    %v3002 = vxor.u32 %v2923, 2147483648
    %v3003 = vxor.u32 %v2473, 2147483648
    %v3004 = vxor.u32 %v2475, 2147483648
    %v3005 = vxor.u32 %v2925, 2147483648
    %v3006 = vxor.u32 %v2927, 2147483648
    %v3007 = vxor.u32 %v2479, 2147483648
    %v3008 = vxor.u32 %v2481, 2147483648
    %v3009 = vxor.u32 %v2931, 2147483648
    %v3010 = vxor.u32 %v2933, 2147483648
    %v3011 = vxor.u32 %v2483, 2147483648
    %v3012 = vxor.u32 %v2485, 2147483648
    %v3013 = vxor.u32 %v2935, 2147483648
    %v3014 = vxor.u32 %v2937, 2147483648
    %v3015 = vxor.u32 %v2489, 2147483648
    %v3016 = vxor.u32 %v2491, 2147483648
    %v3017 = vxor.u32 %v2941, 2147483648
    %v3018 = vxor.u32 %v2943, 2147483648
    %v3019 = vxor.u32 %v2493, 2147483648
    %v3020 = vxor.u32 %v2495, 2147483648
    %v3021 = vxor.u32 %v2945, 2147483648
    %v3022 = vxor.u32 %v2947, 2147483648
    %v3023 = vxor.u32 %v2499, 2147483648
    %v3024 = vxor.u32 %v2501, 2147483648
    %v3025 = vxor.u32 %v2951, 2147483648
    %v3026 = vxor.u32 %v2953, 2147483648
    %v3027 = vxor.u32 %v2503, 2147483648
    %v3028 = vxor.u32 %v2505, 2147483648
    %v3029 = vxor.u32 %v2955, 2147483648
    %v3030 = vxor.u32 %v2957, 2147483648
    %v3031 = vxor.u32 %v2509, 2147483648
    %v3032 = vxor.u32 %v2511, 2147483648
    %v3033 = vxor.u32 %v2961, 2147483648
    %v3034 = vxor.u32 %v2963, 2147483648
    %v3035 = vxor.u32 %v2513, 2147483648
    %v3036 = vxor.u32 %v2515, 2147483648
    %v3037 = vxor.u32 %v2965, 2147483648
    %v3038 = vxor.u32 %v2967, 2147483648
    %v3039 = vxor.u32 %v2519, 2147483648
    %v3040 = vxor.u32 %v2521, 2147483648
    %v3041 = vxor.u32 %v2971, 2147483648
    %v3042 = vxor.u32 %v2973, 2147483648
    %v3043 = vxor.u32 %v2523, 2147483648
    %v3044 = vxor.u32 %v2525, 2147483648
    %v3045 = vxor.u32 %v2975, 2147483648
    %v3046 = vxor.u32 %v2977, 2147483648
    %v3047 = vxor.u32 %v2529, 2147483648
    %v3048 = vxor.u32 %v2531, 2147483648
    %v3049 = vxor.u32 %v2981, 2147483648
    %v3050 = vxor.u32 %v2983, 2147483648
    %v3051 = vxor.u32 %v2533, 2147483648
    %v3052 = vxor.u32 %v2535, 2147483648
    %v3053 = vxor.u32 %v2985, 2147483648
    %v3054 = vxor.u32 %v2987, 2147483648
    %v3055 = vxor.u32 %v2539, 2147483648
    %v3056 = vxor.u32 %v2541, 2147483648
    %v3057 = vxor.u32 %v2991, 2147483648
    %v3058 = vxor.u32 %v2993, 2147483648
    %v3059 = vxor.u32 %v2543, 2147483648
    %v3060 = vxor.u32 %v2545, 2147483648
    %v3061 = vxor.u32 %v2995, 2147483648
    %v3062 = vxor.u32 %v2997, 2147483648
    %v3063 = vmul.f32 %v2999, 1.442695
    %v3064 = vpow.pop %v3063
    %v3065 = vmul.f32 %v3000, 1.442695
    %v3066 = vpow.pop %v3065
    %v3067 = vmul.f32 %v3001, 1.442695
    %v3068 = vpow.pop %v3067
    %v3069 = vmul.f32 %v3002, 1.442695
    %v3070 = vpow.pop %v3069
    %v3071 = vmul.f32 %v3003, 1.442695
    %v3072 = vpow.pop %v3071
    %v3073 = vmul.f32 %v3004, 1.442695
    %v3074 = vpow.pop %v3073
    %v3075 = vmul.f32 %v3005, 1.442695
    %v3076 = vpow.pop %v3075
    %v3077 = vmul.f32 %v3006, 1.442695
    %v3078 = vpow.pop %v3077
    %v3079 = vmul.f32 %v3007, 1.442695
    %v3080 = vpow.pop %v3079
    %v3081 = vmul.f32 %v3008, 1.442695
    %v3082 = vpow.pop %v3081
    %v3083 = vmul.f32 %v3009, 1.442695
    %v3084 = vpow.pop %v3083
    %v3085 = vmul.f32 %v3010, 1.442695
    %v3086 = vpow.pop %v3085
    %v3087 = vmul.f32 %v3011, 1.442695
    %v3088 = vpow.pop %v3087
    %v3089 = vmul.f32 %v3012, 1.442695
    %v3090 = vpow.pop %v3089
    %v3091 = vmul.f32 %v3013, 1.442695
    %v3092 = vpow.pop %v3091
    %v3093 = vmul.f32 %v3014, 1.442695
    %v3094 = vpow.pop %v3093
    %v3095 = vmul.f32 %v3015, 1.442695
    %v3096 = vpow.pop %v3095
    %v3097 = vmul.f32 %v3016, 1.442695
    %v3098 = vpow.pop %v3097
    %v3099 = vmul.f32 %v3017, 1.442695
    %v3100 = vpow.pop %v3099
    %v3101 = vmul.f32 %v3018, 1.442695
    %v3102 = vpow.pop %v3101
    %v3103 = vmul.f32 %v3019, 1.442695
    %v3104 = vpow.pop %v3103
    %v3105 = vmul.f32 %v3020, 1.442695
    %v3106 = vpow.pop %v3105
    %v3107 = vmul.f32 %v3021, 1.442695
    %v3108 = vpow.pop %v3107
    %v3109 = vmul.f32 %v3022, 1.442695
    %v3110 = vpow.pop %v3109
    %v3111 = vmul.f32 %v3023, 1.442695
    %v3112 = vpow.pop %v3111
    %v3113 = vmul.f32 %v3024, 1.442695
    %v3114 = vpow.pop %v3113
    %v3115 = vmul.f32 %v3025, 1.442695
    %v3116 = vpow.pop %v3115
    %v3117 = vmul.f32 %v3026, 1.442695
    %v3118 = vpow.pop %v3117
    %v3119 = vmul.f32 %v3027, 1.442695
    %v3120 = vpow.pop %v3119
    %v3121 = vmul.f32 %v3028, 1.442695
    %v3122 = vpow.pop %v3121
    %v3123 = vmul.f32 %v3029, 1.442695
    %v3124 = vpow.pop %v3123
    %v3125 = vmul.f32 %v3030, 1.442695
    %v3126 = vpow.pop %v3125
    %v3127 = vmul.f32 %v3031, 1.442695
    %v3128 = vpow.pop %v3127
    %v3129 = vmul.f32 %v3032, 1.442695
    %v3130 = vpow.pop %v3129
    %v3131 = vmul.f32 %v3033, 1.442695
    %v3132 = vpow.pop %v3131
    %v3133 = vmul.f32 %v3034, 1.442695
    %v3134 = vpow.pop %v3133
    %v3135 = vmul.f32 %v3035, 1.442695
    %v3136 = vpow.pop %v3135
    %v3137 = vmul.f32 %v3036, 1.442695
    %v3138 = vpow.pop %v3137
    %v3139 = vmul.f32 %v3037, 1.442695
    %v3140 = vpow.pop %v3139
    %v3141 = vmul.f32 %v3038, 1.442695
    %v3142 = vpow.pop %v3141
    %v3143 = vmul.f32 %v3039, 1.442695
    %v3144 = vpow.pop %v3143
    %v3145 = vmul.f32 %v3040, 1.442695
    %v3146 = vpow.pop %v3145
    %v3147 = vmul.f32 %v3041, 1.442695
    %v3148 = vpow.pop %v3147
    %v3149 = vmul.f32 %v3042, 1.442695
    %v3150 = vpow.pop %v3149
    %v3151 = vmul.f32 %v3043, 1.442695
    %v3152 = vpow.pop %v3151
    %v3153 = vmul.f32 %v3044, 1.442695
    %v3154 = vpow.pop %v3153
    %v3155 = vmul.f32 %v3045, 1.442695
    %v3156 = vpow.pop %v3155
    %v3157 = vmul.f32 %v3046, 1.442695
    %v3158 = vpow.pop %v3157
    %v3159 = vmul.f32 %v3047, 1.442695
    %v3160 = vpow.pop %v3159
    %v3161 = vmul.f32 %v3048, 1.442695
    %v3162 = vpow.pop %v3161
    %v3163 = vmul.f32 %v3049, 1.442695
    %v3164 = vpow.pop %v3163
    %v3165 = vmul.f32 %v3050, 1.442695
    %v3166 = vpow.pop %v3165
    %v3167 = vmul.f32 %v3051, 1.442695
    %v3168 = vpow.pop %v3167
    %v3169 = vmul.f32 %v3052, 1.442695
    %v3170 = vpow.pop %v3169
    %v3171 = vmul.f32 %v3053, 1.442695
    %v3172 = vpow.pop %v3171
    %v3173 = vmul.f32 %v3054, 1.442695
    %v3174 = vpow.pop %v3173
    %v3175 = vmul.f32 %v3055, 1.442695
    %v3176 = vpow.pop %v3175
    %v3177 = vmul.f32 %v3056, 1.442695
    %v3178 = vpow.pop %v3177
    %v3179 = vmul.f32 %v3057, 1.442695
    %v3180 = vpow.pop %v3179
    %v3181 = vmul.f32 %v3058, 1.442695
    %v3182 = vpow.pop %v3181
    %v3183 = vmul.f32 %v3059, 1.442695
    %v3184 = vpow.pop %v3183
    %v3185 = vmul.f32 %v3060, 1.442695
    %v3186 = vpow.pop %v3185
    %v3187 = vmul.f32 %v3061, 1.442695
    %v3188 = vpow.pop %v3187
    %v3189 = vmul.f32 %v3062, 1.442695
    %v3190 = vpow.pop %v3189
    %v3191 = vadd.f32 %v3064, 1.0
    %v3192 = vadd.f32 %v3066, 1.0
    %v3193 = vadd.f32 %v3068, 1.0
    %v3194 = vadd.f32 %v3070, 1.0
    %v3195 = vadd.f32 %v3072, 1.0
    %v3196 = vadd.f32 %v3074, 1.0
    %v3197 = vadd.f32 %v3076, 1.0
    %v3198 = vadd.f32 %v3078, 1.0
    %v3199 = vadd.f32 %v3080, 1.0
    %v3200 = vadd.f32 %v3082, 1.0
    %v3201 = vadd.f32 %v3084, 1.0
    %v3202 = vadd.f32 %v3086, 1.0
    %v3203 = vadd.f32 %v3088, 1.0
    %v3204 = vadd.f32 %v3090, 1.0
    %v3205 = vadd.f32 %v3092, 1.0
    %v3206 = vadd.f32 %v3094, 1.0
    %v3207 = vadd.f32 %v3096, 1.0
    %v3208 = vadd.f32 %v3098, 1.0
    %v3209 = vadd.f32 %v3100, 1.0
    %v3210 = vadd.f32 %v3102, 1.0
    %v3211 = vadd.f32 %v3104, 1.0
    %v3212 = vadd.f32 %v3106, 1.0
    %v3213 = vadd.f32 %v3108, 1.0
    %v3214 = vadd.f32 %v3110, 1.0
    %v3215 = vadd.f32 %v3112, 1.0
    %v3216 = vadd.f32 %v3114, 1.0
    %v3217 = vadd.f32 %v3116, 1.0
    %v3218 = vadd.f32 %v3118, 1.0
    %v3219 = vadd.f32 %v3120, 1.0
    %v3220 = vadd.f32 %v3122, 1.0
    %v3221 = vadd.f32 %v3124, 1.0
    %v3222 = vadd.f32 %v3126, 1.0
    %v3223 = vadd.f32 %v3128, 1.0
    %v3224 = vadd.f32 %v3130, 1.0
    %v3225 = vadd.f32 %v3132, 1.0
    %v3226 = vadd.f32 %v3134, 1.0
    %v3227 = vadd.f32 %v3136, 1.0
    %v3228 = vadd.f32 %v3138, 1.0
    %v3229 = vadd.f32 %v3140, 1.0
    %v3230 = vadd.f32 %v3142, 1.0
    %v3231 = vadd.f32 %v3144, 1.0
    %v3232 = vadd.f32 %v3146, 1.0
    %v3233 = vadd.f32 %v3148, 1.0
    %v3234 = vadd.f32 %v3150, 1.0
    %v3235 = vadd.f32 %v3152, 1.0
    %v3236 = vadd.f32 %v3154, 1.0
    %v3237 = vadd.f32 %v3156, 1.0
    %v3238 = vadd.f32 %v3158, 1.0
    %v3239 = vadd.f32 %v3160, 1.0
    %v3240 = vadd.f32 %v3162, 1.0
    %v3241 = vadd.f32 %v3164, 1.0
    %v3242 = vadd.f32 %v3166, 1.0
    %v3243 = vadd.f32 %v3168, 1.0
    %v3244 = vadd.f32 %v3170, 1.0
    %v3245 = vadd.f32 %v3172, 1.0
    %v3246 = vadd.f32 %v3174, 1.0
    %v3247 = vadd.f32 %v3176, 1.0
    %v3248 = vadd.f32 %v3178, 1.0
    %v3249 = vadd.f32 %v3180, 1.0
    %v3250 = vadd.f32 %v3182, 1.0
    %v3251 = vadd.f32 %v3184, 1.0
    %v3252 = vadd.f32 %v3186, 1.0
    %v3253 = vadd.f32 %v3188, 1.0
    %v3254 = vadd.f32 %v3190, 1.0
    %v3255 = vrcp.pop %v3191
    %v3256 = vmul.f32 1.0, %v3255
    %v3257 = vrcp.pop %v3192
    %v3258 = vmul.f32 1.0, %v3257
    %v3259 = vrcp.pop %v3193
    %v3260 = vmul.f32 1.0, %v3259
    %v3261 = vrcp.pop %v3194
    %v3262 = vmul.f32 1.0, %v3261
    %v3263 = vrcp.pop %v3195
    %v3264 = vmul.f32 1.0, %v3263
    %v3265 = vrcp.pop %v3196
    %v3266 = vmul.f32 1.0, %v3265
    %v3267 = vrcp.pop %v3197
    %v3268 = vmul.f32 1.0, %v3267
    %v3269 = vrcp.pop %v3198
    %v3270 = vmul.f32 1.0, %v3269
    %v3271 = vrcp.pop %v3199
    %v3272 = vmul.f32 1.0, %v3271
    %v3273 = vrcp.pop %v3200
    %v3274 = vmul.f32 1.0, %v3273
    %v3275 = vrcp.pop %v3201
    %v3276 = vmul.f32 1.0, %v3275
    %v3277 = vrcp.pop %v3202
    %v3278 = vmul.f32 1.0, %v3277
    %v3279 = vrcp.pop %v3203
    %v3280 = vmul.f32 1.0, %v3279
    %v3281 = vrcp.pop %v3204
    %v3282 = vmul.f32 1.0, %v3281
    %v3283 = vrcp.pop %v3205
    %v3284 = vmul.f32 1.0, %v3283
    %v3285 = vrcp.pop %v3206
    %v3286 = vmul.f32 1.0, %v3285
    %v3287 = vrcp.pop %v3207
    %v3288 = vmul.f32 1.0, %v3287
    %v3289 = vrcp.pop %v3208
    %v3290 = vmul.f32 1.0, %v3289
    %v3291 = vrcp.pop %v3209
    %v3292 = vmul.f32 1.0, %v3291
    %v3293 = vrcp.pop %v3210
    %v3294 = vmul.f32 1.0, %v3293
    %v3295 = vrcp.pop %v3211
    %v3296 = vmul.f32 1.0, %v3295
    %v3297 = vrcp.pop %v3212
    %v3298 = vmul.f32 1.0, %v3297
    %v3299 = vrcp.pop %v3213
    %v3300 = vmul.f32 1.0, %v3299
    %v3301 = vrcp.pop %v3214
    %v3302 = vmul.f32 1.0, %v3301
    %v3303 = vrcp.pop %v3215
    %v3304 = vmul.f32 1.0, %v3303
    %v3305 = vrcp.pop %v3216
    %v3306 = vmul.f32 1.0, %v3305
    %v3307 = vrcp.pop %v3217
    %v3308 = vmul.f32 1.0, %v3307
    %v3309 = vrcp.pop %v3218
    %v3310 = vmul.f32 1.0, %v3309
    %v3311 = vrcp.pop %v3219
    %v3312 = vmul.f32 1.0, %v3311
    %v3313 = vrcp.pop %v3220
    %v3314 = vmul.f32 1.0, %v3313
    %v3315 = vrcp.pop %v3221
    %v3316 = vmul.f32 1.0, %v3315
    %v3317 = vrcp.pop %v3222
    %v3318 = vmul.f32 1.0, %v3317
    %v3319 = vrcp.pop %v3223
    %v3320 = vmul.f32 1.0, %v3319
    %v3321 = vrcp.pop %v3224
    %v3322 = vmul.f32 1.0, %v3321
    %v3323 = vrcp.pop %v3225
    %v3324 = vmul.f32 1.0, %v3323
    %v3325 = vrcp.pop %v3226
    %v3326 = vmul.f32 1.0, %v3325
    %v3327 = vrcp.pop %v3227
    %v3328 = vmul.f32 1.0, %v3327
    %v3329 = vrcp.pop %v3228
    %v3330 = vmul.f32 1.0, %v3329
    %v3331 = vrcp.pop %v3229
    %v3332 = vmul.f32 1.0, %v3331
    %v3333 = vrcp.pop %v3230
    %v3334 = vmul.f32 1.0, %v3333
    %v3335 = vrcp.pop %v3231
    %v3336 = vmul.f32 1.0, %v3335
    %v3337 = vrcp.pop %v3232
    %v3338 = vmul.f32 1.0, %v3337
    %v3339 = vrcp.pop %v3233
    %v3340 = vmul.f32 1.0, %v3339
    %v3341 = vrcp.pop %v3234
    %v3342 = vmul.f32 1.0, %v3341
    %v3343 = vrcp.pop %v3235
    %v3344 = vmul.f32 1.0, %v3343
    %v3345 = vrcp.pop %v3236
    %v3346 = vmul.f32 1.0, %v3345
    %v3347 = vrcp.pop %v3237
    %v3348 = vmul.f32 1.0, %v3347
    %v3349 = vrcp.pop %v3238
    %v3350 = vmul.f32 1.0, %v3349
    %v3351 = vrcp.pop %v3239
    %v3352 = vmul.f32 1.0, %v3351
    %v3353 = vrcp.pop %v3240
    %v3354 = vmul.f32 1.0, %v3353
    %v3355 = vrcp.pop %v3241
    %v3356 = vmul.f32 1.0, %v3355
    %v3357 = vrcp.pop %v3242
    %v3358 = vmul.f32 1.0, %v3357
    %v3359 = vrcp.pop %v3243
    %v3360 = vmul.f32 1.0, %v3359
    %v3361 = vrcp.pop %v3244
    %v3362 = vmul.f32 1.0, %v3361
    %v3363 = vrcp.pop %v3245
    %v3364 = vmul.f32 1.0, %v3363
    %v3365 = vrcp.pop %v3246
    %v3366 = vmul.f32 1.0, %v3365
    %v3367 = vrcp.pop %v3247
    %v3368 = vmul.f32 1.0, %v3367
    %v3369 = vrcp.pop %v3248
    %v3370 = vmul.f32 1.0, %v3369
    %v3371 = vrcp.pop %v3249
    %v3372 = vmul.f32 1.0, %v3371
    %v3373 = vrcp.pop %v3250
    %v3374 = vmul.f32 1.0, %v3373
    %v3375 = vrcp.pop %v3251
    %v3376 = vmul.f32 1.0, %v3375
    %v3377 = vrcp.pop %v3252
    %v3378 = vmul.f32 1.0, %v3377
    %v3379 = vrcp.pop %v3253
    %v3380 = vmul.f32 1.0, %v3379
    %v3381 = vrcp.pop %v3254
    %v3382 = vmul.f32 1.0, %v3381
    %v3383 = vpack.c.bf16 %v3264, %v3256
    %v3384 = vpack.c.bf16 %v3266, %v3258
    %v3385 = vpack.c.bf16 %v3268, %v3260
    %v3386 = vpack.c.bf16 %v3270, %v3262
    %v3387 = vpack.c.bf16 %v3280, %v3272
    %v3388 = vpack.c.bf16 %v3282, %v3274
    %v3389 = vpack.c.bf16 %v3284, %v3276
    %v3390 = vpack.c.bf16 %v3286, %v3278
    %v3391 = vpack.c.bf16 %v3296, %v3288
    %v3392 = vpack.c.bf16 %v3298, %v3290
    %v3393 = vpack.c.bf16 %v3300, %v3292
    %v3394 = vpack.c.bf16 %v3302, %v3294
    %v3395 = vpack.c.bf16 %v3312, %v3304
    %v3396 = vpack.c.bf16 %v3314, %v3306
    %v3397 = vpack.c.bf16 %v3316, %v3308
    %v3398 = vpack.c.bf16 %v3318, %v3310
    %v3399 = vpack.c.bf16 %v3328, %v3320
    %v3400 = vpack.c.bf16 %v3330, %v3322
    %v3401 = vpack.c.bf16 %v3332, %v3324
    %v3402 = vpack.c.bf16 %v3334, %v3326
    %v3403 = vpack.c.bf16 %v3344, %v3336
    %v3404 = vpack.c.bf16 %v3346, %v3338
    %v3405 = vpack.c.bf16 %v3348, %v3340
    %v3406 = vpack.c.bf16 %v3350, %v3342
    %v3407 = vpack.c.bf16 %v3360, %v3352
    %v3408 = vpack.c.bf16 %v3362, %v3354
    %v3409 = vpack.c.bf16 %v3364, %v3356
    %v3410 = vpack.c.bf16 %v3366, %v3358
    %v3411 = vpack.c.bf16 %v3376, %v3368
    %v3412 = vpack.c.bf16 %v3378, %v3370
    %v3413 = vpack.c.bf16 %v3380, %v3372
    %v3414 = vpack.c.bf16 %v3382, %v3374
    %v3415 = vld [vmem:[#allocation8] sm:$0xff]
    %v3416 = vld [vmem:[#allocation8 + $0x8] sm:$0xff]
    %v3417 = vld [vmem:[#allocation8 + $0x10] sm:$0xff]
    %v3418 = vld [vmem:[#allocation8 + $0x18] sm:$0xff]
    %v3419 = vld [vmem:[#allocation8 + $0x20] sm:$0xff]
    %v3420 = vld [vmem:[#allocation8 + $0x28] sm:$0xff]
    %v3421 = vld [vmem:[#allocation8 + $0x30] sm:$0xff]
    %v3422 = vld [vmem:[#allocation8 + $0x38] sm:$0xff]
    %v3423 = vld [vmem:[#allocation8 + $0x40] sm:$0xff]
    %v3424 = vld [vmem:[#allocation8 + $0x48] sm:$0xff]
    %v3425 = vld [vmem:[#allocation8 + $0x50] sm:$0xff]
    %v3426 = vld [vmem:[#allocation8 + $0x58] sm:$0xff]
    %v3427 = vld [vmem:[#allocation8 + $0x60] sm:$0xff]
    %v3428 = vld [vmem:[#allocation8 + $0x68] sm:$0xff]
    %v3429 = vld [vmem:[#allocation8 + $0x70] sm:$0xff]
    %v3430 = vld [vmem:[#allocation8 + $0x78] sm:$0xff]
    %v3431 = vld [vmem:[#allocation8 + $0x80] sm:$0xff]
    %v3432 = vld [vmem:[#allocation8 + $0x88] sm:$0xff]
    %v3433 = vld [vmem:[#allocation8 + $0x90] sm:$0xff]
    %v3434 = vld [vmem:[#allocation8 + $0x98] sm:$0xff]
    %v3435 = vld [vmem:[#allocation8 + $0xa0] sm:$0xff]
    %v3436 = vld [vmem:[#allocation8 + $0xa8] sm:$0xff]
    %v3437 = vld [vmem:[#allocation8 + $0xb0] sm:$0xff]
    %v3438 = vld [vmem:[#allocation8 + $0xb8] sm:$0xff]
    %v3439 = vld [vmem:[#allocation8 + $0xc0] sm:$0xff]
    %v3440 = vld [vmem:[#allocation8 + $0xc8] sm:$0xff]
    %v3441 = vld [vmem:[#allocation8 + $0xd0] sm:$0xff]
    %v3442 = vld [vmem:[#allocation8 + $0xd8] sm:$0xff]
    %v3443 = vld [vmem:[#allocation8 + $0xe0] sm:$0xff]
    %v3444 = vld [vmem:[#allocation8 + $0xe8] sm:$0xff]
    %v3445 = vld [vmem:[#allocation8 + $0xf0] sm:$0xff]
    %v3446 = vld [vmem:[#allocation8 + $0xf8] sm:$0xff]
    %v3447 = vld [vmem:[#allocation8 + $0x100] sm:$0xff]
    %v3448 = vld [vmem:[#allocation8 + $0x108] sm:$0xff]
    %v3449 = vld [vmem:[#allocation8 + $0x110] sm:$0xff]
    %v3450 = vld [vmem:[#allocation8 + $0x118] sm:$0xff]
    %v3451 = vld [vmem:[#allocation8 + $0x120] sm:$0xff]
    %v3452 = vld [vmem:[#allocation8 + $0x128] sm:$0xff]
    %v3453 = vld [vmem:[#allocation8 + $0x130] sm:$0xff]
    %v3454 = vld [vmem:[#allocation8 + $0x138] sm:$0xff]
    %v3455 = vld [vmem:[#allocation8 + $0x140] sm:$0xff]
    %v3456 = vld [vmem:[#allocation8 + $0x148] sm:$0xff]
    %v3457 = vld [vmem:[#allocation8 + $0x150] sm:$0xff]
    %v3458 = vld [vmem:[#allocation8 + $0x158] sm:$0xff]
    %v3459 = vld [vmem:[#allocation8 + $0x160] sm:$0xff]
    %v3460 = vld [vmem:[#allocation8 + $0x168] sm:$0xff]
    %v3461 = vld [vmem:[#allocation8 + $0x170] sm:$0xff]
    %v3462 = vld [vmem:[#allocation8 + $0x178] sm:$0xff]
    %v3463 = vld [vmem:[#allocation8 + $0x180] sm:$0xff]
    %v3464 = vld [vmem:[#allocation8 + $0x188] sm:$0xff]
    %v3465 = vld [vmem:[#allocation8 + $0x190] sm:$0xff]
    %v3466 = vld [vmem:[#allocation8 + $0x198] sm:$0xff]
    %v3467 = vld [vmem:[#allocation8 + $0x1a0] sm:$0xff]
    %v3468 = vld [vmem:[#allocation8 + $0x1a8] sm:$0xff]
    %v3469 = vld [vmem:[#allocation8 + $0x1b0] sm:$0xff]
    %v3470 = vld [vmem:[#allocation8 + $0x1b8] sm:$0xff]
    %v3471 = vld [vmem:[#allocation8 + $0x1c0] sm:$0xff]
    %v3472 = vld [vmem:[#allocation8 + $0x1c8] sm:$0xff]
    %v3473 = vld [vmem:[#allocation8 + $0x1d0] sm:$0xff]
    %v3474 = vld [vmem:[#allocation8 + $0x1d8] sm:$0xff]
    %v3475 = vld [vmem:[#allocation8 + $0x1e0] sm:$0xff]
    %v3476 = vld [vmem:[#allocation8 + $0x1e8] sm:$0xff]
    %v3477 = vld [vmem:[#allocation8 + $0x1f0] sm:$0xff]
    %v3478 = vld [vmem:[#allocation8 + $0x1f8] sm:$0xff]
    %v3479 = vld [vmem:[%s4] sm:$0x3]
    %v3481 = vlaneseq
    %v3482 = vshrl.u32 %v3481, 7
    %v3483 = vsub.s32 0, %v3482
    %v3484 = vrot.slane %v3479, %v3483
    %v3485 = vlaneseq
    %v3486 = vshrl.u32 %v3485, 7
    %v3487 = vsub.s32 1, %v3486
    %v3488 = vrot.slane %v3479, %v3487
    %v3555 = vunpack.c.l.b16 %v3415
    %v3556 = vunpack.c.h.b16 %v3415
    %v3557 = vunpack.c.l.b16 %v3416
    %v3558 = vunpack.c.h.b16 %v3416
    %v3559 = vunpack.c.l.b16 %v3417
    %v3560 = vunpack.c.h.b16 %v3417
    %v3561 = vunpack.c.l.b16 %v3418
    %v3562 = vunpack.c.h.b16 %v3418
    %v3563 = vunpack.c.l.b16 %v3419
    %v3564 = vunpack.c.h.b16 %v3419
    %v3565 = vunpack.c.l.b16 %v3420
    %v3566 = vunpack.c.h.b16 %v3420
    %v3567 = vunpack.c.l.b16 %v3421
    %v3568 = vunpack.c.h.b16 %v3421
    %v3569 = vunpack.c.l.b16 %v3422
    %v3570 = vunpack.c.h.b16 %v3422
    %v3571 = vunpack.c.l.b16 %v3423
    %v3572 = vunpack.c.h.b16 %v3423
    %v3573 = vunpack.c.l.b16 %v3424
    %v3574 = vunpack.c.h.b16 %v3424
    %v3575 = vunpack.c.l.b16 %v3425
    %v3576 = vunpack.c.h.b16 %v3425
    %v3577 = vunpack.c.l.b16 %v3426
    %v3578 = vunpack.c.h.b16 %v3426
    %v3579 = vunpack.c.l.b16 %v3427
    %v3580 = vunpack.c.h.b16 %v3427
    %v3581 = vunpack.c.l.b16 %v3428
    %v3582 = vunpack.c.h.b16 %v3428
    %v3583 = vunpack.c.l.b16 %v3429
    %v3584 = vunpack.c.h.b16 %v3429
    %v3585 = vunpack.c.l.b16 %v3430
    %v3586 = vunpack.c.h.b16 %v3430
    %v3587 = vunpack.c.l.b16 %v3431
    %v3588 = vunpack.c.h.b16 %v3431
    %v3589 = vunpack.c.l.b16 %v3432
    %v3590 = vunpack.c.h.b16 %v3432
    %v3591 = vunpack.c.l.b16 %v3433
    %v3592 = vunpack.c.h.b16 %v3433
    %v3593 = vunpack.c.l.b16 %v3434
    %v3594 = vunpack.c.h.b16 %v3434
    %v3595 = vunpack.c.l.b16 %v3435
    %v3596 = vunpack.c.h.b16 %v3435
    %v3597 = vunpack.c.l.b16 %v3436
    %v3598 = vunpack.c.h.b16 %v3436
    %v3599 = vunpack.c.l.b16 %v3437
    %v3600 = vunpack.c.h.b16 %v3437
    %v3601 = vunpack.c.l.b16 %v3438
    %v3602 = vunpack.c.h.b16 %v3438
    %v3603 = vunpack.c.l.b16 %v3439
    %v3604 = vunpack.c.h.b16 %v3439
    %v3605 = vunpack.c.l.b16 %v3440
    %v3606 = vunpack.c.h.b16 %v3440
    %v3607 = vunpack.c.l.b16 %v3441
    %v3608 = vunpack.c.h.b16 %v3441
    %v3609 = vunpack.c.l.b16 %v3442
    %v3610 = vunpack.c.h.b16 %v3442
    %v3611 = vunpack.c.l.b16 %v3443
    %v3612 = vunpack.c.h.b16 %v3443
    %v3613 = vunpack.c.l.b16 %v3444
    %v3614 = vunpack.c.h.b16 %v3444
    %v3615 = vunpack.c.l.b16 %v3445
    %v3616 = vunpack.c.h.b16 %v3445
    %v3617 = vunpack.c.l.b16 %v3446
    %v3618 = vunpack.c.h.b16 %v3446
    %v3619 = vunpack.c.l.b16 %v3447
    %v3620 = vunpack.c.h.b16 %v3447
    %v3621 = vunpack.c.l.b16 %v3448
    %v3622 = vunpack.c.h.b16 %v3448
    %v3623 = vunpack.c.l.b16 %v3449
    %v3624 = vunpack.c.h.b16 %v3449
    %v3625 = vunpack.c.l.b16 %v3450
    %v3626 = vunpack.c.h.b16 %v3450
    %v3627 = vunpack.c.l.b16 %v3451
    %v3628 = vunpack.c.h.b16 %v3451
    %v3629 = vunpack.c.l.b16 %v3452
    %v3630 = vunpack.c.h.b16 %v3452
    %v3631 = vunpack.c.l.b16 %v3453
    %v3632 = vunpack.c.h.b16 %v3453
    %v3633 = vunpack.c.l.b16 %v3454
    %v3634 = vunpack.c.h.b16 %v3454
    %v3635 = vunpack.c.l.b16 %v3455
    %v3636 = vunpack.c.h.b16 %v3455
    %v3637 = vunpack.c.l.b16 %v3456
    %v3638 = vunpack.c.h.b16 %v3456
    %v3639 = vunpack.c.l.b16 %v3457
    %v3640 = vunpack.c.h.b16 %v3457
    %v3641 = vunpack.c.l.b16 %v3458
    %v3642 = vunpack.c.h.b16 %v3458
    %v3643 = vunpack.c.l.b16 %v3459
    %v3644 = vunpack.c.h.b16 %v3459
    %v3645 = vunpack.c.l.b16 %v3460
    %v3646 = vunpack.c.h.b16 %v3460
    %v3647 = vunpack.c.l.b16 %v3461
    %v3648 = vunpack.c.h.b16 %v3461
    %v3649 = vunpack.c.l.b16 %v3462
    %v3650 = vunpack.c.h.b16 %v3462
    %v3651 = vunpack.c.l.b16 %v3463
    %v3652 = vunpack.c.h.b16 %v3463
    %v3653 = vunpack.c.l.b16 %v3464
    %v3654 = vunpack.c.h.b16 %v3464
    %v3655 = vunpack.c.l.b16 %v3465
    %v3656 = vunpack.c.h.b16 %v3465
    %v3657 = vunpack.c.l.b16 %v3466
    %v3658 = vunpack.c.h.b16 %v3466
    %v3659 = vunpack.c.l.b16 %v3467
    %v3660 = vunpack.c.h.b16 %v3467
    %v3661 = vunpack.c.l.b16 %v3468
    %v3662 = vunpack.c.h.b16 %v3468
    %v3663 = vunpack.c.l.b16 %v3469
    %v3664 = vunpack.c.h.b16 %v3469
    %v3665 = vunpack.c.l.b16 %v3470
    %v3666 = vunpack.c.h.b16 %v3470
    %v3667 = vunpack.c.l.b16 %v3471
    %v3668 = vunpack.c.h.b16 %v3471
    %v3669 = vunpack.c.l.b16 %v3472
    %v3670 = vunpack.c.h.b16 %v3472
    %v3671 = vunpack.c.l.b16 %v3473
    %v3672 = vunpack.c.h.b16 %v3473
    %v3673 = vunpack.c.l.b16 %v3474
    %v3674 = vunpack.c.h.b16 %v3474
    %v3675 = vunpack.c.l.b16 %v3475
    %v3676 = vunpack.c.h.b16 %v3475
    %v3677 = vunpack.c.l.b16 %v3476
    %v3678 = vunpack.c.h.b16 %v3476
    %v3679 = vunpack.c.l.b16 %v3477
    %v3680 = vunpack.c.h.b16 %v3477
    %v3681 = vunpack.c.l.b16 %v3478
    %v3682 = vunpack.c.h.b16 %v3478
    %v3683 = vpack.c.b16 %v3557, %v3555
    %v3684 = vpack.c.b16 %v3558, %v3556
    %v3685 = vpack.c.b16 %v3561, %v3559
    %v3686 = vpack.c.b16 %v3562, %v3560
    %v3687 = vpack.c.b16 %v3565, %v3563
    %v3688 = vpack.c.b16 %v3566, %v3564
    %v3689 = vpack.c.b16 %v3569, %v3567
    %v3690 = vpack.c.b16 %v3570, %v3568
    %v3691 = vpack.c.b16 %v3573, %v3571
    %v3692 = vpack.c.b16 %v3574, %v3572
    %v3693 = vpack.c.b16 %v3577, %v3575
    %v3694 = vpack.c.b16 %v3578, %v3576
    %v3695 = vpack.c.b16 %v3581, %v3579
    %v3696 = vpack.c.b16 %v3582, %v3580
    %v3697 = vpack.c.b16 %v3585, %v3583
    %v3698 = vpack.c.b16 %v3586, %v3584
    %v3699 = vpack.c.b16 %v3589, %v3587
    %v3700 = vpack.c.b16 %v3590, %v3588
    %v3701 = vpack.c.b16 %v3593, %v3591
    %v3702 = vpack.c.b16 %v3594, %v3592
    %v3703 = vpack.c.b16 %v3597, %v3595
    %v3704 = vpack.c.b16 %v3598, %v3596
    %v3705 = vpack.c.b16 %v3601, %v3599
    %v3706 = vpack.c.b16 %v3602, %v3600
    %v3707 = vpack.c.b16 %v3605, %v3603
    %v3708 = vpack.c.b16 %v3606, %v3604
    %v3709 = vpack.c.b16 %v3609, %v3607
    %v3710 = vpack.c.b16 %v3610, %v3608
    %v3711 = vpack.c.b16 %v3613, %v3611
    %v3712 = vpack.c.b16 %v3614, %v3612
    %v3713 = vpack.c.b16 %v3617, %v3615
    %v3714 = vpack.c.b16 %v3618, %v3616
    %v3715 = vpack.c.b16 %v3621, %v3619
    %v3716 = vpack.c.b16 %v3622, %v3620
    %v3717 = vpack.c.b16 %v3625, %v3623
    %v3718 = vpack.c.b16 %v3626, %v3624
    %v3719 = vpack.c.b16 %v3629, %v3627
    %v3720 = vpack.c.b16 %v3630, %v3628
    %v3721 = vpack.c.b16 %v3633, %v3631
    %v3722 = vpack.c.b16 %v3634, %v3632
    %v3723 = vpack.c.b16 %v3637, %v3635
    %v3724 = vpack.c.b16 %v3638, %v3636
    %v3725 = vpack.c.b16 %v3641, %v3639
    %v3726 = vpack.c.b16 %v3642, %v3640
    %v3727 = vpack.c.b16 %v3645, %v3643
    %v3728 = vpack.c.b16 %v3646, %v3644
    %v3729 = vpack.c.b16 %v3649, %v3647
    %v3730 = vpack.c.b16 %v3650, %v3648
    %v3731 = vpack.c.b16 %v3653, %v3651
    %v3732 = vpack.c.b16 %v3654, %v3652
    %v3733 = vpack.c.b16 %v3657, %v3655
    %v3734 = vpack.c.b16 %v3658, %v3656
    %v3735 = vpack.c.b16 %v3661, %v3659
    %v3736 = vpack.c.b16 %v3662, %v3660
    %v3737 = vpack.c.b16 %v3665, %v3663
    %v3738 = vpack.c.b16 %v3666, %v3664
    %v3739 = vpack.c.b16 %v3669, %v3667
    %v3740 = vpack.c.b16 %v3670, %v3668
    %v3741 = vpack.c.b16 %v3673, %v3671
    %v3742 = vpack.c.b16 %v3674, %v3672
    %v3743 = vpack.c.b16 %v3677, %v3675
    %v3744 = vpack.c.b16 %v3678, %v3676
    %v3745 = vpack.c.b16 %v3681, %v3679
    %v3746 = vpack.c.b16 %v3682, %v3680
    %3811 = vmatprep.subr.bf16.mxu0 %v3698
    %3812 = vmatpush1.bf16.msra.mxu0 %v3697
    %3813 = vmatprep.subr.bf16.mxu0 %v3696
    %3814 = vmatpush1.bf16.msra.mxu0 %v3695
    %3815 = vmatprep.subr.bf16.mxu0 %v3694
    %3816 = vmatpush1.bf16.msra.mxu0 %v3693
    %3817 = vmatprep.subr.bf16.mxu0 %v3692
    %3818 = vmatpush1.bf16.msra.mxu0 %v3691
    %3819 = vmatprep.subr.bf16.mxu0 %v3690
    %3820 = vmatpush1.bf16.msra.mxu0 %v3689
    %3821 = vmatprep.subr.bf16.mxu0 %v3688
    %3822 = vmatpush1.bf16.msra.mxu0 %v3687
    %3823 = vmatprep.subr.bf16.mxu0 %v3686
    %3824 = vmatpush1.bf16.msra.mxu0 %v3685
    %3825 = vmatprep.subr.bf16.mxu0 %v3684
    %3826 = vmatpush1.bf16.msra.mxu0 %v3683
    %3827 = vmatprep.subr.bf16.mxu0 %v3714
    %3828 = vmatpush2.bf16.msra.mxu0 %v3713
    %3829 = vmatprep.subr.bf16.mxu0 %v3712
    %3830 = vmatpush2.bf16.msra.mxu0 %v3711
    %3831 = vmatprep.subr.bf16.mxu0 %v3710
    %3832 = vmatpush2.bf16.msra.mxu0 %v3709
    %3833 = vmatprep.subr.bf16.mxu0 %v3708
    %3834 = vmatpush2.bf16.msra.mxu0 %v3707
    %3835 = vmatprep.subr.bf16.mxu0 %v3706
    %3836 = vmatpush2.bf16.msra.mxu0 %v3705
    %3837 = vmatprep.subr.bf16.mxu0 %v3704
    %3838 = vmatpush2.bf16.msra.mxu0 %v3703
    %3839 = vmatprep.subr.bf16.mxu0 %v3702
    %3840 = vmatpush2.bf16.msra.mxu0 %v3701
    %3841 = vmatprep.subr.bf16.mxu0 %v3700
    %3842 = vmatpush2.bf16.msra.mxu0 %v3699
    %3843 = vmatprep.mubr.bf16.mxu0 %v3384
    %3844 = vmatmul.mubr.bf16.gmra.mxu0 %v3383
    %v3845 = vpop.f32.mrf.mxu0
    %v3846 = vadd.f32 %v3484, %v3845
    %v3847 = vpop.f32.mrf.mxu0
    %v3848 = vadd.f32 %v3488, %v3847
    %v3849 = vpop.f32.mrf.mxu0
    %v3850 = vadd.f32 %v3484, %v3849
    %v3851 = vpop.f32.mrf.mxu0
    %v3852 = vadd.f32 %v3488, %v3851
    %3853 = vmatprep.mubr.bf16.mxu0 %v3388
    %3854 = vmatmul.mubr.bf16.gmra.mxu0 %v3387
    %v3855 = vpop.f32.mrf.mxu0
    %v3856 = vadd.f32 %v3484, %v3855
    %v3857 = vpop.f32.mrf.mxu0
    %v3858 = vadd.f32 %v3488, %v3857
    %v3859 = vpop.f32.mrf.mxu0
    %v3860 = vadd.f32 %v3484, %v3859
    %v3861 = vpop.f32.mrf.mxu0
    %v3862 = vadd.f32 %v3488, %v3861
    %3863 = vmatprep.mubr.bf16.mxu0 %v3392
    %3864 = vmatmul.mubr.bf16.gmra.mxu0 %v3391
    %v3865 = vpop.f32.mrf.mxu0
    %v3866 = vadd.f32 %v3484, %v3865
    %v3867 = vpop.f32.mrf.mxu0
    %v3868 = vadd.f32 %v3488, %v3867
    %v3869 = vpop.f32.mrf.mxu0
    %v3870 = vadd.f32 %v3484, %v3869
    %v3871 = vpop.f32.mrf.mxu0
    %v3872 = vadd.f32 %v3488, %v3871
    %3873 = vmatprep.mubr.bf16.mxu0 %v3396
    %3874 = vmatmul.mubr.bf16.gmra.mxu0 %v3395
    %v3875 = vpop.f32.mrf.mxu0
    %v3876 = vadd.f32 %v3484, %v3875
    %v3877 = vpop.f32.mrf.mxu0
    %v3878 = vadd.f32 %v3488, %v3877
    %v3879 = vpop.f32.mrf.mxu0
    %v3880 = vadd.f32 %v3484, %v3879
    %v3881 = vpop.f32.mrf.mxu0
    %v3882 = vadd.f32 %v3488, %v3881
    %3883 = vmatprep.mubr.bf16.mxu0 %v3400
    %3884 = vmatmul.mubr.bf16.gmra.mxu0 %v3399
    %v3885 = vpop.f32.mrf.mxu0
    %v3886 = vadd.f32 %v3484, %v3885
    %v3887 = vpop.f32.mrf.mxu0
    %v3888 = vadd.f32 %v3488, %v3887
    %v3889 = vpop.f32.mrf.mxu0
    %v3890 = vadd.f32 %v3484, %v3889
    %v3891 = vpop.f32.mrf.mxu0
    %v3892 = vadd.f32 %v3488, %v3891
    %3893 = vmatprep.mubr.bf16.mxu0 %v3404
    %3894 = vmatmul.mubr.bf16.gmra.mxu0 %v3403
    %v3895 = vpop.f32.mrf.mxu0
    %v3896 = vadd.f32 %v3484, %v3895
    %v3897 = vpop.f32.mrf.mxu0
    %v3898 = vadd.f32 %v3488, %v3897
    %v3899 = vpop.f32.mrf.mxu0
    %v3900 = vadd.f32 %v3484, %v3899
    %v3901 = vpop.f32.mrf.mxu0
    %v3902 = vadd.f32 %v3488, %v3901
    %3903 = vmatprep.mubr.bf16.mxu0 %v3408
    %3904 = vmatmul.mubr.bf16.gmra.mxu0 %v3407
    %v3905 = vpop.f32.mrf.mxu0
    %v3906 = vadd.f32 %v3484, %v3905
    %v3907 = vpop.f32.mrf.mxu0
    %v3908 = vadd.f32 %v3488, %v3907
    %v3909 = vpop.f32.mrf.mxu0
    %v3910 = vadd.f32 %v3484, %v3909
    %v3911 = vpop.f32.mrf.mxu0
    %v3912 = vadd.f32 %v3488, %v3911
    %3913 = vmatprep.mubr.bf16.mxu0 %v3412
    %3914 = vmatmul.mubr.bf16.gmra.mxu0 %v3411
    %v3915 = vpop.f32.mrf.mxu0
    %v3916 = vadd.f32 %v3484, %v3915
    %v3917 = vpop.f32.mrf.mxu0
    %v3918 = vadd.f32 %v3488, %v3917
    %v3919 = vpop.f32.mrf.mxu0
    %v3920 = vadd.f32 %v3484, %v3919
    %v3921 = vpop.f32.mrf.mxu0
    %v3922 = vadd.f32 %v3488, %v3921
    %3923 = vdwg.mxu0
    %3924 = vmatprep.subr.bf16.mxu0 %v3730
    %3925 = vmatpush1.bf16.msra.mxu0 %v3729
    %3926 = vmatprep.subr.bf16.mxu0 %v3728
    %3927 = vmatpush1.bf16.msra.mxu0 %v3727
    %3928 = vmatprep.subr.bf16.mxu0 %v3726
    %3929 = vmatpush1.bf16.msra.mxu0 %v3725
    %3930 = vmatprep.subr.bf16.mxu0 %v3724
    %3931 = vmatpush1.bf16.msra.mxu0 %v3723
    %3932 = vmatprep.subr.bf16.mxu0 %v3722
    %3933 = vmatpush1.bf16.msra.mxu0 %v3721
    %3934 = vmatprep.subr.bf16.mxu0 %v3720
    %3935 = vmatpush1.bf16.msra.mxu0 %v3719
    %3936 = vmatprep.subr.bf16.mxu0 %v3718
    %3937 = vmatpush1.bf16.msra.mxu0 %v3717
    %3938 = vmatprep.subr.bf16.mxu0 %v3716
    %3939 = vmatpush1.bf16.msra.mxu0 %v3715
    %3940 = vmatprep.subr.bf16.mxu0 %v3746
    %3941 = vmatpush2.bf16.msra.mxu0 %v3745
    %3942 = vmatprep.subr.bf16.mxu0 %v3744
    %3943 = vmatpush2.bf16.msra.mxu0 %v3743
    %3944 = vmatprep.subr.bf16.mxu0 %v3742
    %3945 = vmatpush2.bf16.msra.mxu0 %v3741
    %3946 = vmatprep.subr.bf16.mxu0 %v3740
    %3947 = vmatpush2.bf16.msra.mxu0 %v3739
    %3948 = vmatprep.subr.bf16.mxu0 %v3738
    %3949 = vmatpush2.bf16.msra.mxu0 %v3737
    %3950 = vmatprep.subr.bf16.mxu0 %v3736
    %3951 = vmatpush2.bf16.msra.mxu0 %v3735
    %3952 = vmatprep.subr.bf16.mxu0 %v3734
    %3953 = vmatpush2.bf16.msra.mxu0 %v3733
    %3954 = vmatprep.subr.bf16.mxu0 %v3732
    %3955 = vmatpush2.bf16.msra.mxu0 %v3731
    %3956 = vmatprep.mubr.bf16.mxu0 %v3386
    %3957 = vmatmul.mubr.bf16.gmra.mxu0 %v3385
    %v3958 = vpop.f32.mrf.mxu0
    %v3959 = vadd.f32 %v3846, %v3958
    %v3960 = vpop.f32.mrf.mxu0
    %v3961 = vadd.f32 %v3848, %v3960
    %v3962 = vpop.f32.mrf.mxu0
    %v3963 = vadd.f32 %v3850, %v3962
    %v3964 = vpop.f32.mrf.mxu0
    %v3965 = vadd.f32 %v3852, %v3964
    %3966 = vmatprep.mubr.bf16.mxu0 %v3390
    %3967 = vmatmul.mubr.bf16.gmra.mxu0 %v3389
    %v3968 = vpop.f32.mrf.mxu0
    %v3969 = vadd.f32 %v3856, %v3968
    %v3970 = vpop.f32.mrf.mxu0
    %v3971 = vadd.f32 %v3858, %v3970
    %v3972 = vpop.f32.mrf.mxu0
    %v3973 = vadd.f32 %v3860, %v3972
    %v3974 = vpop.f32.mrf.mxu0
    %v3975 = vadd.f32 %v3862, %v3974
    %3976 = vmatprep.mubr.bf16.mxu0 %v3394
    %3977 = vmatmul.mubr.bf16.gmra.mxu0 %v3393
    %v3978 = vpop.f32.mrf.mxu0
    %v3979 = vadd.f32 %v3866, %v3978
    %v3980 = vpop.f32.mrf.mxu0
    %v3981 = vadd.f32 %v3868, %v3980
    %v3982 = vpop.f32.mrf.mxu0
    %v3983 = vadd.f32 %v3870, %v3982
    %v3984 = vpop.f32.mrf.mxu0
    %v3985 = vadd.f32 %v3872, %v3984
    %3986 = vmatprep.mubr.bf16.mxu0 %v3398
    %3987 = vmatmul.mubr.bf16.gmra.mxu0 %v3397
    %v3988 = vpop.f32.mrf.mxu0
    %v3989 = vadd.f32 %v3876, %v3988
    %v3990 = vpop.f32.mrf.mxu0
    %v3991 = vadd.f32 %v3878, %v3990
    %v3992 = vpop.f32.mrf.mxu0
    %v3993 = vadd.f32 %v3880, %v3992
    %v3994 = vpop.f32.mrf.mxu0
    %v3995 = vadd.f32 %v3882, %v3994
    %3996 = vmatprep.mubr.bf16.mxu0 %v3402
    %3997 = vmatmul.mubr.bf16.gmra.mxu0 %v3401
    %v3998 = vpop.f32.mrf.mxu0
    %v3999 = vadd.f32 %v3886, %v3998
    %v4000 = vpop.f32.mrf.mxu0
    %v4001 = vadd.f32 %v3888, %v4000
    %v4002 = vpop.f32.mrf.mxu0
    %v4003 = vadd.f32 %v3890, %v4002
    %v4004 = vpop.f32.mrf.mxu0
    %v4005 = vadd.f32 %v3892, %v4004
    %4006 = vmatprep.mubr.bf16.mxu0 %v3406
    %4007 = vmatmul.mubr.bf16.gmra.mxu0 %v3405
    %v4008 = vpop.f32.mrf.mxu0
    %v4009 = vadd.f32 %v3896, %v4008
    %v4010 = vpop.f32.mrf.mxu0
    %v4011 = vadd.f32 %v3898, %v4010
    %v4012 = vpop.f32.mrf.mxu0
    %v4013 = vadd.f32 %v3900, %v4012
    %v4014 = vpop.f32.mrf.mxu0
    %v4015 = vadd.f32 %v3902, %v4014
    %4016 = vmatprep.mubr.bf16.mxu0 %v3410
    %4017 = vmatmul.mubr.bf16.gmra.mxu0 %v3409
    %v4018 = vpop.f32.mrf.mxu0
    %v4019 = vadd.f32 %v3906, %v4018
    %v4020 = vpop.f32.mrf.mxu0
    %v4021 = vadd.f32 %v3908, %v4020
    %v4022 = vpop.f32.mrf.mxu0
    %v4023 = vadd.f32 %v3910, %v4022
    %v4024 = vpop.f32.mrf.mxu0
    %v4025 = vadd.f32 %v3912, %v4024
    %4026 = vmatprep.mubr.bf16.mxu0 %v3414
    %4027 = vmatmul.mubr.bf16.gmra.mxu0 %v3413
    %v4028 = vpop.f32.mrf.mxu0
    %v4029 = vadd.f32 %v3916, %v4028
    %v4030 = vpop.f32.mrf.mxu0
    %v4031 = vadd.f32 %v3918, %v4030
    %v4032 = vpop.f32.mrf.mxu0
    %v4033 = vadd.f32 %v3920, %v4032
    %v4034 = vpop.f32.mrf.mxu0
    %v4035 = vadd.f32 %v3922, %v4034
    %4036 = vdwg.mxu0
    %v4037 = vxor.u32 %v3959, 2147483648
    %v4038 = vxor.u32 %v3961, 2147483648
    %v4039 = vxor.u32 %v3963, 2147483648
    %v4040 = vxor.u32 %v3965, 2147483648
    %v4041 = vxor.u32 %v3969, 2147483648
    %v4042 = vxor.u32 %v3971, 2147483648
    %v4043 = vxor.u32 %v3973, 2147483648
    %v4044 = vxor.u32 %v3975, 2147483648
    %v4045 = vxor.u32 %v3979, 2147483648
    %v4046 = vxor.u32 %v3981, 2147483648
    %v4047 = vxor.u32 %v3983, 2147483648
    %v4048 = vxor.u32 %v3985, 2147483648
    %v4049 = vxor.u32 %v3989, 2147483648
    %v4050 = vxor.u32 %v3991, 2147483648
    %v4051 = vxor.u32 %v3993, 2147483648
    %v4052 = vxor.u32 %v3995, 2147483648
    %v4053 = vxor.u32 %v3999, 2147483648
    %v4054 = vxor.u32 %v4001, 2147483648
    %v4055 = vxor.u32 %v4003, 2147483648
    %v4056 = vxor.u32 %v4005, 2147483648
    %v4057 = vxor.u32 %v4009, 2147483648
    %v4058 = vxor.u32 %v4011, 2147483648
    %v4059 = vxor.u32 %v4013, 2147483648
    %v4060 = vxor.u32 %v4015, 2147483648
    %v4061 = vxor.u32 %v4019, 2147483648
    %v4062 = vxor.u32 %v4021, 2147483648
    %v4063 = vxor.u32 %v4023, 2147483648
    %v4064 = vxor.u32 %v4025, 2147483648
    %v4065 = vxor.u32 %v4029, 2147483648
    %v4066 = vxor.u32 %v4031, 2147483648
    %v4067 = vxor.u32 %v4033, 2147483648
    %v4068 = vxor.u32 %v4035, 2147483648
    %v4069 = vmul.f32 %v4037, 1.442695
    %v4070 = vpow.pop %v4069
    %v4071 = vmul.f32 %v4038, 1.442695
    %v4072 = vpow.pop %v4071
    %v4073 = vmul.f32 %v4039, 1.442695
    %v4074 = vpow.pop %v4073
    %v4075 = vmul.f32 %v4040, 1.442695
    %v4076 = vpow.pop %v4075
    %v4077 = vmul.f32 %v4041, 1.442695
    %v4078 = vpow.pop %v4077
    %v4079 = vmul.f32 %v4042, 1.442695
    %v4080 = vpow.pop %v4079
    %v4081 = vmul.f32 %v4043, 1.442695
    %v4082 = vpow.pop %v4081
    %v4083 = vmul.f32 %v4044, 1.442695
    %v4084 = vpow.pop %v4083
    %v4085 = vmul.f32 %v4045, 1.442695
    %v4086 = vpow.pop %v4085
    %v4087 = vmul.f32 %v4046, 1.442695
    %v4088 = vpow.pop %v4087
    %v4089 = vmul.f32 %v4047, 1.442695
    %v4090 = vpow.pop %v4089
    %v4091 = vmul.f32 %v4048, 1.442695
    %v4092 = vpow.pop %v4091
    %v4093 = vmul.f32 %v4049, 1.442695
    %v4094 = vpow.pop %v4093
    %v4095 = vmul.f32 %v4050, 1.442695
    %v4096 = vpow.pop %v4095
    %v4097 = vmul.f32 %v4051, 1.442695
    %v4098 = vpow.pop %v4097
    %v4099 = vmul.f32 %v4052, 1.442695
    %v4100 = vpow.pop %v4099
    %v4101 = vmul.f32 %v4053, 1.442695
    %v4102 = vpow.pop %v4101
    %v4103 = vmul.f32 %v4054, 1.442695
    %v4104 = vpow.pop %v4103
    %v4105 = vmul.f32 %v4055, 1.442695
    %v4106 = vpow.pop %v4105
    %v4107 = vmul.f32 %v4056, 1.442695
    %v4108 = vpow.pop %v4107
    %v4109 = vmul.f32 %v4057, 1.442695
    %v4110 = vpow.pop %v4109
    %v4111 = vmul.f32 %v4058, 1.442695
    %v4112 = vpow.pop %v4111
    %v4113 = vmul.f32 %v4059, 1.442695
    %v4114 = vpow.pop %v4113
    %v4115 = vmul.f32 %v4060, 1.442695
    %v4116 = vpow.pop %v4115
    %v4117 = vmul.f32 %v4061, 1.442695
    %v4118 = vpow.pop %v4117
    %v4119 = vmul.f32 %v4062, 1.442695
    %v4120 = vpow.pop %v4119
    %v4121 = vmul.f32 %v4063, 1.442695
    %v4122 = vpow.pop %v4121
    %v4123 = vmul.f32 %v4064, 1.442695
    %v4124 = vpow.pop %v4123
    %v4125 = vmul.f32 %v4065, 1.442695
    %v4126 = vpow.pop %v4125
    %v4127 = vmul.f32 %v4066, 1.442695
    %v4128 = vpow.pop %v4127
    %v4129 = vmul.f32 %v4067, 1.442695
    %v4130 = vpow.pop %v4129
    %v4131 = vmul.f32 %v4068, 1.442695
    %v4132 = vpow.pop %v4131
    %v4133 = vadd.f32 %v4070, 1.0
    %v4134 = vadd.f32 %v4072, 1.0
    %v4135 = vadd.f32 %v4074, 1.0
    %v4136 = vadd.f32 %v4076, 1.0
    %v4137 = vadd.f32 %v4078, 1.0
    %v4138 = vadd.f32 %v4080, 1.0
    %v4139 = vadd.f32 %v4082, 1.0
    %v4140 = vadd.f32 %v4084, 1.0
    %v4141 = vadd.f32 %v4086, 1.0
    %v4142 = vadd.f32 %v4088, 1.0
    %v4143 = vadd.f32 %v4090, 1.0
    %v4144 = vadd.f32 %v4092, 1.0
    %v4145 = vadd.f32 %v4094, 1.0
    %v4146 = vadd.f32 %v4096, 1.0
    %v4147 = vadd.f32 %v4098, 1.0
    %v4148 = vadd.f32 %v4100, 1.0
    %v4149 = vadd.f32 %v4102, 1.0
    %v4150 = vadd.f32 %v4104, 1.0
    %v4151 = vadd.f32 %v4106, 1.0
    %v4152 = vadd.f32 %v4108, 1.0
    %v4153 = vadd.f32 %v4110, 1.0
    %v4154 = vadd.f32 %v4112, 1.0
    %v4155 = vadd.f32 %v4114, 1.0
    %v4156 = vadd.f32 %v4116, 1.0
    %v4157 = vadd.f32 %v4118, 1.0
    %v4158 = vadd.f32 %v4120, 1.0
    %v4159 = vadd.f32 %v4122, 1.0
    %v4160 = vadd.f32 %v4124, 1.0
    %v4161 = vadd.f32 %v4126, 1.0
    %v4162 = vadd.f32 %v4128, 1.0
    %v4163 = vadd.f32 %v4130, 1.0
    %v4164 = vadd.f32 %v4132, 1.0
    %v4165 = vrcp.pop %v4133
    %v4166 = vmul.f32 1.0, %v4165
    %v4167 = vrcp.pop %v4134
    %v4168 = vmul.f32 1.0, %v4167
    %v4169 = vrcp.pop %v4135
    %v4170 = vmul.f32 1.0, %v4169
    %v4171 = vrcp.pop %v4136
    %v4172 = vmul.f32 1.0, %v4171
    %v4173 = vrcp.pop %v4137
    %v4174 = vmul.f32 1.0, %v4173
    %v4175 = vrcp.pop %v4138
    %v4176 = vmul.f32 1.0, %v4175
    %v4177 = vrcp.pop %v4139
    %v4178 = vmul.f32 1.0, %v4177
    %v4179 = vrcp.pop %v4140
    %v4180 = vmul.f32 1.0, %v4179
    %v4181 = vrcp.pop %v4141
    %v4182 = vmul.f32 1.0, %v4181
    %v4183 = vrcp.pop %v4142
    %v4184 = vmul.f32 1.0, %v4183
    %v4185 = vrcp.pop %v4143
    %v4186 = vmul.f32 1.0, %v4185
    %v4187 = vrcp.pop %v4144
    %v4188 = vmul.f32 1.0, %v4187
    %v4189 = vrcp.pop %v4145
    %v4190 = vmul.f32 1.0, %v4189
    %v4191 = vrcp.pop %v4146
    %v4192 = vmul.f32 1.0, %v4191
    %v4193 = vrcp.pop %v4147
    %v4194 = vmul.f32 1.0, %v4193
    %v4195 = vrcp.pop %v4148
    %v4196 = vmul.f32 1.0, %v4195
    %v4197 = vrcp.pop %v4149
    %v4198 = vmul.f32 1.0, %v4197
    %v4199 = vrcp.pop %v4150
    %v4200 = vmul.f32 1.0, %v4199
    %v4201 = vrcp.pop %v4151
    %v4202 = vmul.f32 1.0, %v4201
    %v4203 = vrcp.pop %v4152
    %v4204 = vmul.f32 1.0, %v4203
    %v4205 = vrcp.pop %v4153
    %v4206 = vmul.f32 1.0, %v4205
    %v4207 = vrcp.pop %v4154
    %v4208 = vmul.f32 1.0, %v4207
    %v4209 = vrcp.pop %v4155
    %v4210 = vmul.f32 1.0, %v4209
    %v4211 = vrcp.pop %v4156
    %v4212 = vmul.f32 1.0, %v4211
    %v4213 = vrcp.pop %v4157
    %v4214 = vmul.f32 1.0, %v4213
    %v4215 = vrcp.pop %v4158
    %v4216 = vmul.f32 1.0, %v4215
    %v4217 = vrcp.pop %v4159
    %v4218 = vmul.f32 1.0, %v4217
    %v4219 = vrcp.pop %v4160
    %v4220 = vmul.f32 1.0, %v4219
    %v4221 = vrcp.pop %v4161
    %v4222 = vmul.f32 1.0, %v4221
    %v4223 = vrcp.pop %v4162
    %v4224 = vmul.f32 1.0, %v4223
    %v4225 = vrcp.pop %v4163
    %v4226 = vmul.f32 1.0, %v4225
    %v4227 = vrcp.pop %v4164
    %v4228 = vmul.f32 1.0, %v4227
    %v4229 = vpack.c.bf16 %v4170, %v4166
    %v4230 = vpack.c.bf16 %v4172, %v4168
    %v4231 = vpack.c.bf16 %v4178, %v4174
    %v4232 = vpack.c.bf16 %v4180, %v4176
    %v4233 = vpack.c.bf16 %v4186, %v4182
    %v4234 = vpack.c.bf16 %v4188, %v4184
    %v4235 = vpack.c.bf16 %v4194, %v4190
    %v4236 = vpack.c.bf16 %v4196, %v4192
    %v4237 = vpack.c.bf16 %v4202, %v4198
    %v4238 = vpack.c.bf16 %v4204, %v4200
    %v4239 = vpack.c.bf16 %v4210, %v4206
    %v4240 = vpack.c.bf16 %v4212, %v4208
    %v4241 = vpack.c.bf16 %v4218, %v4214
    %v4242 = vpack.c.bf16 %v4220, %v4216
    %v4243 = vpack.c.bf16 %v4226, %v4222
    %v4244 = vpack.c.bf16 %v4228, %v4224
    %v4245 = vld [vmem:[#allocation10] sm:$0xf]
    %v4246 = vld [vmem:[#allocation10 + $0x4] sm:$0xf]
    %v4247 = vld [vmem:[#allocation10 + $0x8] sm:$0xf]
    %v4248 = vld [vmem:[#allocation10 + $0xc] sm:$0xf]
    %v4249 = vld [vmem:[#allocation10 + $0x10] sm:$0xf]
    %v4250 = vld [vmem:[#allocation10 + $0x14] sm:$0xf]
    %v4251 = vld [vmem:[#allocation10 + $0x18] sm:$0xf]
    %v4252 = vld [vmem:[#allocation10 + $0x1c] sm:$0xf]
    %v4253 = vld [vmem:[#allocation10 + $0x20] sm:$0xf]
    %v4254 = vld [vmem:[#allocation10 + $0x24] sm:$0xf]
    %v4255 = vld [vmem:[#allocation10 + $0x28] sm:$0xf]
    %v4256 = vld [vmem:[#allocation10 + $0x2c] sm:$0xf]
    %v4257 = vld [vmem:[#allocation10 + $0x30] sm:$0xf]
    %v4258 = vld [vmem:[#allocation10 + $0x34] sm:$0xf]
    %v4259 = vld [vmem:[#allocation10 + $0x38] sm:$0xf]
    %v4260 = vld [vmem:[#allocation10 + $0x3c] sm:$0xf]
    %v4261 = vld [vmem:[#allocation10 + $0x40] sm:$0xf]
    %v4262 = vld [vmem:[#allocation10 + $0x44] sm:$0xf]
    %v4263 = vld [vmem:[#allocation10 + $0x48] sm:$0xf]
    %v4264 = vld [vmem:[#allocation10 + $0x4c] sm:$0xf]
    %v4265 = vld [vmem:[#allocation10 + $0x50] sm:$0xf]
    %v4266 = vld [vmem:[#allocation10 + $0x54] sm:$0xf]
    %v4267 = vld [vmem:[#allocation10 + $0x58] sm:$0xf]
    %v4268 = vld [vmem:[#allocation10 + $0x5c] sm:$0xf]
    %v4269 = vld [vmem:[#allocation10 + $0x60] sm:$0xf]
    %v4270 = vld [vmem:[#allocation10 + $0x64] sm:$0xf]
    %v4271 = vld [vmem:[#allocation10 + $0x68] sm:$0xf]
    %v4272 = vld [vmem:[#allocation10 + $0x6c] sm:$0xf]
    %v4273 = vld [vmem:[#allocation10 + $0x70] sm:$0xf]
    %v4274 = vld [vmem:[#allocation10 + $0x74] sm:$0xf]
    %v4275 = vld [vmem:[#allocation10 + $0x78] sm:$0xf]
    %v4276 = vld [vmem:[#allocation10 + $0x7c] sm:$0xf]
    %v4277 = vld [vmem:[%s6] sm:$0x1]
    %v4279 = vlaneseq
    %v4280 = vshrl.u32 %v4279, 7
    %v4281 = vsub.s32 0, %v4280
    %v4282 = vrot.slane %v4277, %v4281
    %v4316 = vunpack.c.l.b16 %v4245
    %v4317 = vunpack.c.l.b16 %v4246
    %v4318 = vunpack.c.l.b16 %v4247
    %v4319 = vunpack.c.l.b16 %v4248
    %v4320 = vunpack.c.l.b16 %v4249
    %v4321 = vunpack.c.l.b16 %v4250
    %v4322 = vunpack.c.l.b16 %v4251
    %v4323 = vunpack.c.l.b16 %v4252
    %v4324 = vunpack.c.l.b16 %v4253
    %v4325 = vunpack.c.l.b16 %v4254
    %v4326 = vunpack.c.l.b16 %v4255
    %v4327 = vunpack.c.l.b16 %v4256
    %v4328 = vunpack.c.l.b16 %v4257
    %v4329 = vunpack.c.l.b16 %v4258
    %v4330 = vunpack.c.l.b16 %v4259
    %v4331 = vunpack.c.l.b16 %v4260
    %v4332 = vunpack.c.l.b16 %v4261
    %v4333 = vunpack.c.l.b16 %v4262
    %v4334 = vunpack.c.l.b16 %v4263
    %v4335 = vunpack.c.l.b16 %v4264
    %v4336 = vunpack.c.l.b16 %v4265
    %v4337 = vunpack.c.l.b16 %v4266
    %v4338 = vunpack.c.l.b16 %v4267
    %v4339 = vunpack.c.l.b16 %v4268
    %v4340 = vunpack.c.l.b16 %v4269
    %v4341 = vunpack.c.l.b16 %v4270
    %v4342 = vunpack.c.l.b16 %v4271
    %v4343 = vunpack.c.l.b16 %v4272
    %v4344 = vunpack.c.l.b16 %v4273
    %v4345 = vunpack.c.l.b16 %v4274
    %v4346 = vunpack.c.l.b16 %v4275
    %v4347 = vunpack.c.l.b16 %v4276
    %v4348 = vpack.c.b16 %v4317, %v4316
    %v4349 = vpack.c.b16 %v4319, %v4318
    %v4350 = vpack.c.b16 %v4321, %v4320
    %v4351 = vpack.c.b16 %v4323, %v4322
    %v4352 = vpack.c.b16 %v4325, %v4324
    %v4353 = vpack.c.b16 %v4327, %v4326
    %v4354 = vpack.c.b16 %v4329, %v4328
    %v4355 = vpack.c.b16 %v4331, %v4330
    %v4356 = vpack.c.b16 %v4333, %v4332
    %v4357 = vpack.c.b16 %v4335, %v4334
    %v4358 = vpack.c.b16 %v4337, %v4336
    %v4359 = vpack.c.b16 %v4339, %v4338
    %v4360 = vpack.c.b16 %v4341, %v4340
    %v4361 = vpack.c.b16 %v4343, %v4342
    %v4362 = vpack.c.b16 %v4345, %v4344
    %v4363 = vpack.c.b16 %v4347, %v4346
    %4380 = vmatprep.subr.bf16.mxu0 0
    %4381 = vmatpush1.bf16.msra.mxu0 %v4355
    %4382 = vmatprep.subr.bf16.mxu0 0
    %4383 = vmatpush1.bf16.msra.mxu0 %v4354
    %4384 = vmatprep.subr.bf16.mxu0 0
    %4385 = vmatpush1.bf16.msra.mxu0 %v4353
    %4386 = vmatprep.subr.bf16.mxu0 0
    %4387 = vmatpush1.bf16.msra.mxu0 %v4352
    %4388 = vmatprep.subr.bf16.mxu0 0
    %4389 = vmatpush1.bf16.msra.mxu0 %v4351
    %4390 = vmatprep.subr.bf16.mxu0 0
    %4391 = vmatpush1.bf16.msra.mxu0 %v4350
    %4392 = vmatprep.subr.bf16.mxu0 0
    %4393 = vmatpush1.bf16.msra.mxu0 %v4349
    %4394 = vmatprep.subr.bf16.mxu0 0
    %4395 = vmatpush1.bf16.msra.mxu0 %v4348
    %4396 = vmatprep.subr.bf16.mxu0 0
    %4397 = vmatpush2.bf16.msra.mxu0 %v4363
    %4398 = vmatprep.subr.bf16.mxu0 0
    %4399 = vmatpush2.bf16.msra.mxu0 %v4362
    %4400 = vmatprep.subr.bf16.mxu0 0
    %4401 = vmatpush2.bf16.msra.mxu0 %v4361
    %4402 = vmatprep.subr.bf16.mxu0 0
    %4403 = vmatpush2.bf16.msra.mxu0 %v4360
    %4404 = vmatprep.subr.bf16.mxu0 0
    %4405 = vmatpush2.bf16.msra.mxu0 %v4359
    %4406 = vmatprep.subr.bf16.mxu0 0
    %4407 = vmatpush2.bf16.msra.mxu0 %v4358
    %4408 = vmatprep.subr.bf16.mxu0 0
    %4409 = vmatpush2.bf16.msra.mxu0 %v4357
    %4410 = vmatprep.subr.bf16.mxu0 0
    %4411 = vmatpush2.bf16.msra.mxu0 %v4356
    %4412 = vmatprep.mubr.bf16.mxu0 %v4230
    %4413 = vmatmul.mubr.bf16.gmra.mxu0 %v4229
    %v4414 = vpop.f32.mrf.mxu0
    %v4415 = vadd.f32 %v4282, %v4414
    %v4416 = vpop.f32.mrf.mxu0
    %v4417 = vpop.f32.mrf.mxu0
    %v4418 = vadd.f32 %v4282, %v4417
    %v4419 = vpop.f32.mrf.mxu0
    %4420 = vmatprep.mubr.bf16.mxu0 %v4232
    %4421 = vmatmul.mubr.bf16.gmra.mxu0 %v4231
    %v4422 = vpop.f32.mrf.mxu0
    %v4423 = vadd.f32 %v4282, %v4422
    %v4424 = vpop.f32.mrf.mxu0
    %v4425 = vpop.f32.mrf.mxu0
    %v4426 = vadd.f32 %v4282, %v4425
    %v4427 = vpop.f32.mrf.mxu0
    %4428 = vmatprep.mubr.bf16.mxu0 %v4234
    %4429 = vmatmul.mubr.bf16.gmra.mxu0 %v4233
    %v4430 = vpop.f32.mrf.mxu0
    %v4431 = vadd.f32 %v4282, %v4430
    %v4432 = vpop.f32.mrf.mxu0
    %v4433 = vpop.f32.mrf.mxu0
    %v4434 = vadd.f32 %v4282, %v4433
    %v4435 = vpop.f32.mrf.mxu0
    %4436 = vmatprep.mubr.bf16.mxu0 %v4236
    %4437 = vmatmul.mubr.bf16.gmra.mxu0 %v4235
    %v4438 = vpop.f32.mrf.mxu0
    %v4439 = vadd.f32 %v4282, %v4438
    %v4440 = vpop.f32.mrf.mxu0
    %v4441 = vpop.f32.mrf.mxu0
    %v4442 = vadd.f32 %v4282, %v4441
    %v4443 = vpop.f32.mrf.mxu0
    %4444 = vmatprep.mubr.bf16.mxu0 %v4238
    %4445 = vmatmul.mubr.bf16.gmra.mxu0 %v4237
    %v4446 = vpop.f32.mrf.mxu0
    %v4447 = vadd.f32 %v4282, %v4446
    %v4448 = vpop.f32.mrf.mxu0
    %v4449 = vpop.f32.mrf.mxu0
    %v4450 = vadd.f32 %v4282, %v4449
    %v4451 = vpop.f32.mrf.mxu0
    %4452 = vmatprep.mubr.bf16.mxu0 %v4240
    %4453 = vmatmul.mubr.bf16.gmra.mxu0 %v4239
    %v4454 = vpop.f32.mrf.mxu0
    %v4455 = vadd.f32 %v4282, %v4454
    %v4456 = vpop.f32.mrf.mxu0
    %v4457 = vpop.f32.mrf.mxu0
    %v4458 = vadd.f32 %v4282, %v4457
    %v4459 = vpop.f32.mrf.mxu0
    %4460 = vmatprep.mubr.bf16.mxu0 %v4242
    %4461 = vmatmul.mubr.bf16.gmra.mxu0 %v4241
    %v4462 = vpop.f32.mrf.mxu0
    %v4463 = vadd.f32 %v4282, %v4462
    %v4464 = vpop.f32.mrf.mxu0
    %v4465 = vpop.f32.mrf.mxu0
    %v4466 = vadd.f32 %v4282, %v4465
    %v4467 = vpop.f32.mrf.mxu0
    %4468 = vmatprep.mubr.bf16.mxu0 %v4244
    %4469 = vmatmul.mubr.bf16.gmra.mxu0 %v4243
    %v4470 = vpop.f32.mrf.mxu0
    %v4471 = vadd.f32 %v4282, %v4470
    %v4472 = vpop.f32.mrf.mxu0
    %v4473 = vpop.f32.mrf.mxu0
    %v4474 = vadd.f32 %v4282, %v4473
    %v4475 = vpop.f32.mrf.mxu0
    %4476 = vdwg.mxu0
    %v4477 = vxor.u32 %v4415, 2147483648
    %v4478 = vxor.u32 %v4418, 2147483648
    %v4479 = vxor.u32 %v4423, 2147483648
    %v4480 = vxor.u32 %v4426, 2147483648
    %v4481 = vxor.u32 %v4431, 2147483648
    %v4482 = vxor.u32 %v4434, 2147483648
    %v4483 = vxor.u32 %v4439, 2147483648
    %v4484 = vxor.u32 %v4442, 2147483648
    %v4485 = vxor.u32 %v4447, 2147483648
    %v4486 = vxor.u32 %v4450, 2147483648
    %v4487 = vxor.u32 %v4455, 2147483648
    %v4488 = vxor.u32 %v4458, 2147483648
    %v4489 = vxor.u32 %v4463, 2147483648
    %v4490 = vxor.u32 %v4466, 2147483648
    %v4491 = vxor.u32 %v4471, 2147483648
    %v4492 = vxor.u32 %v4474, 2147483648
    %v4493 = vmul.f32 %v4477, 1.442695
    %v4494 = vpow.pop %v4493
    %v4495 = vmul.f32 %v4478, 1.442695
    %v4496 = vpow.pop %v4495
    %v4497 = vmul.f32 %v4479, 1.442695
    %v4498 = vpow.pop %v4497
    %v4499 = vmul.f32 %v4480, 1.442695
    %v4500 = vpow.pop %v4499
    %v4501 = vmul.f32 %v4481, 1.442695
    %v4502 = vpow.pop %v4501
    %v4503 = vmul.f32 %v4482, 1.442695
    %v4504 = vpow.pop %v4503
    %v4505 = vmul.f32 %v4483, 1.442695
    %v4506 = vpow.pop %v4505
    %v4507 = vmul.f32 %v4484, 1.442695
    %v4508 = vpow.pop %v4507
    %v4509 = vmul.f32 %v4485, 1.442695
    %v4510 = vpow.pop %v4509
    %v4511 = vmul.f32 %v4486, 1.442695
    %v4512 = vpow.pop %v4511
    %v4513 = vmul.f32 %v4487, 1.442695
    %v4514 = vpow.pop %v4513
    %v4515 = vmul.f32 %v4488, 1.442695
    %v4516 = vpow.pop %v4515
    %v4517 = vmul.f32 %v4489, 1.442695
    %v4518 = vpow.pop %v4517
    %v4519 = vmul.f32 %v4490, 1.442695
    %v4520 = vpow.pop %v4519
    %v4521 = vmul.f32 %v4491, 1.442695
    %v4522 = vpow.pop %v4521
    %v4523 = vmul.f32 %v4492, 1.442695
    %v4524 = vpow.pop %v4523
    %v4525 = vadd.f32 %v4494, 1.0
    %v4526 = vadd.f32 %v4496, 1.0
    %v4527 = vadd.f32 %v4498, 1.0
    %v4528 = vadd.f32 %v4500, 1.0
    %v4529 = vadd.f32 %v4502, 1.0
    %v4530 = vadd.f32 %v4504, 1.0
    %v4531 = vadd.f32 %v4506, 1.0
    %v4532 = vadd.f32 %v4508, 1.0
    %v4533 = vadd.f32 %v4510, 1.0
    %v4534 = vadd.f32 %v4512, 1.0
    %v4535 = vadd.f32 %v4514, 1.0
    %v4536 = vadd.f32 %v4516, 1.0
    %v4537 = vadd.f32 %v4518, 1.0
    %v4538 = vadd.f32 %v4520, 1.0
    %v4539 = vadd.f32 %v4522, 1.0
    %v4540 = vadd.f32 %v4524, 1.0
    %v4541 = vrcp.pop %v4525
    %v4542 = vmul.f32 1.0, %v4541
    %v4543 = vrcp.pop %v4526
    %v4544 = vmul.f32 1.0, %v4543
    %v4545 = vrcp.pop %v4527
    %v4546 = vmul.f32 1.0, %v4545
    %v4547 = vrcp.pop %v4528
    %v4548 = vmul.f32 1.0, %v4547
    %v4549 = vrcp.pop %v4529
    %v4550 = vmul.f32 1.0, %v4549
    %v4551 = vrcp.pop %v4530
    %v4552 = vmul.f32 1.0, %v4551
    %v4553 = vrcp.pop %v4531
    %v4554 = vmul.f32 1.0, %v4553
    %v4555 = vrcp.pop %v4532
    %v4556 = vmul.f32 1.0, %v4555
    %v4557 = vrcp.pop %v4533
    %v4558 = vmul.f32 1.0, %v4557
    %v4559 = vrcp.pop %v4534
    %v4560 = vmul.f32 1.0, %v4559
    %v4561 = vrcp.pop %v4535
    %v4562 = vmul.f32 1.0, %v4561
    %v4563 = vrcp.pop %v4536
    %v4564 = vmul.f32 1.0, %v4563
    %v4565 = vrcp.pop %v4537
    %v4566 = vmul.f32 1.0, %v4565
    %v4567 = vrcp.pop %v4538
    %v4568 = vmul.f32 1.0, %v4567
    %v4569 = vrcp.pop %v4539
    %v4570 = vmul.f32 1.0, %v4569
    %v4571 = vrcp.pop %v4540
    %v4572 = vmul.f32 1.0, %v4571
    %v4573 = vpack.c.bf16 %v4544, %v4542
    %v4574 = vpack.c.bf16 %v4548, %v4546
    %v4575 = vpack.c.bf16 %v4552, %v4550
    %v4576 = vpack.c.bf16 %v4556, %v4554
    %v4577 = vpack.c.bf16 %v4560, %v4558
    %v4578 = vpack.c.bf16 %v4564, %v4562
    %v4579 = vpack.c.bf16 %v4568, %v4566
    %v4580 = vpack.c.bf16 %v4572, %v4570
    %v4581 = vld [vmem:[#allocation11] sm:$0xf]
    %v4582 = vld [vmem:[#allocation11 + $0x4] sm:$0xf]
    %v4583 = vld [vmem:[#allocation11 + $0x8] sm:$0xf]
    %v4584 = vld [vmem:[#allocation11 + $0xc] sm:$0xf]
    %v4585 = vld [vmem:[#allocation11 + $0x10] sm:$0xf]
    %v4586 = vld [vmem:[#allocation11 + $0x14] sm:$0xf]
    %v4587 = vld [vmem:[#allocation11 + $0x18] sm:$0xf]
    %v4588 = vld [vmem:[#allocation11 + $0x1c] sm:$0xf]
    %v4589 = vld [vmem:[#allocation11 + $0x20] sm:$0xf]
    %v4590 = vld [vmem:[#allocation11 + $0x24] sm:$0xf]
    %v4591 = vld [vmem:[#allocation11 + $0x28] sm:$0xf]
    %v4592 = vld [vmem:[#allocation11 + $0x2c] sm:$0xf]
    %v4593 = vld [vmem:[#allocation11 + $0x30] sm:$0xf]
    %v4594 = vld [vmem:[#allocation11 + $0x34] sm:$0xf]
    %v4595 = vld [vmem:[#allocation11 + $0x38] sm:$0xf]
    %v4596 = vld [vmem:[#allocation11 + $0x3c] sm:$0xf]
    %v4597 = vld [vmem:[%s8] sm:$0x1]
    %v4599 = vlaneseq
    %v4600 = vshrl.u32 %v4599, 7
    %v4601 = vsub.s32 0, %v4600
    %v4602 = vrot.slane %v4597, %v4601
    %v4620 = vunpack.c.l.b16 %v4581
    %v4621 = vunpack.c.l.b16 %v4582
    %v4622 = vunpack.c.l.b16 %v4583
    %v4623 = vunpack.c.l.b16 %v4584
    %v4624 = vunpack.c.l.b16 %v4585
    %v4625 = vunpack.c.l.b16 %v4586
    %v4626 = vunpack.c.l.b16 %v4587
    %v4627 = vunpack.c.l.b16 %v4588
    %v4628 = vunpack.c.l.b16 %v4589
    %v4629 = vunpack.c.l.b16 %v4590
    %v4630 = vunpack.c.l.b16 %v4591
    %v4631 = vunpack.c.l.b16 %v4592
    %v4632 = vunpack.c.l.b16 %v4593
    %v4633 = vunpack.c.l.b16 %v4594
    %v4634 = vunpack.c.l.b16 %v4595
    %v4635 = vunpack.c.l.b16 %v4596
    %v4636 = vpack.c.b16 %v4621, %v4620
    %v4637 = vpack.c.b16 %v4623, %v4622
    %v4638 = vpack.c.b16 %v4625, %v4624
    %v4639 = vpack.c.b16 %v4627, %v4626
    %v4640 = vpack.c.b16 %v4629, %v4628
    %v4641 = vpack.c.b16 %v4631, %v4630
    %v4642 = vpack.c.b16 %v4633, %v4632
    %v4643 = vpack.c.b16 %v4635, %v4634
    %4652 = vmatprep.subr.bf16.mxu0 0
    %4653 = vmatpush1.bf16.msra.mxu0 %v4643
    %4654 = vmatprep.subr.bf16.mxu0 0
    %4655 = vmatpush1.bf16.msra.mxu0 %v4642
    %4656 = vmatprep.subr.bf16.mxu0 0
    %4657 = vmatpush1.bf16.msra.mxu0 %v4641
    %4658 = vmatprep.subr.bf16.mxu0 0
    %4659 = vmatpush1.bf16.msra.mxu0 %v4640
    %4660 = vmatprep.subr.bf16.mxu0 0
    %4661 = vmatpush1.bf16.msra.mxu0 %v4639
    %4662 = vmatprep.subr.bf16.mxu0 0
    %4663 = vmatpush1.bf16.msra.mxu0 %v4638
    %4664 = vmatprep.subr.bf16.mxu0 0
    %4665 = vmatpush1.bf16.msra.mxu0 %v4637
    %4666 = vmatprep.subr.bf16.mxu0 0
    %4667 = vmatpush1.bf16.msra.mxu0 %v4636
    %4668 = vmatprep.subr.bf16.mxu0 0
    %4669 = vmatpush2.bf16.msra.mxu0 0
    %4670 = vmatprep.subr.bf16.mxu0 0
    %4671 = vmatpush2.bf16.msra.mxu0 0
    %4672 = vmatprep.subr.bf16.mxu0 0
    %4673 = vmatpush2.bf16.msra.mxu0 0
    %4674 = vmatprep.subr.bf16.mxu0 0
    %4675 = vmatpush2.bf16.msra.mxu0 0
    %4676 = vmatprep.subr.bf16.mxu0 0
    %4677 = vmatpush2.bf16.msra.mxu0 0
    %4678 = vmatprep.subr.bf16.mxu0 0
    %4679 = vmatpush2.bf16.msra.mxu0 0
    %4680 = vmatprep.subr.bf16.mxu0 0
    %4681 = vmatpush2.bf16.msra.mxu0 0
    %4682 = vmatprep.subr.bf16.mxu0 0
    %4683 = vmatpush2.bf16.msra.mxu0 0
    %4684 = vmatprep.mubr.bf16.mxu0 0
    %4685 = vmatmul.mubr.bf16.gmra.mxu0 %v4573
    %v4686 = vpop.f32.mrf.mxu0
    %v4687 = vadd.f32 %v4602, %v4686
    %v4688 = vpop.f32.mrf.mxu0
    %v4689 = vpop.f32.mrf.mxu0
    %v4690 = vadd.f32 %v4602, %v4689
    %v4691 = vpop.f32.mrf.mxu0
    %4692 = vmatprep.mubr.bf16.mxu0 0
    %4693 = vmatmul.mubr.bf16.gmra.mxu0 %v4574
    %v4694 = vpop.f32.mrf.mxu0
    %v4695 = vadd.f32 %v4602, %v4694
    %v4696 = vpop.f32.mrf.mxu0
    %v4697 = vpop.f32.mrf.mxu0
    %v4698 = vadd.f32 %v4602, %v4697
    %v4699 = vpop.f32.mrf.mxu0
    %4700 = vmatprep.mubr.bf16.mxu0 0
    %4701 = vmatmul.mubr.bf16.gmra.mxu0 %v4575
    %v4702 = vpop.f32.mrf.mxu0
    %v4703 = vadd.f32 %v4602, %v4702
    %v4704 = vpop.f32.mrf.mxu0
    %v4705 = vpop.f32.mrf.mxu0
    %v4706 = vadd.f32 %v4602, %v4705
    %v4707 = vpop.f32.mrf.mxu0
    %4708 = vmatprep.mubr.bf16.mxu0 0
    %4709 = vmatmul.mubr.bf16.gmra.mxu0 %v4576
    %v4710 = vpop.f32.mrf.mxu0
    %v4711 = vadd.f32 %v4602, %v4710
    %v4712 = vpop.f32.mrf.mxu0
    %v4713 = vpop.f32.mrf.mxu0
    %v4714 = vadd.f32 %v4602, %v4713
    %v4715 = vpop.f32.mrf.mxu0
    %4716 = vmatprep.mubr.bf16.mxu0 0
    %4717 = vmatmul.mubr.bf16.gmra.mxu0 %v4577
    %v4718 = vpop.f32.mrf.mxu0
    %v4719 = vadd.f32 %v4602, %v4718
    %v4720 = vpop.f32.mrf.mxu0
    %v4721 = vpop.f32.mrf.mxu0
    %v4722 = vadd.f32 %v4602, %v4721
    %v4723 = vpop.f32.mrf.mxu0
    %4724 = vmatprep.mubr.bf16.mxu0 0
    %4725 = vmatmul.mubr.bf16.gmra.mxu0 %v4578
    %v4726 = vpop.f32.mrf.mxu0
    %v4727 = vadd.f32 %v4602, %v4726
    %v4728 = vpop.f32.mrf.mxu0
    %v4729 = vpop.f32.mrf.mxu0
    %v4730 = vadd.f32 %v4602, %v4729
    %v4731 = vpop.f32.mrf.mxu0
    %4732 = vmatprep.mubr.bf16.mxu0 0
    %4733 = vmatmul.mubr.bf16.gmra.mxu0 %v4579
    %v4734 = vpop.f32.mrf.mxu0
    %v4735 = vadd.f32 %v4602, %v4734
    %v4736 = vpop.f32.mrf.mxu0
    %v4737 = vpop.f32.mrf.mxu0
    %v4738 = vadd.f32 %v4602, %v4737
    %v4739 = vpop.f32.mrf.mxu0
    %4740 = vmatprep.mubr.bf16.mxu0 0
    %4741 = vmatmul.mubr.bf16.gmra.mxu0 %v4580
    %v4742 = vpop.f32.mrf.mxu0
    %v4743 = vadd.f32 %v4602, %v4742
    %v4744 = vpop.f32.mrf.mxu0
    %v4745 = vpop.f32.mrf.mxu0
    %v4746 = vadd.f32 %v4602, %v4745
    %v4747 = vpop.f32.mrf.mxu0
    %4748 = vdwg.mxu0
    %v4749 = vxor.u32 %v4687, 2147483648
    %v4750 = vxor.u32 %v4690, 2147483648
    %v4751 = vxor.u32 %v4695, 2147483648
    %v4752 = vxor.u32 %v4698, 2147483648
    %v4753 = vxor.u32 %v4703, 2147483648
    %v4754 = vxor.u32 %v4706, 2147483648
    %v4755 = vxor.u32 %v4711, 2147483648
    %v4756 = vxor.u32 %v4714, 2147483648
    %v4757 = vxor.u32 %v4719, 2147483648
    %v4758 = vxor.u32 %v4722, 2147483648
    %v4759 = vxor.u32 %v4727, 2147483648
    %v4760 = vxor.u32 %v4730, 2147483648
    %v4761 = vxor.u32 %v4735, 2147483648
    %v4762 = vxor.u32 %v4738, 2147483648
    %v4763 = vxor.u32 %v4743, 2147483648
    %v4764 = vxor.u32 %v4746, 2147483648
    %v4765 = vmul.f32 %v4749, 1.442695
    %v4766 = vpow.pop %v4765
    %v4767 = vmul.f32 %v4750, 1.442695
    %v4768 = vpow.pop %v4767
    %v4769 = vmul.f32 %v4751, 1.442695
    %v4770 = vpow.pop %v4769
    %v4771 = vmul.f32 %v4752, 1.442695
    %v4772 = vpow.pop %v4771
    %v4773 = vmul.f32 %v4753, 1.442695
    %v4774 = vpow.pop %v4773
    %v4775 = vmul.f32 %v4754, 1.442695
    %v4776 = vpow.pop %v4775
    %v4777 = vmul.f32 %v4755, 1.442695
    %v4778 = vpow.pop %v4777
    %v4779 = vmul.f32 %v4756, 1.442695
    %v4780 = vpow.pop %v4779
    %v4781 = vmul.f32 %v4757, 1.442695
    %v4782 = vpow.pop %v4781
    %v4783 = vmul.f32 %v4758, 1.442695
    %v4784 = vpow.pop %v4783
    %v4785 = vmul.f32 %v4759, 1.442695
    %v4786 = vpow.pop %v4785
    %v4787 = vmul.f32 %v4760, 1.442695
    %v4788 = vpow.pop %v4787
    %v4789 = vmul.f32 %v4761, 1.442695
    %v4790 = vpow.pop %v4789
    %v4791 = vmul.f32 %v4762, 1.442695
    %v4792 = vpow.pop %v4791
    %v4793 = vmul.f32 %v4763, 1.442695
    %v4794 = vpow.pop %v4793
    %v4795 = vmul.f32 %v4764, 1.442695
    %v4796 = vpow.pop %v4795
    %v4797 = vadd.f32 %v4766, 1.0
    %v4798 = vadd.f32 %v4768, 1.0
    %v4799 = vadd.f32 %v4770, 1.0
    %v4800 = vadd.f32 %v4772, 1.0
    %v4801 = vadd.f32 %v4774, 1.0
    %v4802 = vadd.f32 %v4776, 1.0
    %v4803 = vadd.f32 %v4778, 1.0
    %v4804 = vadd.f32 %v4780, 1.0
    %v4805 = vadd.f32 %v4782, 1.0
    %v4806 = vadd.f32 %v4784, 1.0
    %v4807 = vadd.f32 %v4786, 1.0
    %v4808 = vadd.f32 %v4788, 1.0
    %v4809 = vadd.f32 %v4790, 1.0
    %v4810 = vadd.f32 %v4792, 1.0
    %v4811 = vadd.f32 %v4794, 1.0
    %v4812 = vadd.f32 %v4796, 1.0
    %v4813 = vrcp.pop %v4797
    %v4814 = vmul.f32 1.0, %v4813
    %v4815 = vrcp.pop %v4798
    %v4816 = vmul.f32 1.0, %v4815
    %v4817 = vrcp.pop %v4799
    %v4818 = vmul.f32 1.0, %v4817
    %v4819 = vrcp.pop %v4800
    %v4820 = vmul.f32 1.0, %v4819
    %v4821 = vrcp.pop %v4801
    %v4822 = vmul.f32 1.0, %v4821
    %v4823 = vrcp.pop %v4802
    %v4824 = vmul.f32 1.0, %v4823
    %v4825 = vrcp.pop %v4803
    %v4826 = vmul.f32 1.0, %v4825
    %v4827 = vrcp.pop %v4804
    %v4828 = vmul.f32 1.0, %v4827
    %v4829 = vrcp.pop %v4805
    %v4830 = vmul.f32 1.0, %v4829
    %v4831 = vrcp.pop %v4806
    %v4832 = vmul.f32 1.0, %v4831
    %v4833 = vrcp.pop %v4807
    %v4834 = vmul.f32 1.0, %v4833
    %v4835 = vrcp.pop %v4808
    %v4836 = vmul.f32 1.0, %v4835
    %v4837 = vrcp.pop %v4809
    %v4838 = vmul.f32 1.0, %v4837
    %v4839 = vrcp.pop %v4810
    %v4840 = vmul.f32 1.0, %v4839
    %v4841 = vrcp.pop %v4811
    %v4842 = vmul.f32 1.0, %v4841
    %v4843 = vrcp.pop %v4812
    %v4844 = vmul.f32 1.0, %v4843
    %v4845 = vpack.c.bf16 %v4816, %v4814
    %v4846 = vpack.c.bf16 %v4820, %v4818
    %v4847 = vpack.c.bf16 %v4824, %v4822
    %v4848 = vpack.c.bf16 %v4828, %v4826
    %v4849 = vpack.c.bf16 %v4832, %v4830
    %v4850 = vpack.c.bf16 %v4836, %v4834
    %v4851 = vpack.c.bf16 %v4840, %v4838
    %v4852 = vpack.c.bf16 %v4844, %v4842
    %v4853 = vld [vmem:[#allocation13] sm:$0xf]
    %v4854 = vld [vmem:[#allocation13 + $0x4] sm:$0xf]
    %v4855 = vld [vmem:[#allocation13 + $0x8] sm:$0xf]
    %v4856 = vld [vmem:[#allocation13 + $0xc] sm:$0xf]
    %v4857 = vld [vmem:[#allocation13 + $0x10] sm:$0xf]
    %v4858 = vld [vmem:[#allocation13 + $0x14] sm:$0xf]
    %v4859 = vld [vmem:[#allocation13 + $0x18] sm:$0xf]
    %v4860 = vld [vmem:[#allocation13 + $0x1c] sm:$0xf]
    %v4861 = vld [vmem:[#allocation13 + $0x20] sm:$0xf]
    %v4862 = vld [vmem:[#allocation13 + $0x24] sm:$0xf]
    %v4863 = vld [vmem:[#allocation13 + $0x28] sm:$0xf]
    %v4864 = vld [vmem:[#allocation13 + $0x2c] sm:$0xf]
    %v4865 = vld [vmem:[#allocation13 + $0x30] sm:$0xf]
    %v4866 = vld [vmem:[#allocation13 + $0x34] sm:$0xf]
    %v4867 = vld [vmem:[#allocation13 + $0x38] sm:$0xf]
    %v4868 = vld [vmem:[#allocation13 + $0x3c] sm:$0xf]
    %v4869 = vld [vmem:[%s10] sm:$0x1]
    %v4871 = vlaneseq
    %v4872 = vshrl.u32 %v4871, 7
    %v4873 = vsub.s32 0, %v4872
    %v4874 = vrot.slane %v4869, %v4873
    %v4892 = vunpack.c.l.b16 %v4853
    %v4893 = vunpack.c.l.b16 %v4854
    %v4894 = vunpack.c.l.b16 %v4855
    %v4895 = vunpack.c.l.b16 %v4856
    %v4896 = vunpack.c.l.b16 %v4857
    %v4897 = vunpack.c.l.b16 %v4858
    %v4898 = vunpack.c.l.b16 %v4859
    %v4899 = vunpack.c.l.b16 %v4860
    %v4900 = vunpack.c.l.b16 %v4861
    %v4901 = vunpack.c.l.b16 %v4862
    %v4902 = vunpack.c.l.b16 %v4863
    %v4903 = vunpack.c.l.b16 %v4864
    %v4904 = vunpack.c.l.b16 %v4865
    %v4905 = vunpack.c.l.b16 %v4866
    %v4906 = vunpack.c.l.b16 %v4867
    %v4907 = vunpack.c.l.b16 %v4868
    %v4908 = vpack.c.b16 %v4893, %v4892
    %v4909 = vpack.c.b16 %v4895, %v4894
    %v4910 = vpack.c.b16 %v4897, %v4896
    %v4911 = vpack.c.b16 %v4899, %v4898
    %v4912 = vpack.c.b16 %v4901, %v4900
    %v4913 = vpack.c.b16 %v4903, %v4902
    %v4914 = vpack.c.b16 %v4905, %v4904
    %v4915 = vpack.c.b16 %v4907, %v4906
    %4924 = vmatprep.subr.bf16.mxu0 0
    %4925 = vmatpush1.bf16.msra.mxu0 %v4915
    %4926 = vmatprep.subr.bf16.mxu0 0
    %4927 = vmatpush1.bf16.msra.mxu0 %v4914
    %4928 = vmatprep.subr.bf16.mxu0 0
    %4929 = vmatpush1.bf16.msra.mxu0 %v4913
    %4930 = vmatprep.subr.bf16.mxu0 0
    %4931 = vmatpush1.bf16.msra.mxu0 %v4912
    %4932 = vmatprep.subr.bf16.mxu0 0
    %4933 = vmatpush1.bf16.msra.mxu0 %v4911
    %4934 = vmatprep.subr.bf16.mxu0 0
    %4935 = vmatpush1.bf16.msra.mxu0 %v4910
    %4936 = vmatprep.subr.bf16.mxu0 0
    %4937 = vmatpush1.bf16.msra.mxu0 %v4909
    %4938 = vmatprep.subr.bf16.mxu0 0
    %4939 = vmatpush1.bf16.msra.mxu0 %v4908
    %4940 = vmatprep.subr.bf16.mxu0 0
    %4941 = vmatpush2.bf16.msra.mxu0 0
    %4942 = vmatprep.subr.bf16.mxu0 0
    %4943 = vmatpush2.bf16.msra.mxu0 0
    %4944 = vmatprep.subr.bf16.mxu0 0
    %4945 = vmatpush2.bf16.msra.mxu0 0
    %4946 = vmatprep.subr.bf16.mxu0 0
    %4947 = vmatpush2.bf16.msra.mxu0 0
    %4948 = vmatprep.subr.bf16.mxu0 0
    %4949 = vmatpush2.bf16.msra.mxu0 0
    %4950 = vmatprep.subr.bf16.mxu0 0
    %4951 = vmatpush2.bf16.msra.mxu0 0
    %4952 = vmatprep.subr.bf16.mxu0 0
    %4953 = vmatpush2.bf16.msra.mxu0 0
    %4954 = vmatprep.subr.bf16.mxu0 0
    %4955 = vmatpush2.bf16.msra.mxu0 0
    %4956 = vmatprep.mubr.bf16.mxu0 0
    %4957 = vmatmul.mubr.bf16.gmra.mxu0 %v4845
    %v4958 = vpop.f32.mrf.mxu0
    %v4959 = vadd.f32 %v4874, %v4958
    %v4960 = vpop.f32.mrf.mxu0
    %v4961 = vpop.f32.mrf.mxu0
    %v4962 = vadd.f32 %v4874, %v4961
    %v4963 = vpop.f32.mrf.mxu0
    %4964 = vmatprep.mubr.bf16.mxu0 0
    %4965 = vmatmul.mubr.bf16.gmra.mxu0 %v4846
    %v4966 = vpop.f32.mrf.mxu0
    %v4967 = vadd.f32 %v4874, %v4966
    %v4968 = vpop.f32.mrf.mxu0
    %v4969 = vpop.f32.mrf.mxu0
    %v4970 = vadd.f32 %v4874, %v4969
    %v4971 = vpop.f32.mrf.mxu0
    %4972 = vmatprep.mubr.bf16.mxu0 0
    %4973 = vmatmul.mubr.bf16.gmra.mxu0 %v4847
    %v4974 = vpop.f32.mrf.mxu0
    %v4975 = vadd.f32 %v4874, %v4974
    %v4976 = vpop.f32.mrf.mxu0
    %v4977 = vpop.f32.mrf.mxu0
    %v4978 = vadd.f32 %v4874, %v4977
    %v4979 = vpop.f32.mrf.mxu0
    %4980 = vmatprep.mubr.bf16.mxu0 0
    %4981 = vmatmul.mubr.bf16.gmra.mxu0 %v4848
    %v4982 = vpop.f32.mrf.mxu0
    %v4983 = vadd.f32 %v4874, %v4982
    %v4984 = vpop.f32.mrf.mxu0
    %v4985 = vpop.f32.mrf.mxu0
    %v4986 = vadd.f32 %v4874, %v4985
    %v4987 = vpop.f32.mrf.mxu0
    %4988 = vmatprep.mubr.bf16.mxu0 0
    %4989 = vmatmul.mubr.bf16.gmra.mxu0 %v4849
    %v4990 = vpop.f32.mrf.mxu0
    %v4991 = vadd.f32 %v4874, %v4990
    %v4992 = vpop.f32.mrf.mxu0
    %v4993 = vpop.f32.mrf.mxu0
    %v4994 = vadd.f32 %v4874, %v4993
    %v4995 = vpop.f32.mrf.mxu0
    %4996 = vmatprep.mubr.bf16.mxu0 0
    %4997 = vmatmul.mubr.bf16.gmra.mxu0 %v4850
    %v4998 = vpop.f32.mrf.mxu0
    %v4999 = vadd.f32 %v4874, %v4998
    %v5000 = vpop.f32.mrf.mxu0
    %v5001 = vpop.f32.mrf.mxu0
    %v5002 = vadd.f32 %v4874, %v5001
    %v5003 = vpop.f32.mrf.mxu0
    %5004 = vmatprep.mubr.bf16.mxu0 0
    %5005 = vmatmul.mubr.bf16.gmra.mxu0 %v4851
    %v5006 = vpop.f32.mrf.mxu0
    %v5007 = vadd.f32 %v4874, %v5006
    %v5008 = vpop.f32.mrf.mxu0
    %v5009 = vpop.f32.mrf.mxu0
    %v5010 = vadd.f32 %v4874, %v5009
    %v5011 = vpop.f32.mrf.mxu0
    %5012 = vmatprep.mubr.bf16.mxu0 0
    %5013 = vmatmul.mubr.bf16.gmra.mxu0 %v4852
    %v5014 = vpop.f32.mrf.mxu0
    %v5015 = vadd.f32 %v4874, %v5014
    %v5016 = vpop.f32.mrf.mxu0
    %v5017 = vpop.f32.mrf.mxu0
    %v5018 = vadd.f32 %v4874, %v5017
    %v5019 = vpop.f32.mrf.mxu0
    %5020 = vdwg.mxu0
    %v5021 = vxor.u32 %v4959, 2147483648
    %v5022 = vxor.u32 %v4962, 2147483648
    %v5023 = vxor.u32 %v4967, 2147483648
    %v5024 = vxor.u32 %v4970, 2147483648
    %v5025 = vxor.u32 %v4975, 2147483648
    %v5026 = vxor.u32 %v4978, 2147483648
    %v5027 = vxor.u32 %v4983, 2147483648
    %v5028 = vxor.u32 %v4986, 2147483648
    %v5029 = vxor.u32 %v4991, 2147483648
    %v5030 = vxor.u32 %v4994, 2147483648
    %v5031 = vxor.u32 %v4999, 2147483648
    %v5032 = vxor.u32 %v5002, 2147483648
    %v5033 = vxor.u32 %v5007, 2147483648
    %v5034 = vxor.u32 %v5010, 2147483648
    %v5035 = vxor.u32 %v5015, 2147483648
    %v5036 = vxor.u32 %v5018, 2147483648
    %v5037 = vmul.f32 %v5021, 1.442695
    %v5038 = vpow.pop %v5037
    %v5039 = vmul.f32 %v5022, 1.442695
    %v5040 = vpow.pop %v5039
    %v5041 = vmul.f32 %v5023, 1.442695
    %v5042 = vpow.pop %v5041
    %v5043 = vmul.f32 %v5024, 1.442695
    %v5044 = vpow.pop %v5043
    %v5045 = vmul.f32 %v5025, 1.442695
    %v5046 = vpow.pop %v5045
    %v5047 = vmul.f32 %v5026, 1.442695
    %v5048 = vpow.pop %v5047
    %v5049 = vmul.f32 %v5027, 1.442695
    %v5050 = vpow.pop %v5049
    %v5051 = vmul.f32 %v5028, 1.442695
    %v5052 = vpow.pop %v5051
    %v5053 = vmul.f32 %v5029, 1.442695
    %v5054 = vpow.pop %v5053
    %v5055 = vmul.f32 %v5030, 1.442695
    %v5056 = vpow.pop %v5055
    %v5057 = vmul.f32 %v5031, 1.442695
    %v5058 = vpow.pop %v5057
    %v5059 = vmul.f32 %v5032, 1.442695
    %v5060 = vpow.pop %v5059
    %v5061 = vmul.f32 %v5033, 1.442695
    %v5062 = vpow.pop %v5061
    %v5063 = vmul.f32 %v5034, 1.442695
    %v5064 = vpow.pop %v5063
    %v5065 = vmul.f32 %v5035, 1.442695
    %v5066 = vpow.pop %v5065
    %v5067 = vmul.f32 %v5036, 1.442695
    %v5068 = vpow.pop %v5067
    %v5069 = vadd.f32 %v5038, 1.0
    %v5070 = vadd.f32 %v5040, 1.0
    %v5071 = vadd.f32 %v5042, 1.0
    %v5072 = vadd.f32 %v5044, 1.0
    %v5073 = vadd.f32 %v5046, 1.0
    %v5074 = vadd.f32 %v5048, 1.0
    %v5075 = vadd.f32 %v5050, 1.0
    %v5076 = vadd.f32 %v5052, 1.0
    %v5077 = vadd.f32 %v5054, 1.0
    %v5078 = vadd.f32 %v5056, 1.0
    %v5079 = vadd.f32 %v5058, 1.0
    %v5080 = vadd.f32 %v5060, 1.0
    %v5081 = vadd.f32 %v5062, 1.0
    %v5082 = vadd.f32 %v5064, 1.0
    %v5083 = vadd.f32 %v5066, 1.0
    %v5084 = vadd.f32 %v5068, 1.0
    %v5085 = vrcp.pop %v5069
    %v5086 = vmul.f32 1.0, %v5085
    %v5087 = vrcp.pop %v5070
    %v5088 = vmul.f32 1.0, %v5087
    %v5089 = vrcp.pop %v5071
    %v5090 = vmul.f32 1.0, %v5089
    %v5091 = vrcp.pop %v5072
    %v5092 = vmul.f32 1.0, %v5091
    %v5093 = vrcp.pop %v5073
    %v5094 = vmul.f32 1.0, %v5093
    %v5095 = vrcp.pop %v5074
    %v5096 = vmul.f32 1.0, %v5095
    %v5097 = vrcp.pop %v5075
    %v5098 = vmul.f32 1.0, %v5097
    %v5099 = vrcp.pop %v5076
    %v5100 = vmul.f32 1.0, %v5099
    %v5101 = vrcp.pop %v5077
    %v5102 = vmul.f32 1.0, %v5101
    %v5103 = vrcp.pop %v5078
    %v5104 = vmul.f32 1.0, %v5103
    %v5105 = vrcp.pop %v5079
    %v5106 = vmul.f32 1.0, %v5105
    %v5107 = vrcp.pop %v5080
    %v5108 = vmul.f32 1.0, %v5107
    %v5109 = vrcp.pop %v5081
    %v5110 = vmul.f32 1.0, %v5109
    %v5111 = vrcp.pop %v5082
    %v5112 = vmul.f32 1.0, %v5111
    %v5113 = vrcp.pop %v5083
    %v5114 = vmul.f32 1.0, %v5113
    %v5115 = vrcp.pop %v5084
    %v5116 = vmul.f32 1.0, %v5115
    %v5117 = vpack.c.bf16 %v5088, %v5086
    %v5118 = vpack.c.bf16 %v5092, %v5090
    %v5119 = vpack.c.bf16 %v5096, %v5094
    %v5120 = vpack.c.bf16 %v5100, %v5098
    %v5121 = vpack.c.bf16 %v5104, %v5102
    %v5122 = vpack.c.bf16 %v5108, %v5106
    %v5123 = vpack.c.bf16 %v5112, %v5110
    %v5124 = vpack.c.bf16 %v5116, %v5114
    %v5125 = vld [vmem:[#allocation14] sm:$0xf]
    %v5126 = vld [vmem:[#allocation14 + $0x4] sm:$0xf]
    %v5127 = vld [vmem:[#allocation14 + $0x8] sm:$0xf]
    %v5128 = vld [vmem:[#allocation14 + $0xc] sm:$0xf]
    %v5129 = vld [vmem:[#allocation14 + $0x10] sm:$0xf]
    %v5130 = vld [vmem:[#allocation14 + $0x14] sm:$0xf]
    %v5131 = vld [vmem:[#allocation14 + $0x18] sm:$0xf]
    %v5132 = vld [vmem:[#allocation14 + $0x1c] sm:$0xf]
    %v5133 = vld [vmem:[#allocation14 + $0x20] sm:$0xf]
    %v5134 = vld [vmem:[#allocation14 + $0x24] sm:$0xf]
    %v5135 = vld [vmem:[#allocation14 + $0x28] sm:$0xf]
    %v5136 = vld [vmem:[#allocation14 + $0x2c] sm:$0xf]
    %v5137 = vld [vmem:[#allocation14 + $0x30] sm:$0xf]
    %v5138 = vld [vmem:[#allocation14 + $0x34] sm:$0xf]
    %v5139 = vld [vmem:[#allocation14 + $0x38] sm:$0xf]
    %v5140 = vld [vmem:[#allocation14 + $0x3c] sm:$0xf]
    %v5141 = vld [vmem:[%s12] sm:$0x1]
    %v5143 = vlaneseq
    %v5144 = vshrl.u32 %v5143, 7
    %v5145 = vsub.s32 0, %v5144
    %v5146 = vrot.slane %v5141, %v5145
    %v5164 = vunpack.c.l.b16 %v5125
    %v5165 = vunpack.c.l.b16 %v5126
    %v5166 = vunpack.c.l.b16 %v5127
    %v5167 = vunpack.c.l.b16 %v5128
    %v5168 = vunpack.c.l.b16 %v5129
    %v5169 = vunpack.c.l.b16 %v5130
    %v5170 = vunpack.c.l.b16 %v5131
    %v5171 = vunpack.c.l.b16 %v5132
    %v5172 = vunpack.c.l.b16 %v5133
    %v5173 = vunpack.c.l.b16 %v5134
    %v5174 = vunpack.c.l.b16 %v5135
    %v5175 = vunpack.c.l.b16 %v5136
    %v5176 = vunpack.c.l.b16 %v5137
    %v5177 = vunpack.c.l.b16 %v5138
    %v5178 = vunpack.c.l.b16 %v5139
    %v5179 = vunpack.c.l.b16 %v5140
    %v5180 = vpack.c.b16 %v5165, %v5164
    %v5181 = vpack.c.b16 %v5167, %v5166
    %v5182 = vpack.c.b16 %v5169, %v5168
    %v5183 = vpack.c.b16 %v5171, %v5170
    %v5184 = vpack.c.b16 %v5173, %v5172
    %v5185 = vpack.c.b16 %v5175, %v5174
    %v5186 = vpack.c.b16 %v5177, %v5176
    %v5187 = vpack.c.b16 %v5179, %v5178
    %5196 = vmatprep.subr.bf16.mxu0 0
    %5197 = vmatpush1.bf16.msra.mxu0 %v5187
    %5198 = vmatprep.subr.bf16.mxu0 0
    %5199 = vmatpush1.bf16.msra.mxu0 %v5186
    %5200 = vmatprep.subr.bf16.mxu0 0
    %5201 = vmatpush1.bf16.msra.mxu0 %v5185
    %5202 = vmatprep.subr.bf16.mxu0 0
    %5203 = vmatpush1.bf16.msra.mxu0 %v5184
    %5204 = vmatprep.subr.bf16.mxu0 0
    %5205 = vmatpush1.bf16.msra.mxu0 %v5183
    %5206 = vmatprep.subr.bf16.mxu0 0
    %5207 = vmatpush1.bf16.msra.mxu0 %v5182
    %5208 = vmatprep.subr.bf16.mxu0 0
    %5209 = vmatpush1.bf16.msra.mxu0 %v5181
    %5210 = vmatprep.subr.bf16.mxu0 0
    %5211 = vmatpush1.bf16.msra.mxu0 %v5180
    %5212 = vmatprep.subr.bf16.mxu0 0
    %5213 = vmatpush2.bf16.msra.mxu0 0
    %5214 = vmatprep.subr.bf16.mxu0 0
    %5215 = vmatpush2.bf16.msra.mxu0 0
    %5216 = vmatprep.subr.bf16.mxu0 0
    %5217 = vmatpush2.bf16.msra.mxu0 0
    %5218 = vmatprep.subr.bf16.mxu0 0
    %5219 = vmatpush2.bf16.msra.mxu0 0
    %5220 = vmatprep.subr.bf16.mxu0 0
    %5221 = vmatpush2.bf16.msra.mxu0 0
    %5222 = vmatprep.subr.bf16.mxu0 0
    %5223 = vmatpush2.bf16.msra.mxu0 0
    %5224 = vmatprep.subr.bf16.mxu0 0
    %5225 = vmatpush2.bf16.msra.mxu0 0
    %5226 = vmatprep.subr.bf16.mxu0 0
    %5227 = vmatpush2.bf16.msra.mxu0 0
    %5228 = vmatprep.mubr.bf16.mxu0 0
    %5229 = vmatmul.mubr.bf16.gmra.mxu0 %v5117
    %v5230 = vpop.f32.mrf.mxu0
    %v5231 = vadd.f32 %v5146, %v5230
    %v5232 = vpop.f32.mrf.mxu0
    %v5233 = vpop.f32.mrf.mxu0
    %v5234 = vadd.f32 %v5146, %v5233
    %v5235 = vpop.f32.mrf.mxu0
    %5236 = vmatprep.mubr.bf16.mxu0 0
    %5237 = vmatmul.mubr.bf16.gmra.mxu0 %v5118
    %v5238 = vpop.f32.mrf.mxu0
    %v5239 = vadd.f32 %v5146, %v5238
    %v5240 = vpop.f32.mrf.mxu0
    %v5241 = vpop.f32.mrf.mxu0
    %v5242 = vadd.f32 %v5146, %v5241
    %v5243 = vpop.f32.mrf.mxu0
    %5244 = vmatprep.mubr.bf16.mxu0 0
    %5245 = vmatmul.mubr.bf16.gmra.mxu0 %v5119
    %v5246 = vpop.f32.mrf.mxu0
    %v5247 = vadd.f32 %v5146, %v5246
    %v5248 = vpop.f32.mrf.mxu0
    %v5249 = vpop.f32.mrf.mxu0
    %v5250 = vadd.f32 %v5146, %v5249
    %v5251 = vpop.f32.mrf.mxu0
    %5252 = vmatprep.mubr.bf16.mxu0 0
    %5253 = vmatmul.mubr.bf16.gmra.mxu0 %v5120
    %v5254 = vpop.f32.mrf.mxu0
    %v5255 = vadd.f32 %v5146, %v5254
    %v5256 = vpop.f32.mrf.mxu0
    %v5257 = vpop.f32.mrf.mxu0
    %v5258 = vadd.f32 %v5146, %v5257
    %v5259 = vpop.f32.mrf.mxu0
    %5260 = vmatprep.mubr.bf16.mxu0 0
    %5261 = vmatmul.mubr.bf16.gmra.mxu0 %v5121
    %v5262 = vpop.f32.mrf.mxu0
    %v5263 = vadd.f32 %v5146, %v5262
    %v5264 = vpop.f32.mrf.mxu0
    %v5265 = vpop.f32.mrf.mxu0
    %v5266 = vadd.f32 %v5146, %v5265
    %v5267 = vpop.f32.mrf.mxu0
    %5268 = vmatprep.mubr.bf16.mxu0 0
    %5269 = vmatmul.mubr.bf16.gmra.mxu0 %v5122
    %v5270 = vpop.f32.mrf.mxu0
    %v5271 = vadd.f32 %v5146, %v5270
    %v5272 = vpop.f32.mrf.mxu0
    %v5273 = vpop.f32.mrf.mxu0
    %v5274 = vadd.f32 %v5146, %v5273
    %v5275 = vpop.f32.mrf.mxu0
    %5276 = vmatprep.mubr.bf16.mxu0 0
    %5277 = vmatmul.mubr.bf16.gmra.mxu0 %v5123
    %v5278 = vpop.f32.mrf.mxu0
    %v5279 = vadd.f32 %v5146, %v5278
    %v5280 = vpop.f32.mrf.mxu0
    %v5281 = vpop.f32.mrf.mxu0
    %v5282 = vadd.f32 %v5146, %v5281
    %v5283 = vpop.f32.mrf.mxu0
    %5284 = vmatprep.mubr.bf16.mxu0 0
    %5285 = vmatmul.mubr.bf16.gmra.mxu0 %v5124
    %v5286 = vpop.f32.mrf.mxu0
    %v5287 = vadd.f32 %v5146, %v5286
    %v5288 = vpop.f32.mrf.mxu0
    %v5289 = vpop.f32.mrf.mxu0
    %v5290 = vadd.f32 %v5146, %v5289
    %v5291 = vpop.f32.mrf.mxu0
    %5292 = vdwg.mxu0
    %v5293 = vlaneseq
    %v5294 = vand.u32 %v5293, 127
    %vm5295 = vcmp.lt.s32.totalorder %v5294, 2
    %v5296 = vsel %vm5295, %v5231, -1e+30
    %v5297 = vsel %vm5295, %v5234, -1e+30
    %v5298 = vsel %vm5295, %v5239, -1e+30
    %v5299 = vsel %vm5295, %v5242, -1e+30
    %v5300 = vsel %vm5295, %v5247, -1e+30
    %v5301 = vsel %vm5295, %v5250, -1e+30
    %v5302 = vsel %vm5295, %v5255, -1e+30
    %v5303 = vsel %vm5295, %v5258, -1e+30
    %v5304 = vsel %vm5295, %v5263, -1e+30
    %v5305 = vsel %vm5295, %v5266, -1e+30
    %v5306 = vsel %vm5295, %v5271, -1e+30
    %v5307 = vsel %vm5295, %v5274, -1e+30
    %v5308 = vsel %vm5295, %v5279, -1e+30
    %v5309 = vsel %vm5295, %v5282, -1e+30
    %v5310 = vsel %vm5295, %v5287, -1e+30
    %v5311 = vsel %vm5295, %v5290, -1e+30
    %5312 = vmax.xlane.f32.xlu0 %v5296
    %v5313 = vpop.xlane.xlu0 %5312
    %5314 = vmax.xlane.f32.xlu0 %v5297
    %v5315 = vpop.xlane.xlu0 %5314
    %5316 = vmax.xlane.f32.xlu0 %v5298
    %v5317 = vpop.xlane.xlu0 %5316
    %5318 = vmax.xlane.f32.xlu0 %v5299
    %v5319 = vpop.xlane.xlu0 %5318
    %5320 = vmax.xlane.f32.xlu0 %v5300
    %v5321 = vpop.xlane.xlu0 %5320
    %5322 = vmax.xlane.f32.xlu0 %v5301
    %v5323 = vpop.xlane.xlu0 %5322
    %5324 = vmax.xlane.f32.xlu0 %v5302
    %v5325 = vpop.xlane.xlu0 %5324
    %5326 = vmax.xlane.f32.xlu0 %v5303
    %v5327 = vpop.xlane.xlu0 %5326
    %5328 = vmax.xlane.f32.xlu0 %v5304
    %v5329 = vpop.xlane.xlu0 %5328
    %5330 = vmax.xlane.f32.xlu0 %v5305
    %v5331 = vpop.xlane.xlu0 %5330
    %5332 = vmax.xlane.f32.xlu0 %v5306
    %v5333 = vpop.xlane.xlu0 %5332
    %5334 = vmax.xlane.f32.xlu0 %v5307
    %v5335 = vpop.xlane.xlu0 %5334
    %5336 = vmax.xlane.f32.xlu0 %v5308
    %v5337 = vpop.xlane.xlu0 %5336
    %5338 = vmax.xlane.f32.xlu0 %v5309
    %v5339 = vpop.xlane.xlu0 %5338
    %5340 = vmax.xlane.f32.xlu0 %v5310
    %v5341 = vpop.xlane.xlu0 %5340
    %5342 = vmax.xlane.f32.xlu0 %v5311
    %v5343 = vpop.xlane.xlu0 %5342
    %v5344 = vsub.f32 %v5296, %v5313
    %v5345 = vsub.f32 %v5297, %v5315
    %v5346 = vsub.f32 %v5298, %v5317
    %v5347 = vsub.f32 %v5299, %v5319
    %v5348 = vsub.f32 %v5300, %v5321
    %v5349 = vsub.f32 %v5301, %v5323
    %v5350 = vsub.f32 %v5302, %v5325
    %v5351 = vsub.f32 %v5303, %v5327
    %v5352 = vsub.f32 %v5304, %v5329
    %v5353 = vsub.f32 %v5305, %v5331
    %v5354 = vsub.f32 %v5306, %v5333
    %v5355 = vsub.f32 %v5307, %v5335
    %v5356 = vsub.f32 %v5308, %v5337
    %v5357 = vsub.f32 %v5309, %v5339
    %v5358 = vsub.f32 %v5310, %v5341
    %v5359 = vsub.f32 %v5311, %v5343
    %v5360 = vmul.f32 %v5344, 1.442695
    %v5361 = vpow.pop %v5360
    %v5362 = vmul.f32 %v5345, 1.442695
    %v5363 = vpow.pop %v5362
    %v5364 = vmul.f32 %v5346, 1.442695
    %v5365 = vpow.pop %v5364
    %v5366 = vmul.f32 %v5347, 1.442695
    %v5367 = vpow.pop %v5366
    %v5368 = vmul.f32 %v5348, 1.442695
    %v5369 = vpow.pop %v5368
    %v5370 = vmul.f32 %v5349, 1.442695
    %v5371 = vpow.pop %v5370
    %v5372 = vmul.f32 %v5350, 1.442695
    %v5373 = vpow.pop %v5372
    %v5374 = vmul.f32 %v5351, 1.442695
    %v5375 = vpow.pop %v5374
    %v5376 = vmul.f32 %v5352, 1.442695
    %v5377 = vpow.pop %v5376
    %v5378 = vmul.f32 %v5353, 1.442695
    %v5379 = vpow.pop %v5378
    %v5380 = vmul.f32 %v5354, 1.442695
    %v5381 = vpow.pop %v5380
    %v5382 = vmul.f32 %v5355, 1.442695
    %v5383 = vpow.pop %v5382
    %v5384 = vmul.f32 %v5356, 1.442695
    %v5385 = vpow.pop %v5384
    %v5386 = vmul.f32 %v5357, 1.442695
    %v5387 = vpow.pop %v5386
    %v5388 = vmul.f32 %v5358, 1.442695
    %v5389 = vpow.pop %v5388
    %v5390 = vmul.f32 %v5359, 1.442695
    %v5391 = vpow.pop %v5390
    %v5392 = vsel %vm5295, %v5361, 0.0
    %v5393 = vsel %vm5295, %v5363, 0.0
    %v5394 = vsel %vm5295, %v5365, 0.0
    %v5395 = vsel %vm5295, %v5367, 0.0
    %v5396 = vsel %vm5295, %v5369, 0.0
    %v5397 = vsel %vm5295, %v5371, 0.0
    %v5398 = vsel %vm5295, %v5373, 0.0
    %v5399 = vsel %vm5295, %v5375, 0.0
    %v5400 = vsel %vm5295, %v5377, 0.0
    %v5401 = vsel %vm5295, %v5379, 0.0
    %v5402 = vsel %vm5295, %v5381, 0.0
    %v5403 = vsel %vm5295, %v5383, 0.0
    %v5404 = vsel %vm5295, %v5385, 0.0
    %v5405 = vsel %vm5295, %v5387, 0.0
    %v5406 = vsel %vm5295, %v5389, 0.0
    %v5407 = vsel %vm5295, %v5391, 0.0
    %5408 = vadd.xlane.f32.xlu0 %v5392
    %v5409 = vpop.xlane.xlu0 %5408
    %5410 = vadd.xlane.f32.xlu0 %v5393
    %v5411 = vpop.xlane.xlu0 %5410
    %5412 = vadd.xlane.f32.xlu0 %v5394
    %v5413 = vpop.xlane.xlu0 %5412
    %5414 = vadd.xlane.f32.xlu0 %v5395
    %v5415 = vpop.xlane.xlu0 %5414
    %5416 = vadd.xlane.f32.xlu0 %v5396
    %v5417 = vpop.xlane.xlu0 %5416
    %5418 = vadd.xlane.f32.xlu0 %v5397
    %v5419 = vpop.xlane.xlu0 %5418
    %5420 = vadd.xlane.f32.xlu0 %v5398
    %v5421 = vpop.xlane.xlu0 %5420
    %5422 = vadd.xlane.f32.xlu0 %v5399
    %v5423 = vpop.xlane.xlu0 %5422
    %5424 = vadd.xlane.f32.xlu0 %v5400
    %v5425 = vpop.xlane.xlu0 %5424
    %5426 = vadd.xlane.f32.xlu0 %v5401
    %v5427 = vpop.xlane.xlu0 %5426
    %5428 = vadd.xlane.f32.xlu0 %v5402
    %v5429 = vpop.xlane.xlu0 %5428
    %5430 = vadd.xlane.f32.xlu0 %v5403
    %v5431 = vpop.xlane.xlu0 %5430
    %5432 = vadd.xlane.f32.xlu0 %v5404
    %v5433 = vpop.xlane.xlu0 %5432
    %5434 = vadd.xlane.f32.xlu0 %v5405
    %v5435 = vpop.xlane.xlu0 %5434
    %5436 = vadd.xlane.f32.xlu0 %v5406
    %v5437 = vpop.xlane.xlu0 %5436
    %5438 = vadd.xlane.f32.xlu0 %v5407
    %v5439 = vpop.xlane.xlu0 %5438
    %v5440 = vlog2.pop %v5409
    %v5441 = vmul.f32 %v5440, 0.6931472
    %v5442 = vlog2.pop %v5411
    %v5443 = vmul.f32 %v5442, 0.6931472
    %v5444 = vlog2.pop %v5413
    %v5445 = vmul.f32 %v5444, 0.6931472
    %v5446 = vlog2.pop %v5415
    %v5447 = vmul.f32 %v5446, 0.6931472
    %v5448 = vlog2.pop %v5417
    %v5449 = vmul.f32 %v5448, 0.6931472
    %v5450 = vlog2.pop %v5419
    %v5451 = vmul.f32 %v5450, 0.6931472
    %v5452 = vlog2.pop %v5421
    %v5453 = vmul.f32 %v5452, 0.6931472
    %v5454 = vlog2.pop %v5423
    %v5455 = vmul.f32 %v5454, 0.6931472
    %v5456 = vlog2.pop %v5425
    %v5457 = vmul.f32 %v5456, 0.6931472
    %v5458 = vlog2.pop %v5427
    %v5459 = vmul.f32 %v5458, 0.6931472
    %v5460 = vlog2.pop %v5429
    %v5461 = vmul.f32 %v5460, 0.6931472
    %v5462 = vlog2.pop %v5431
    %v5463 = vmul.f32 %v5462, 0.6931472
    %v5464 = vlog2.pop %v5433
    %v5465 = vmul.f32 %v5464, 0.6931472
    %v5466 = vlog2.pop %v5435
    %v5467 = vmul.f32 %v5466, 0.6931472
    %v5468 = vlog2.pop %v5437
    %v5469 = vmul.f32 %v5468, 0.6931472
    %v5470 = vlog2.pop %v5439
    %v5471 = vmul.f32 %v5470, 0.6931472
    %v5472 = vsub.f32 %v5344, %v5441
    %v5473 = vsub.f32 %v5345, %v5443
    %v5474 = vsub.f32 %v5346, %v5445
    %v5475 = vsub.f32 %v5347, %v5447
    %v5476 = vsub.f32 %v5348, %v5449
    %v5477 = vsub.f32 %v5349, %v5451
    %v5478 = vsub.f32 %v5350, %v5453
    %v5479 = vsub.f32 %v5351, %v5455
    %v5480 = vsub.f32 %v5352, %v5457
    %v5481 = vsub.f32 %v5353, %v5459
    %v5482 = vsub.f32 %v5354, %v5461
    %v5483 = vsub.f32 %v5355, %v5463
    %v5484 = vsub.f32 %v5356, %v5465
    %v5485 = vsub.f32 %v5357, %v5467
    %v5486 = vsub.f32 %v5358, %v5469
    %v5487 = vsub.f32 %v5359, %v5471
    %5488 = vst [vmem:[#allocation16] sm:$0xff] %v5472
    %5489 = vst [vmem:[#allocation16 + $0x8] sm:$0xff] %v5473
    %5490 = vst [vmem:[#allocation16 + $0x10] sm:$0xff] %v5474
    %5491 = vst [vmem:[#allocation16 + $0x18] sm:$0xff] %v5475
    %5492 = vst [vmem:[#allocation16 + $0x20] sm:$0xff] %v5476
    %5493 = vst [vmem:[#allocation16 + $0x28] sm:$0xff] %v5477
    %5494 = vst [vmem:[#allocation16 + $0x30] sm:$0xff] %v5478
    %5495 = vst [vmem:[#allocation16 + $0x38] sm:$0xff] %v5479
    %5496 = vst [vmem:[#allocation16 + $0x40] sm:$0xff] %v5480
    %5497 = vst [vmem:[#allocation16 + $0x48] sm:$0xff] %v5481
    %5498 = vst [vmem:[#allocation16 + $0x50] sm:$0xff] %v5482
    %5499 = vst [vmem:[#allocation16 + $0x58] sm:$0xff] %v5483
    %5500 = vst [vmem:[#allocation16 + $0x60] sm:$0xff] %v5484
    %5501 = vst [vmem:[#allocation16 + $0x68] sm:$0xff] %v5485
    %5502 = vst [vmem:[#allocation16 + $0x70] sm:$0xff] %v5486
    %5503 = vst [vmem:[#allocation16 + $0x78] sm:$0xff] %v5487
    // Predicated region
    $region86: #{tpu_custom_call.1} parent=1 // pred_check
      _
    $region87: #{tpu_custom_call.1} parent=1 // pred_check_branch
      %5505 = sbr.rel (0) target = $region89
    $region88: #{tpu_custom_call.1} parent=1 // pred_region
      %s5507 = ssub.s32 2048, 2048
      %5508 = vsyncadd [#allocation4], %s5507
      %s5509 = sshll.u32 [#allocation16], 4
      %s5510 = int_to_ptr.vmem [resolvable:$true] %s5509
      %5515 = dma.vmem_to_hbm [thread:$0]  %s5510, 2048, %s13, [#allocation4], 128, 128, 8
    $region89: #{tpu_custom_call.1} parent=1 // pred_fallthru
      _
    // Predicated region
    $region90: #{tpu_custom_call.1} parent=1 // pred_check
      _
    $region91: #{tpu_custom_call.1} parent=1 // pred_check_branch
      %5517 = sbr.rel (0) target = $region93
    $region92: #{tpu_custom_call.1} parent=1 // pred_region
      %5518 = dma.done [#allocation4], 2048
    $region93: #{tpu_custom_call.1} parent=1 // pred_fallthru
      _
    %5519 = vsyncpa [#allocation3], 1
    %5520 = vsyncpa [#allocation6], 1
    %5521 = vsyncpa [#allocation9], 1
    %5522 = vsyncpa [#allocation12], 1
    %5523 = vsyncpa [#allocation15], 1
    %5524 = vsyncpa [#allocation4], 1

</llo_original>
